<compile_context>
chip_gen: v6e
topology: v6e:2x2x1
jax: 0.10.0
libtpu: 0.0.40
codegen_flags: <defaults>
</compile_context>

<pallas_src>
import math
from functools import partial

import jax
import jax.numpy as jnp
from jax.experimental import pallas as pl
from jax.experimental.pallas import tpu as pltpu

NEG_INF = -1e30
LN_EPS = 1e-5
VMEM_LIMIT = 32 * 1024 * 1024  # safe on v5e/v6e (128 MiB) and v7x (64 MiB physical)


def _gelu(x):
    # exact erf-form GELU (matches torch.nn.functional.gelu default)
    return 0.5 * x * (1.0 + jax.lax.erf(x * (1.0 / math.sqrt(2.0))))


# ----------------------------------------------------------------- kernels

def _ln_matmul_kernel(x_ref, g_ref, b_ref, w_ref, wb_ref, o_ref):
    # o = LayerNorm(x) @ W + b   (LN fused into the projection; W is bf16)
    x = x_ref[...]
    mu = jnp.mean(x, axis=-1, keepdims=True)
    var = jnp.mean(jnp.square(x - mu), axis=-1, keepdims=True)
    h = (x - mu) * jax.lax.rsqrt(var + LN_EPS) * g_ref[...] + b_ref[...]
    o_ref[...] = (jnp.dot(h.astype(jnp.bfloat16), w_ref[...],
                          preferred_element_type=jnp.float32) + wb_ref[...])


def _matmul_res_kernel(a_ref, w_ref, b_ref, res_ref, o_ref):
    # o = residual + a @ W + b   (bias + residual-add fused into the matmul)
    o_ref[...] = (res_ref[...] + b_ref[...] +
                  jnp.dot(a_ref[...].astype(jnp.bfloat16), w_ref[...],
                          preferred_element_type=jnp.float32))


def _ln_gate_kernel(x_ref, g_ref, b_ref, gw_ref, gb_ref, h2_ref, p_ref):
    # h2 = LayerNorm(x) (bf16, for the experts); p = softmax(h2 @ Wg + bg)
    x = x_ref[...]
    mu = jnp.mean(x, axis=-1, keepdims=True)
    var = jnp.mean(jnp.square(x - mu), axis=-1, keepdims=True)
    h = (x - mu) * jax.lax.rsqrt(var + LN_EPS) * g_ref[...] + b_ref[...]
    h2_ref[...] = h.astype(jnp.bfloat16)
    logits = (jnp.dot(h.astype(jnp.bfloat16), gw_ref[...],
                      preferred_element_type=jnp.float32) + gb_ref[...])
    p_ref[...] = jax.nn.softmax(logits, axis=-1)


def _moe_kernel(h2_ref, p_ref, res_ref, w1_ref, b1_ref, w2_ref, b2_ref,
                w3_ref, b3_ref, o_ref, acc_ref, *, num_experts):
    # Fused MoE-GEGLU: grid = (token-tiles, experts); expert axis is "arbitrary"
    # and the output block is constant over it, so acc_ref stays resident.
    e = pl.program_id(1)

    @pl.when(e == 0)
    def _():
        acc_ref[...] = res_ref[...]        # residual fused into the accumulator

    h = h2_ref[...]                        # bf16 LN output
    # GEGLU with the fc weight pre-split into x1-path / x2-path (no mid slicing)
    x1 = jnp.dot(h, w1_ref[0], preferred_element_type=jnp.float32) + b1_ref[0]
    x2 = jnp.dot(h, w2_ref[0], preferred_element_type=jnp.float32) + b2_ref[0]
    u = x1 * _gelu(x2)
    y = jnp.dot(u.astype(jnp.bfloat16), w3_ref[0],
                preferred_element_type=jnp.float32) + b3_ref[0]

    onehot = jax.lax.broadcasted_iota(jnp.int32, (1, num_experts), 1) == e
    gate_w = jnp.sum(jnp.where(onehot, p_ref[...], 0.0), axis=-1, keepdims=True)
    acc_ref[...] += gate_w * y

    @pl.when(e == num_experts - 1)
    def _():
        o_ref[...] = acc_ref[...]


def _flash_attn_kernel(q_ref, k_ref, v_ref, cq_ref, sq_ref, ck_ref, sk_ref,
                       o_ref, m_sc, l_sc, acc_sc, *, inv_scale, window, bq, bk):
    # Flash attention with in-kernel RoPE and in-kernel windowed-causal mask.
    qi = pl.program_id(1)
    ki = pl.program_id(2)
    nk = pl.num_programs(2)

    @pl.when(ki == 0)
    def _():
        m_sc[...] = jnp.full_like(m_sc, NEG_INF)
        l_sc[...] = jnp.zeros_like(l_sc)
        acc_sc[...] = jnp.zeros_like(acc_sc)

    q0 = qi * bq
    k0 = ki * bk
    # process iff some (i, j) in this tile satisfies j <= i and i - j < window
    process = jnp.logical_and(k0 < q0 + bq, k0 + bk > q0 - (window - 1))

    @pl.when(process)
    def _():
        def rope(x, cos, sin):
            d2 = x.shape[-1] // 2
            x1 = x[..., :d2]
            x2 = x[..., d2:]
            c = cos[None]
            s = sin[None]
            return jnp.concatenate([x1 * c - x2 * s, x1 * s + x2 * c], axis=-1)

        q = rope(q_ref[...], cq_ref[...], sq_ref[...]) * inv_scale  # pre-scaled q
        k = rope(k_ref[...], ck_ref[...], sk_ref[...])

        s = jnp.einsum('bqd,bkd->bqk', q.astype(jnp.bfloat16),
                       k.astype(jnp.bfloat16),
                       preferred_element_type=jnp.float32)

        i_idx = q0 + jax.lax.broadcasted_iota(jnp.int32, (bq, bk), 0)
        j_idx = k0 + jax.lax.broadcasted_iota(jnp.int32, (bq, bk), 1)
        masked = jnp.logical_or(j_idx > i_idx, (i_idx - j_idx) >= window)[None]

        s = jnp.where(masked, NEG_INF, s)
        m_prev = m_sc[...]
        m_new = jnp.maximum(m_prev, s.max(axis=-1, keepdims=True))
        p = jnp.where(masked, 0.0, jnp.exp(s - m_new))
        alpha = jnp.exp(m_prev - m_new)
        l_sc[...] = alpha * l_sc[...] + p.sum(axis=-1, keepdims=True)
        acc_sc[...] = alpha * acc_sc[...] + jnp.einsum(
            'bqk,bkd->bqd', p.astype(jnp.bfloat16),
            v_ref[...].astype(jnp.bfloat16),
            preferred_element_type=jnp.float32)
        m_sc[...] = m_new

    @pl.when(ki == nk - 1)
    def _():
        o_ref[...] = (acc_sc[...] *
                      pl.reciprocal(l_sc[...], approx=True)).astype(o_ref.dtype)


# ----------------------------------------------------------------- wrappers

def _cparams(sems):
    return pltpu.CompilerParams(dimension_semantics=sems,
                                vmem_limit_bytes=VMEM_LIMIT)


def ln_matmul(x, g, b, w, wb, *, tm=256, tn=512):
    N, D = x.shape
    Dout = w.shape[1]
    tm = min(tm, N)
    tn = min(tn, Dout)
    grid = (pl.cdiv(N, tm), pl.cdiv(Dout, tn))
    return pl.pallas_call(
        _ln_matmul_kernel,
        out_shape=jax.ShapeDtypeStruct((N, Dout), jnp.float32),
        grid=grid,
        in_specs=[
            pl.BlockSpec((tm, D), lambda i, j: (i, 0)),
            pl.BlockSpec((1, D), lambda i, j: (0, 0)),
            pl.BlockSpec((1, D), lambda i, j: (0, 0)),
            pl.BlockSpec((D, tn), lambda i, j: (0, j)),
            pl.BlockSpec((1, tn), lambda i, j: (0, j)),
        ],
        out_specs=pl.BlockSpec((tm, tn), lambda i, j: (i, j)),
        compiler_params=_cparams(("parallel", "parallel")),
    )(x, g.reshape(1, D), b.reshape(1, D), w, wb.reshape(1, Dout))


def matmul_residual(a, w, b, res, *, tm=256, tn=512):
    N, K = a.shape
    Dout = w.shape[1]
    tm = min(tm, N)
    tn = min(tn, Dout)
    grid = (pl.cdiv(N, tm), pl.cdiv(Dout, tn))
    return pl.pallas_call(
        _matmul_res_kernel,
        out_shape=jax.ShapeDtypeStruct((N, Dout), jnp.float32),
        grid=grid,
        in_specs=[
            pl.BlockSpec((tm, K), lambda i, j: (i, 0)),
            pl.BlockSpec((K, tn), lambda i, j: (0, j)),
            pl.BlockSpec((1, tn), lambda i, j: (0, j)),
            pl.BlockSpec((tm, tn), lambda i, j: (i, j)),
        ],
        out_specs=pl.BlockSpec((tm, tn), lambda i, j: (i, j)),
        compiler_params=_cparams(("parallel", "parallel")),
    )(a, w, b.reshape(1, Dout), res)


def ln_gate(x, g, b, gw, gb, *, tm=256):
    N, D = x.shape
    E = gw.shape[1]
    tm = min(tm, N)
    grid = (pl.cdiv(N, tm),)
    return pl.pallas_call(
        _ln_gate_kernel,
        out_shape=(jax.ShapeDtypeStruct((N, D), jnp.bfloat16),
                   jax.ShapeDtypeStruct((N, E), jnp.float32)),
        grid=grid,
        in_specs=[
            pl.BlockSpec((tm, D), lambda i: (i, 0)),
            pl.BlockSpec((1, D), lambda i: (0, 0)),
            pl.BlockSpec((1, D), lambda i: (0, 0)),
            pl.BlockSpec((D, E), lambda i: (0, 0)),
            pl.BlockSpec((1, E), lambda i: (0, 0)),
        ],
        out_specs=(pl.BlockSpec((tm, D), lambda i: (i, 0)),
                   pl.BlockSpec((tm, E), lambda i: (i, 0))),
        compiler_params=_cparams(("parallel",)),
    )(x, g.reshape(1, D), b.reshape(1, D), gw, gb.reshape(1, E))


def moe_ffn(h2, probs, res, w1, b1, w2, b2, w3, b3, *, num_experts, tm=256):
    N, D = h2.shape
    E = num_experts
    F = w1.shape[2]
    tm = min(tm, N)
    grid = (pl.cdiv(N, tm), E)
    return pl.pallas_call(
        partial(_moe_kernel, num_experts=E),
        out_shape=jax.ShapeDtypeStruct((N, D), jnp.float32),
        grid=grid,
        in_specs=[
            pl.BlockSpec((tm, D), lambda i, e: (i, 0)),       # h2 (bf16)
            pl.BlockSpec((tm, E), lambda i, e: (i, 0)),       # gate probs
            pl.BlockSpec((tm, D), lambda i, e: (i, 0)),       # residual
            pl.BlockSpec((1, D, F), lambda i, e: (e, 0, 0)),  # w1
            pl.BlockSpec((1, 1, F), lambda i, e: (e, 0, 0)),  # b1
            pl.BlockSpec((1, D, F), lambda i, e: (e, 0, 0)),  # w2
            pl.BlockSpec((1, 1, F), lambda i, e: (e, 0, 0)),  # b2
            pl.BlockSpec((1, F, D), lambda i, e: (e, 0, 0)),  # w3
            pl.BlockSpec((1, 1, D), lambda i, e: (e, 0, 0)),  # b3
        ],
        out_specs=pl.BlockSpec((tm, D), lambda i, e: (i, 0)),
        scratch_shapes=[pltpu.VMEM((tm, D), jnp.float32)],
        compiler_params=_cparams(("parallel", "arbitrary")),
    )(h2, probs, res, w1, b1, w2, b2, w3, b3)


def flash_attention(q, k, v, cos, sin, *, window, head_dim):
    BH, T, hd = q.shape
    bh = BH if BH <= 8 else 8
    if BH % bh != 0:
        bh = 1
    bq = T if T <= 128 else 128
    bk = T if T <= 128 else 128
    hd2 = cos.shape[-1]
    grid = (BH // bh, pl.cdiv(T, bq), pl.cdiv(T, bk))
    kernel = partial(_flash_attn_kernel, inv_scale=1.0 / math.sqrt(head_dim),
                     window=window, bq=bq, bk=bk)
    return pl.pallas_call(
        kernel,
        out_shape=jax.ShapeDtypeStruct((BH, T, hd), jnp.float32),
        grid=grid,
        in_specs=[
            pl.BlockSpec((bh, bq, hd), lambda b, i, j: (b, i, 0)),
            pl.BlockSpec((bh, bk, hd), lambda b, i, j: (b, j, 0)),
            pl.BlockSpec((bh, bk, hd), lambda b, i, j: (b, j, 0)),
            pl.BlockSpec((bq, hd2), lambda b, i, j: (i, 0)),   # cos for q rows
            pl.BlockSpec((bq, hd2), lambda b, i, j: (i, 0)),   # sin for q rows
            pl.BlockSpec((bk, hd2), lambda b, i, j: (j, 0)),   # cos for k rows
            pl.BlockSpec((bk, hd2), lambda b, i, j: (j, 0)),   # sin for k rows
        ],
        out_specs=pl.BlockSpec((bh, bq, hd), lambda b, i, j: (b, i, 0)),
        scratch_shapes=[
            pltpu.VMEM((bh, bq, 1), jnp.float32),   # running max
            pltpu.VMEM((bh, bq, 1), jnp.float32),   # running denom
            pltpu.VMEM((bh, bq, hd), jnp.float32),  # output accumulator
        ],
        compiler_params=_cparams(("parallel", "parallel", "arbitrary")),
    )(q, k, v, cos, sin, cos, sin)


# ----------------------------------------------------------------- model

def init_params(key, cfg):
    D = cfg['hidden_size']
    V = cfg['vocab_size']
    H = cfg['num_heads']
    hd = D // H
    F = cfg['forward_dim']
    E = cfg['num_experts']
    L = cfg['num_layers']
    keys = iter(jax.random.split(key, 2 + 6 * L))

    def w(shape):  # matmul weights stored bf16 for MXU-native matmuls
        return (jax.random.normal(next(keys), shape, jnp.float32) * 0.02
                ).astype(jnp.bfloat16)

    params = {
        'embed': jax.random.normal(next(keys), (V, D), jnp.float32) * 0.02,
        'blocks': [],
        'ln_f': {'g': jnp.ones((D,), jnp.float32), 'b': jnp.zeros((D,), jnp.float32)},
        'head': {'w': w((D, V)), 'b': jnp.zeros((V,), jnp.float32)},
    }
    for _ in range(L):
        blk = {
            'ln1_g': jnp.ones((D,), jnp.float32), 'ln1_b': jnp.zeros((D,), jnp.float32),
            'qkv_w': w((D, 3 * H * hd)), 'qkv_b': jnp.zeros((3 * H * hd,), jnp.float32),
            'out_w': w((H * hd, D)), 'out_b': jnp.zeros((D,), jnp.float32),
            'ln2_g': jnp.ones((D,), jnp.float32), 'ln2_b': jnp.zeros((D,), jnp.float32),
            'gate_w': w((D, E)), 'gate_b': jnp.zeros((E,), jnp.float32),
            # stacked experts; GEGLU fc split into x1-path (w1) and x2-path (w2)
            'w1': w((E, D, F)), 'b1': jnp.zeros((E, 1, F), jnp.float32),
            'w2': w((E, D, F)), 'b2': jnp.zeros((E, 1, F), jnp.float32),
            'w3': w((E, F, D)), 'b3': jnp.zeros((E, 1, D), jnp.float32),
        }
        params['blocks'].append(blk)
    return params


def transformer_block(p, cfg, x, cos, sin):
    B, T, D = x.shape
    H = cfg['num_heads']
    hd = D // H
    N = B * T
    x2d = x.reshape(N, D)

    # ---- attention sublayer: LN1 fused into the QKV projection
    qkv = ln_matmul(x2d, p['ln1_g'], p['ln1_b'], p['qkv_w'], p['qkv_b'])
    qkv = qkv.reshape(B, T, 3, H, hd)
    # head split kept as XLA transposes: per-head (T, hd) tiles need a [B*H,T,hd]
    # layout to satisfy the (8,128) last-two-dims block constraint.
    q = qkv[:, :, 0].transpose(0, 2, 1, 3).reshape(B * H, T, hd)
    k = qkv[:, :, 1].transpose(0, 2, 1, 3).reshape(B * H, T, hd)
    v = qkv[:, :, 2].transpose(0, 2, 1, 3).reshape(B * H, T, hd)

    o = flash_attention(q, k, v, cos, sin, window=cfg['window_size'], head_dim=hd)
    o = o.reshape(B, H, T, hd).transpose(0, 2, 1, 3).reshape(N, H * hd)

    # out-projection with fused bias + residual add (dropout = identity)
    x2d = matmul_residual(o, p['out_w'], p['out_b'], x2d)

    # ---- MoE GEGLU feed-forward: LN2 + gate fused, experts fused into one call
    h2, probs = ln_gate(x2d, p['ln2_g'], p['ln2_b'], p['gate_w'], p['gate_b'])
    x2d = moe_ffn(h2, probs, x2d, p['w1'], p['b1'], p['w2'], p['b2'],
                  p['w3'], p['b3'], num_experts=cfg['num_experts'])

    # utilization aux loss (tiny [N, E] reduction kept as JAX glue)
    util = jnp.mean(probs, axis=0)
    util_loss = jnp.sum((util - 1.0 / cfg['num_experts']) ** 2)
    return x2d.reshape(B, T, D), util_loss


def chat_model_forward(params, cfg, input_ids, pos_offset=0):
    B, T = input_ids.shape
    D = cfg['hidden_size']
    N = B * T

    # embedding gather (plain JAX glue)
    x = params['embed'][input_ids]                       # [B, T, D]

    # RoPE tables (requires rope_dim == head_dim, same broadcast as the reference)
    rope_dim = cfg['rope_dim']
    inv_freq = 1.0 / (cfg['rope_base'] **
                      (jnp.arange(0, rope_dim, 2, dtype=jnp.float32) / rope_dim))
    pos = jnp.arange(pos_offset, pos_offset + T, dtype=jnp.float32)
    freqs = pos[:, None] * inv_freq[None, :]             # [T, rope_dim//2]
    cos = jnp.cos(freqs)
    sin = jnp.sin(freqs)

    util_loss = jnp.float32(0.0)
    for blk in params['blocks']:
        x, u = transformer_block(blk, cfg, x, cos, sin)
        util_loss = util_loss + u
    util_loss = util_loss / cfg['num_layers']

    # final LayerNorm fused into the vocab projection (tiled over rows & vocab)
    logits = ln_matmul(x.reshape(N, D), params['ln_f']['g'], params['ln_f']['b'],
                       params['head']['w'], params['head']['b'])
    logits = logits.reshape(B, T, cfg['vocab_size'])

    # TODO(synk): cross-entropy loss path (labels != None) and attention_mask
    #             padding not implemented; labels=None / attention_mask=None here.
    return {'loss': None, 'logits': logits, 'util_loss': util_loss}


# ----------------------------------------------------------------- main

if __name__ == "__main__":
    cfg = dict(
        vocab_size=64,
        hidden_size=32,
        num_heads=4,        # head_dim = 8
        rope_dim=8,         # == head_dim (required for the rotary broadcast)
        rope_base=10000.0,
        forward_dim=64,
        num_experts=2,
        num_layers=2,
        window_size=4,
        dropout_rate=0.0,
        expert_loss=0.01,
    )
    key = jax.random.PRNGKey(0)
    pkey, ikey = jax.random.split(key)
    params = init_params(pkey, cfg)

    B, T = 2, 8
    input_ids = jax.random.randint(ikey, (B, T), 0, cfg['vocab_size'])

    fwd = jax.jit(lambda p, ids: chat_model_forward(p, cfg, ids))
    out = fwd(params, input_ids)
    jax.block_until_ready(out['logits'])
    jax.block_until_ready(out['util_loss'])

    assert out['logits'].shape == (B, T, cfg['vocab_size'])
    assert bool(jnp.isfinite(out['logits']).all())
    print("KERNEL_OK")
</pallas_src>

<mosaic_0001>
module attributes {stable_mosaic.version = 11 : i64} {
  func.func @_ln_matmul_kernel(%arg0: i32, %arg1: i32, %arg2: memref<16x32xf32, #tpu.memory_space<vmem>>, %arg3: memref<1x32xf32, #tpu.memory_space<vmem>>, %arg4: memref<1x32xf32, #tpu.memory_space<vmem>>, %arg5: memref<32x96xbf16, #tpu.memory_space<vmem>>, %arg6: memref<1x96xf32, #tpu.memory_space<vmem>>, %arg7: memref<16x96xf32, #tpu.memory_space<vmem>>) attributes {dimension_semantics = [#tpu.dimension_semantics<parallel>, #tpu.dimension_semantics<parallel>], iteration_bounds = array<i64: 1, 1>, scalar_prefetch = 0 : i64, scratch_operands = 0 : i64, tpu.core_type = #tpu.core_type<tc>, window_params = [{transform_indices = @transform_0, window_bounds = array<i64: 16, 32>}, {pipeline_mode = #tpu.pipeline_mode<synchronous>, transform_indices = @transform_1, window_bounds = array<i64: 1, 32>}, {pipeline_mode = #tpu.pipeline_mode<synchronous>, transform_indices = @transform_2, window_bounds = array<i64: 1, 32>}, {transform_indices = @transform_3, window_bounds = array<i64: 32, 96>}, {transform_indices = @transform_4, window_bounds = array<i64: 1, 96>}, {transform_indices = @transform_5, window_bounds = array<i64: 16, 96>}]} {
    %c0 = arith.constant 0 : index
    %c0_0 = arith.constant 0 : index
    %0 = vector.load %arg2[%c0, %c0_0] : memref<16x32xf32, #tpu.memory_space<vmem>>, vector<16x32xf32>
    %cst = arith.constant dense<0.000000e+00> : vector<16xf32>
    %1 = vector.multi_reduction <add>, %0, %cst [1] : vector<16x32xf32> to vector<16xf32>
    %2 = vector.shape_cast %1 : vector<16xf32> to vector<16x1xf32>
    %cst_1 = arith.constant 3.200000e+01 : f32
    %3 = vector.broadcast %cst_1 : f32 to vector<16x1xf32>
    %4 = arith.divf %2, %3 : vector<16x1xf32>
    %5 = vector.broadcast %4 : vector<16x1xf32> to vector<16x32xf32>
    %6 = arith.subf %0, %5 : vector<16x32xf32>
    %7 = arith.mulf %6, %6 : vector<16x32xf32>
    %cst_2 = arith.constant dense<0.000000e+00> : vector<16xf32>
    %8 = vector.multi_reduction <add>, %7, %cst_2 [1] : vector<16x32xf32> to vector<16xf32>
    %9 = vector.shape_cast %8 : vector<16xf32> to vector<16x1xf32>
    %cst_3 = arith.constant 3.200000e+01 : f32
    %10 = vector.broadcast %cst_3 : f32 to vector<16x1xf32>
    %11 = arith.divf %9, %10 : vector<16x1xf32>
    %12 = vector.broadcast %4 : vector<16x1xf32> to vector<16x32xf32>
    %13 = arith.subf %0, %12 : vector<16x32xf32>
    %cst_4 = arith.constant 9.99999974E-6 : f32
    %14 = vector.broadcast %cst_4 : f32 to vector<16x1xf32>
    %15 = arith.addf %11, %14 : vector<16x1xf32>
    %16 = math.rsqrt %15 : vector<16x1xf32>
    %17 = vector.broadcast %16 : vector<16x1xf32> to vector<16x32xf32>
    %18 = arith.mulf %13, %17 : vector<16x32xf32>
    %c0_5 = arith.constant 0 : index
    %c0_6 = arith.constant 0 : index
    %19 = vector.load %arg3[%c0_5, %c0_6] : memref<1x32xf32, #tpu.memory_space<vmem>>, vector<1x32xf32>
    %20 = vector.broadcast %19 : vector<1x32xf32> to vector<16x32xf32>
    %21 = arith.mulf %18, %20 : vector<16x32xf32>
    %c0_7 = arith.constant 0 : index
    %c0_8 = arith.constant 0 : index
    %22 = vector.load %arg4[%c0_7, %c0_8] : memref<1x32xf32, #tpu.memory_space<vmem>>, vector<1x32xf32>
    %23 = vector.broadcast %22 : vector<1x32xf32> to vector<16x32xf32>
    %24 = arith.addf %21, %23 : vector<16x32xf32>
    %25 = arith.truncf %24 : vector<16x32xf32> to vector<16x32xbf16>
    %c0_9 = arith.constant 0 : index
    %c0_10 = arith.constant 0 : index
    %26 = vector.load %arg5[%c0_9, %c0_10] : memref<32x96xbf16, #tpu.memory_space<vmem>>, vector<32x96xbf16>
    %cst_11 = arith.constant dense<0.000000e+00> : vector<16x96xf32>
    %27 = tpu.matmul %25, %26, %cst_11 {dimension_numbers = #tpu.dot_dimension_numbers<[1], [0], [0], [1], [0, 0, 1, 1], [], []>} : vector<16x32xbf16>, vector<32x96xbf16>, vector<16x96xf32> -> vector<16x96xf32>
    %c0_12 = arith.constant 0 : index
    %c0_13 = arith.constant 0 : index
    %28 = vector.load %arg6[%c0_12, %c0_13] : memref<1x96xf32, #tpu.memory_space<vmem>>, vector<1x96xf32>
    %29 = vector.broadcast %28 : vector<1x96xf32> to vector<16x96xf32>
    %30 = arith.addf %27, %29 : vector<16x96xf32>
    %c0_14 = arith.constant 0 : index
    %c0_15 = arith.constant 0 : index
    %31 = vector.load %arg7[%c0_14, %c0_15] : memref<16x96xf32, #tpu.memory_space<vmem>>, vector<16x96xf32>
    tpu.vector_store %arg7[%c0_14, %c0_15], %30 {strides = array<i32>} : memref<16x96xf32, #tpu.memory_space<vmem>>, vector<16x96xf32>,
    return
  }
  func.func @transform_0(%arg0: i32, %arg1: i32) -> (i32, i32) {
    %c0_i32 = arith.constant 0 : i32
    %c0_i32_0 = arith.constant 0 : i32
    return %arg0, %c0_i32 : i32, i32
  }
  func.func @transform_1(%arg0: i32, %arg1: i32) -> (i32, i32) {
    %c0_i32 = arith.constant 0 : i32
    %c0_i32_0 = arith.constant 0 : i32
    %c0_i32_1 = arith.constant 0 : i32
    return %c0_i32, %c0_i32_0 : i32, i32
  }
  func.func @transform_2(%arg0: i32, %arg1: i32) -> (i32, i32) {
    %c0_i32 = arith.constant 0 : i32
    %c0_i32_0 = arith.constant 0 : i32
    %c0_i32_1 = arith.constant 0 : i32
    return %c0_i32, %c0_i32_0 : i32, i32
  }
  func.func @transform_3(%arg0: i32, %arg1: i32) -> (i32, i32) {
    %c0_i32 = arith.constant 0 : i32
    %c0_i32_0 = arith.constant 0 : i32
    return %c0_i32, %arg1 : i32, i32
  }
  func.func @transform_4(%arg0: i32, %arg1: i32) -> (i32, i32) {
    %c0_i32 = arith.constant 0 : i32
    %c0_i32_0 = arith.constant 0 : i32
    return %c0_i32, %arg1 : i32, i32
  }
  func.func @transform_5(%arg0: i32, %arg1: i32) -> (i32, i32) {
    %c0_i32 = arith.constant 0 : i32
    return %arg0, %arg1 : i32, i32
  }
}

module attributes {stable_mosaic.version = 11 : i64} {
  func.func @_flash_attn_kernel(%arg0: i32, %arg1: i32, %arg2: i32, %arg3: memref<8x8x8xf32, #tpu.memory_space<vmem>>, %arg4: memref<8x8x8xf32, #tpu.memory_space<vmem>>, %arg5: memref<8x8x8xf32, #tpu.memory_space<vmem>>, %arg6: memref<8x4xf32, #tpu.memory_space<vmem>>, %arg7: memref<8x4xf32, #tpu.memory_space<vmem>>, %arg8: memref<8x4xf32, #tpu.memory_space<vmem>>, %arg9: memref<8x4xf32, #tpu.memory_space<vmem>>, %arg10: memref<8x8x8xf32, #tpu.memory_space<vmem>>, %arg11: memref<8x8x1xf32, #tpu.memory_space<vmem>>, %arg12: memref<8x8x1xf32, #tpu.memory_space<vmem>>, %arg13: memref<8x8x8xf32, #tpu.memory_space<vmem>>) attributes {dimension_semantics = [#tpu.dimension_semantics<parallel>, #tpu.dimension_semantics<parallel>, #tpu.dimension_semantics<arbitrary>], iteration_bounds = array<i64: 1, 1, 1>, scalar_prefetch = 0 : i64, scratch_operands = 3 : i64, tpu.core_type = #tpu.core_type<tc>, window_params = [{transform_indices = @transform_0, window_bounds = array<i64: 8, 8, 8>}, {transform_indices = @transform_1, window_bounds = array<i64: 8, 8, 8>}, {transform_indices = @transform_2, window_bounds = array<i64: 8, 8, 8>}, {transform_indices = @transform_3, window_bounds = array<i64: 8, 4>}, {transform_indices = @transform_4, window_bounds = array<i64: 8, 4>}, {transform_indices = @transform_5, window_bounds = array<i64: 8, 4>}, {transform_indices = @transform_6, window_bounds = array<i64: 8, 4>}, {transform_indices = @transform_7, window_bounds = array<i64: 8, 8, 8>}]} {
    %c0_i32 = arith.constant 0 : i32
    %0 = arith.cmpi eq, %arg2, %c0_i32 : i32
    %1 = arith.extui %0 : i1 to i32
    %c0_i32_0 = arith.constant 0 : i32
    %2 = arith.cmpi ne, %1, %c0_i32_0 : i32
    scf.if %2 {
      %cst = arith.constant -1.000000e+30 : f32
      %16 = vector.broadcast %cst : f32 to vector<8x8x1xf32>
      %c0 = arith.constant 0 : index
      %c0_7 = arith.constant 0 : index
      %c0_8 = arith.constant 0 : index
      %17 = vector.load %arg11[%c0, %c0_7, %c0_8] : memref<8x8x1xf32, #tpu.memory_space<vmem>>, vector<8x8x1xf32>
      tpu.vector_store %arg11[%c0, %c0_7, %c0_8], %16 {strides = array<i32>} : memref<8x8x1xf32, #tpu.memory_space<vmem>>, vector<8x8x1xf32>,
      %cst_9 = arith.constant 0.000000e+00 : f32
      %18 = vector.broadcast %cst_9 : f32 to vector<8x8x1xf32>
      %c0_10 = arith.constant 0 : index
      %c0_11 = arith.constant 0 : index
      %c0_12 = arith.constant 0 : index
      %19 = vector.load %arg12[%c0_10, %c0_11, %c0_12] : memref<8x8x1xf32, #tpu.memory_space<vmem>>, vector<8x8x1xf32>
      tpu.vector_store %arg12[%c0_10, %c0_11, %c0_12], %18 {strides = array<i32>} : memref<8x8x1xf32, #tpu.memory_space<vmem>>, vector<8x8x1xf32>,
      %cst_13 = arith.constant 0.000000e+00 : f32
      %20 = vector.broadcast %cst_13 : f32 to vector<8x8x8xf32>
      %c0_14 = arith.constant 0 : index
      %c0_15 = arith.constant 0 : index
      %c0_16 = arith.constant 0 : index
      %21 = vector.load %arg13[%c0_14, %c0_15, %c0_16] : memref<8x8x8xf32, #tpu.memory_space<vmem>>, vector<8x8x8xf32>
      tpu.vector_store %arg13[%c0_14, %c0_15, %c0_16], %20 {strides = array<i32>} : memref<8x8x8xf32, #tpu.memory_space<vmem>>, vector<8x8x8xf32>,
    } else {
    }
    %c8_i32 = arith.constant 8 : i32
    %3 = arith.muli %arg1, %c8_i32 : i32
    %c8_i32_1 = arith.constant 8 : i32
    %4 = arith.muli %arg2, %c8_i32_1 : i32
    %c8_i32_2 = arith.constant 8 : i32
    %5 = arith.addi %3, %c8_i32_2 : i32
    %6 = arith.cmpi slt, %4, %5 : i32
    %c8_i32_3 = arith.constant 8 : i32
    %7 = arith.addi %4, %c8_i32_3 : i32
    %c3_i32 = arith.constant 3 : i32
    %8 = arith.subi %3, %c3_i32 : i32
    %9 = arith.cmpi sgt, %7, %8 : i32
    %10 = arith.andi %6, %9 : i1
    %11 = arith.extui %10 : i1 to i32
    %c0_i32_4 = arith.constant 0 : i32
    %12 = arith.cmpi ne, %11, %c0_i32_4 : i32
    scf.if %12 {
      %c0 = arith.constant 0 : index
      %c0_7 = arith.constant 0 : index
      %c0_8 = arith.constant 0 : index
      %16 = vector.load %arg3[%c0, %c0_7, %c0_8] : memref<8x8x8xf32, #tpu.memory_space<vmem>>, vector<8x8x8xf32>
      %c0_9 = arith.constant 0 : index
      %c0_10 = arith.constant 0 : index
      %17 = vector.load %arg6[%c0_9, %c0_10] : memref<8x4xf32, #tpu.memory_space<vmem>>, vector<8x4xf32>
      %c0_11 = arith.constant 0 : index
      %c0_12 = arith.constant 0 : index
      %18 = vector.load %arg7[%c0_11, %c0_12] : memref<8x4xf32, #tpu.memory_space<vmem>>, vector<8x4xf32>
      %19 = vector.extract_strided_slice %16 {offsets = [0, 0, 0], sizes = [8, 8, 4], strides = [1, 1, 1]} : vector<8x8x8xf32> to vector<8x8x4xf32>
      %20 = vector.extract_strided_slice %16 {offsets = [0, 0, 4], sizes = [8, 8, 4], strides = [1, 1, 1]} : vector<8x8x8xf32> to vector<8x8x4xf32>
      %21 = vector.shape_cast %17 : vector<8x4xf32> to vector<1x8x4xf32>
      %22 = vector.shape_cast %18 : vector<8x4xf32> to vector<1x8x4xf32>
      %23 = vector.broadcast %21 : vector<1x8x4xf32> to vector<8x8x4xf32>
      %24 = arith.mulf %19, %23 : vector<8x8x4xf32>
      %25 = vector.broadcast %22 : vector<1x8x4xf32> to vector<8x8x4xf32>
      %26 = arith.mulf %20, %25 : vector<8x8x4xf32>
      %27 = arith.subf %24, %26 : vector<8x8x4xf32>
      %28 = vector.broadcast %22 : vector<1x8x4xf32> to vector<8x8x4xf32>
      %29 = arith.mulf %19, %28 : vector<8x8x4xf32>
      %30 = vector.broadcast %21 : vector<1x8x4xf32> to vector<8x8x4xf32>
      %31 = arith.mulf %20, %30 : vector<8x8x4xf32>
      %32 = arith.addf %29, %31 : vector<8x8x4xf32>
      %33 = tpu.concatenate %27, %32 in 2 : vector<8x8x4xf32>, vector<8x8x4xf32> -> vector<8x8x8xf32>
      %cst = arith.constant 0.353553385 : f32
      %34 = vector.broadcast %cst : f32 to vector<8x8x8xf32>
      %35 = arith.mulf %33, %34 : vector<8x8x8xf32>
      %c0_13 = arith.constant 0 : index
      %c0_14 = arith.constant 0 : index
      %c0_15 = arith.constant 0 : index
      %36 = vector.load %arg4[%c0_13, %c0_14, %c0_15] : memref<8x8x8xf32, #tpu.memory_space<vmem>>, vector<8x8x8xf32>
      %c0_16 = arith.constant 0 : index
      %c0_17 = arith.constant 0 : index
      %37 = vector.load %arg8[%c0_16, %c0_17] : memref<8x4xf32, #tpu.memory_space<vmem>>, vector<8x4xf32>
      %c0_18 = arith.constant 0 : index
      %c0_19 = arith.constant 0 : index
      %38 = vector.load %arg9[%c0_18, %c0_19] : memref<8x4xf32, #tpu.memory_space<vmem>>, vector<8x4xf32>
      %39 = vector.extract_strided_slice %36 {offsets = [0, 0, 0], sizes = [8, 8, 4], strides = [1, 1, 1]} : vector<8x8x8xf32> to vector<8x8x4xf32>
      %40 = vector.extract_strided_slice %36 {offsets = [0, 0, 4], sizes = [8, 8, 4], strides = [1, 1, 1]} : vector<8x8x8xf32> to vector<8x8x4xf32>
      %41 = vector.shape_cast %37 : vector<8x4xf32> to vector<1x8x4xf32>
      %42 = vector.shape_cast %38 : vector<8x4xf32> to vector<1x8x4xf32>
      %43 = vector.broadcast %41 : vector<1x8x4xf32> to vector<8x8x4xf32>
      %44 = arith.mulf %39, %43 : vector<8x8x4xf32>
      %45 = vector.broadcast %42 : vector<1x8x4xf32> to vector<8x8x4xf32>
      %46 = arith.mulf %40, %45 : vector<8x8x4xf32>
      %47 = arith.subf %44, %46 : vector<8x8x4xf32>
      %48 = vector.broadcast %42 : vector<1x8x4xf32> to vector<8x8x4xf32>
      %49 = arith.mulf %39, %48 : vector<8x8x4xf32>
      %50 = vector.broadcast %41 : vector<1x8x4xf32> to vector<8x8x4xf32>
      %51 = arith.mulf %40, %50 : vector<8x8x4xf32>
      %52 = arith.addf %49, %51 : vector<8x8x4xf32>
      %53 = tpu.concatenate %47, %52 in 2 : vector<8x8x4xf32>, vector<8x8x4xf32> -> vector<8x8x8xf32>
      %54 = arith.truncf %35 : vector<8x8x8xf32> to vector<8x8x8xbf16>
      %55 = arith.truncf %53 : vector<8x8x8xf32> to vector<8x8x8xbf16>
      "tpu.trace_start"() <{level = 10 : i32, message = "bqd,bkd->bqk"}> : () -> ()
      %cst_20 = arith.constant dense<0.000000e+00> : vector<8x8x8xf32>
      %56 = tpu.matmul %54, %55, %cst_20 {dimension_numbers = #tpu.dot_dimension_numbers<[2], [2], [1], [1], [0, 0, 0, 1, 1, 1], [0], [0]>} : vector<8x8x8xbf16>, vector<8x8x8xbf16>, vector<8x8x8xf32> -> vector<8x8x8xf32>
      "tpu.trace_stop"() : () -> ()
      %57 = tpu.iota {dimensions = array<i32: 0>} : vector<8x8xi32>
      %58 = vector.broadcast %3 : i32 to vector<8x8xi32>
      %59 = arith.addi %58, %57 : vector<8x8xi32>
      %60 = tpu.iota {dimensions = array<i32: 1>} : vector<8x8xi32>
      %61 = vector.broadcast %4 : i32 to vector<8x8xi32>
      %62 = arith.addi %61, %60 : vector<8x8xi32>
      %63 = arith.cmpi sgt, %62, %59 : vector<8x8xi32>
      %64 = arith.subi %59, %62 : vector<8x8xi32>
      %c4_i32 = arith.constant 4 : i32
      %65 = vector.broadcast %c4_i32 : i32 to vector<8x8xi32>
      %66 = arith.cmpi sge, %64, %65 : vector<8x8xi32>
      %67 = arith.ori %63, %66 : vector<8x8xi1>
      %68 = vector.shape_cast %67 : vector<8x8xi1> to vector<1x8x8xi1>
      %cst_21 = arith.constant -1.000000e+30 : f32
      %69 = vector.shape_cast %68 : vector<1x8x8xi1> to vector<1x8x8xi1>
      %70 = vector.broadcast %69 : vector<1x8x8xi1> to vector<8x8x8xi1>
      %71 = vector.broadcast %cst_21 : f32 to vector<8x8x8xf32>
      %72 = arith.select %70, %71, %56 : vector<8x8x8xi1>, vector<8x8x8xf32>
      %c0_22 = arith.constant 0 : index
      %c0_23 = arith.constant 0 : index
      %c0_24 = arith.constant 0 : index
      %73 = vector.load %arg11[%c0_22, %c0_23, %c0_24] : memref<8x8x1xf32, #tpu.memory_space<vmem>>, vector<8x8x1xf32>
      %cst_25 = arith.constant dense<0xFF800000> : vector<8x8xf32>
      %74 = vector.multi_reduction <maximumf>, %72, %cst_25 [2] : vector<8x8x8xf32> to vector<8x8xf32>
      %75 = vector.shape_cast %74 : vector<8x8xf32> to vector<8x8x1xf32>
      %76 = arith.maximumf %73, %75 : vector<8x8x1xf32>
      %77 = vector.broadcast %76 : vector<8x8x1xf32> to vector<8x8x8xf32>
      %78 = arith.subf %72, %77 : vector<8x8x8xf32>
      %79 = math.exp %78 : vector<8x8x8xf32>
      %cst_26 = arith.constant 0.000000e+00 : f32
      %80 = vector.shape_cast %68 : vector<1x8x8xi1> to vector<1x8x8xi1>
      %81 = vector.broadcast %80 : vector<1x8x8xi1> to vector<8x8x8xi1>
      %82 = vector.broadcast %cst_26 : f32 to vector<8x8x8xf32>
      %83 = arith.select %81, %82, %79 : vector<8x8x8xi1>, vector<8x8x8xf32>
      %84 = arith.subf %73, %76 : vector<8x8x1xf32>
      %85 = math.exp %84 : vector<8x8x1xf32>
      %c0_27 = arith.constant 0 : index
      %c0_28 = arith.constant 0 : index
      %c0_29 = arith.constant 0 : index
      %86 = vector.load %arg12[%c0_27, %c0_28, %c0_29] : memref<8x8x1xf32, #tpu.memory_space<vmem>>, vector<8x8x1xf32>
      %87 = arith.mulf %85, %86 : vector<8x8x1xf32>
      %cst_30 = arith.constant dense<0.000000e+00> : vector<8x8xf32>
      %88 = vector.multi_reduction <add>, %83, %cst_30 [2] : vector<8x8x8xf32> to vector<8x8xf32>
      %89 = vector.shape_cast %88 : vector<8x8xf32> to vector<8x8x1xf32>
      %90 = arith.addf %87, %89 : vector<8x8x1xf32>
      %c0_31 = arith.constant 0 : index
      %c0_32 = arith.constant 0 : index
      %c0_33 = arith.constant 0 : index
      %91 = vector.load %arg12[%c0_31, %c0_32, %c0_33] : memref<8x8x1xf32, #tpu.memory_space<vmem>>, vector<8x8x1xf32>
      tpu.vector_store %arg12[%c0_31, %c0_32, %c0_33], %90 {strides = array<i32>} : memref<8x8x1xf32, #tpu.memory_space<vmem>>, vector<8x8x1xf32>,
      %c0_34 = arith.constant 0 : index
      %c0_35 = arith.constant 0 : index
      %c0_36 = arith.constant 0 : index
      %92 = vector.load %arg13[%c0_34, %c0_35, %c0_36] : memref<8x8x8xf32, #tpu.memory_space<vmem>>, vector<8x8x8xf32>
      %93 = vector.broadcast %85 : vector<8x8x1xf32> to vector<8x8x8xf32>
      %94 = arith.mulf %93, %92 : vector<8x8x8xf32>
      %95 = arith.truncf %83 : vector<8x8x8xf32> to vector<8x8x8xbf16>
      %c0_37 = arith.constant 0 : index
      %c0_38 = arith.constant 0 : index
      %c0_39 = arith.constant 0 : index
      %96 = vector.load %arg5[%c0_37, %c0_38, %c0_39] : memref<8x8x8xf32, #tpu.memory_space<vmem>>, vector<8x8x8xf32>
      %97 = arith.truncf %96 : vector<8x8x8xf32> to vector<8x8x8xbf16>
      "tpu.trace_start"() <{level = 10 : i32, message = "bqk,bkd->bqd"}> : () -> ()
      %cst_40 = arith.constant dense<0.000000e+00> : vector<8x8x8xf32>
      %98 = tpu.matmul %95, %97, %cst_40 {dimension_numbers = #tpu.dot_dimension_numbers<[2], [1], [1], [2], [0, 0, 0, 1, 1, 2], [0], [0]>} : vector<8x8x8xbf16>, vector<8x8x8xbf16>, vector<8x8x8xf32> -> vector<8x8x8xf32>
      "tpu.trace_stop"() : () -> ()
      %99 = arith.addf %94, %98 : vector<8x8x8xf32>
      %c0_41 = arith.constant 0 : index
      %c0_42 = arith.constant 0 : index
      %c0_43 = arith.constant 0 : index
      %100 = vector.load %arg13[%c0_41, %c0_42, %c0_43] : memref<8x8x8xf32, #tpu.memory_space<vmem>>, vector<8x8x8xf32>
      tpu.vector_store %arg13[%c0_41, %c0_42, %c0_43], %99 {strides = array<i32>} : memref<8x8x8xf32, #tpu.memory_space<vmem>>, vector<8x8x8xf32>,
      %c0_44 = arith.constant 0 : index
      %c0_45 = arith.constant 0 : index
      %c0_46 = arith.constant 0 : index
      %101 = vector.load %arg11[%c0_44, %c0_45, %c0_46] : memref<8x8x1xf32, #tpu.memory_space<vmem>>, vector<8x8x1xf32>
      tpu.vector_store %arg11[%c0_44, %c0_45, %c0_46], %76 {strides = array<i32>} : memref<8x8x1xf32, #tpu.memory_space<vmem>>, vector<8x8x1xf32>,
    } else {
    }
    %c0_i32_5 = arith.constant 0 : i32
    %13 = arith.cmpi eq, %arg2, %c0_i32_5 : i32
    %14 = arith.extui %13 : i1 to i32
    %c0_i32_6 = arith.constant 0 : i32
    %15 = arith.cmpi ne, %14, %c0_i32_6 : i32
    scf.if %15 {
      %c0 = arith.constant 0 : index
      %c0_7 = arith.constant 0 : index
      %c0_8 = arith.constant 0 : index
      %16 = vector.load %arg13[%c0, %c0_7, %c0_8] : memref<8x8x8xf32, #tpu.memory_space<vmem>>, vector<8x8x8xf32>
      %c0_9 = arith.constant 0 : index
      %c0_10 = arith.constant 0 : index
      %c0_11 = arith.constant 0 : index
      %17 = vector.load %arg12[%c0_9, %c0_10, %c0_11] : memref<8x8x1xf32, #tpu.memory_space<vmem>>, vector<8x8x1xf32>
      %18 = tpu.reciprocal %17 {approx = true} : vector<8x8x1xf32> -> vector<8x8x1xf32>
      %19 = vector.broadcast %18 : vector<8x8x1xf32> to vector<8x8x8xf32>
      %20 = arith.mulf %16, %19 : vector<8x8x8xf32>
      %c0_12 = arith.constant 0 : index
      %c0_13 = arith.constant 0 : index
      %c0_14 = arith.constant 0 : index
      %21 = vector.load %arg10[%c0_12, %c0_13, %c0_14] : memref<8x8x8xf32, #tpu.memory_space<vmem>>, vector<8x8x8xf32>
      tpu.vector_store %arg10[%c0_12, %c0_13, %c0_14], %20 {strides = array<i32>} : memref<8x8x8xf32, #tpu.memory_space<vmem>>, vector<8x8x8xf32>,
    } else {
    }
    return
  }
  func.func @transform_0(%arg0: i32, %arg1: i32, %arg2: i32) -> (i32, i32, i32) {
    %c0_i32 = arith.constant 0 : i32
    %c0_i32_0 = arith.constant 0 : i32
    return %arg0, %arg1, %c0_i32 : i32, i32, i32
  }
  func.func @transform_1(%arg0: i32, %arg1: i32, %arg2: i32) -> (i32, i32, i32) {
    %c0_i32 = arith.constant 0 : i32
    %c0_i32_0 = arith.constant 0 : i32
    return %arg0, %arg2, %c0_i32 : i32, i32, i32
  }
  func.func @transform_2(%arg0: i32, %arg1: i32, %arg2: i32) -> (i32, i32, i32) {
    %c0_i32 = arith.constant 0 : i32
    %c0_i32_0 = arith.constant 0 : i32
    return %arg0, %arg2, %c0_i32 : i32, i32, i32
  }
  func.func @transform_3(%arg0: i32, %arg1: i32, %arg2: i32) -> (i32, i32) {
    %c0_i32 = arith.constant 0 : i32
    %c0_i32_0 = arith.constant 0 : i32
    return %arg1, %c0_i32 : i32, i32
  }
  func.func @transform_4(%arg0: i32, %arg1: i32, %arg2: i32) -> (i32, i32) {
    %c0_i32 = arith.constant 0 : i32
    %c0_i32_0 = arith.constant 0 : i32
    return %arg1, %c0_i32 : i32, i32
  }
  func.func @transform_5(%arg0: i32, %arg1: i32, %arg2: i32) -> (i32, i32) {
    %c0_i32 = arith.constant 0 : i32
    %c0_i32_0 = arith.constant 0 : i32
    return %arg2, %c0_i32 : i32, i32
  }
  func.func @transform_6(%arg0: i32, %arg1: i32, %arg2: i32) -> (i32, i32) {
    %c0_i32 = arith.constant 0 : i32
    %c0_i32_0 = arith.constant 0 : i32
    return %arg2, %c0_i32 : i32, i32
  }
  func.func @transform_7(%arg0: i32, %arg1: i32, %arg2: i32) -> (i32, i32, i32) {
    %c0_i32 = arith.constant 0 : i32
    %c0_i32_0 = arith.constant 0 : i32
    return %arg0, %arg1, %c0_i32 : i32, i32, i32
  }
}

module attributes {stable_mosaic.version = 11 : i64} {
  func.func @_matmul_res_kernel(%arg0: i32, %arg1: i32, %arg2: memref<16x32xf32, #tpu.memory_space<vmem>>, %arg3: memref<32x32xbf16, #tpu.memory_space<vmem>>, %arg4: memref<1x32xf32, #tpu.memory_space<vmem>>, %arg5: memref<16x32xf32, #tpu.memory_space<vmem>>, %arg6: memref<16x32xf32, #tpu.memory_space<vmem>>) attributes {dimension_semantics = [#tpu.dimension_semantics<parallel>, #tpu.dimension_semantics<parallel>], iteration_bounds = array<i64: 1, 1>, scalar_prefetch = 0 : i64, scratch_operands = 0 : i64, tpu.core_type = #tpu.core_type<tc>, window_params = [{transform_indices = @transform_0, window_bounds = array<i64: 16, 32>}, {transform_indices = @transform_1, window_bounds = array<i64: 32, 32>}, {transform_indices = @transform_2, window_bounds = array<i64: 1, 32>}, {transform_indices = @transform_3, window_bounds = array<i64: 16, 32>}, {transform_indices = @transform_4, window_bounds = array<i64: 16, 32>}]} {
    %c0 = arith.constant 0 : index
    %c0_0 = arith.constant 0 : index
    %0 = vector.load %arg5[%c0, %c0_0] : memref<16x32xf32, #tpu.memory_space<vmem>>, vector<16x32xf32>
    %c0_1 = arith.constant 0 : index
    %c0_2 = arith.constant 0 : index
    %1 = vector.load %arg4[%c0_1, %c0_2] : memref<1x32xf32, #tpu.memory_space<vmem>>, vector<1x32xf32>
    %2 = vector.broadcast %1 : vector<1x32xf32> to vector<16x32xf32>
    %3 = arith.addf %0, %2 : vector<16x32xf32>
    %c0_3 = arith.constant 0 : index
    %c0_4 = arith.constant 0 : index
    %4 = vector.load %arg2[%c0_3, %c0_4] : memref<16x32xf32, #tpu.memory_space<vmem>>, vector<16x32xf32>
    %5 = arith.truncf %4 : vector<16x32xf32> to vector<16x32xbf16>
    %c0_5 = arith.constant 0 : index
    %c0_6 = arith.constant 0 : index
    %6 = vector.load %arg3[%c0_5, %c0_6] : memref<32x32xbf16, #tpu.memory_space<vmem>>, vector<32x32xbf16>
    %cst = arith.constant dense<0.000000e+00> : vector<16x32xf32>
    %7 = tpu.matmul %5, %6, %cst {dimension_numbers = #tpu.dot_dimension_numbers<[1], [0], [0], [1], [0, 0, 1, 1], [], []>} : vector<16x32xbf16>, vector<32x32xbf16>, vector<16x32xf32> -> vector<16x32xf32>
    %8 = arith.addf %3, %7 : vector<16x32xf32>
    %c0_7 = arith.constant 0 : index
    %c0_8 = arith.constant 0 : index
    %9 = vector.load %arg6[%c0_7, %c0_8] : memref<16x32xf32, #tpu.memory_space<vmem>>, vector<16x32xf32>
    tpu.vector_store %arg6[%c0_7, %c0_8], %8 {strides = array<i32>} : memref<16x32xf32, #tpu.memory_space<vmem>>, vector<16x32xf32>,
    return
  }
  func.func @transform_0(%arg0: i32, %arg1: i32) -> (i32, i32) {
    %c0_i32 = arith.constant 0 : i32
    %c0_i32_0 = arith.constant 0 : i32
    return %arg0, %c0_i32 : i32, i32
  }
  func.func @transform_1(%arg0: i32, %arg1: i32) -> (i32, i32) {
    %c0_i32 = arith.constant 0 : i32
    %c0_i32_0 = arith.constant 0 : i32
    return %c0_i32, %arg1 : i32, i32
  }
  func.func @transform_2(%arg0: i32, %arg1: i32) -> (i32, i32) {
    %c0_i32 = arith.constant 0 : i32
    %c0_i32_0 = arith.constant 0 : i32
    return %c0_i32, %arg1 : i32, i32
  }
  func.func @transform_3(%arg0: i32, %arg1: i32) -> (i32, i32) {
    %c0_i32 = arith.constant 0 : i32
    return %arg0, %arg1 : i32, i32
  }
  func.func @transform_4(%arg0: i32, %arg1: i32) -> (i32, i32) {
    %c0_i32 = arith.constant 0 : i32
    return %arg0, %arg1 : i32, i32
  }
}

module attributes {stable_mosaic.version = 11 : i64} {
  func.func @_ln_gate_kernel(%arg0: i32, %arg1: memref<16x32xf32, #tpu.memory_space<vmem>>, %arg2: memref<1x32xf32, #tpu.memory_space<vmem>>, %arg3: memref<1x32xf32, #tpu.memory_space<vmem>>, %arg4: memref<32x2xbf16, #tpu.memory_space<vmem>>, %arg5: memref<1x2xf32, #tpu.memory_space<vmem>>, %arg6: memref<16x32xbf16, #tpu.memory_space<vmem>>, %arg7: memref<16x2xf32, #tpu.memory_space<vmem>>) attributes {dimension_semantics = [#tpu.dimension_semantics<parallel>], iteration_bounds = array<i64: 1>, scalar_prefetch = 0 : i64, scratch_operands = 0 : i64, tpu.core_type = #tpu.core_type<tc>, window_params = [{transform_indices = @transform_0, window_bounds = array<i64: 16, 32>}, {pipeline_mode = #tpu.pipeline_mode<synchronous>, transform_indices = @transform_1, window_bounds = array<i64: 1, 32>}, {pipeline_mode = #tpu.pipeline_mode<synchronous>, transform_indices = @transform_2, window_bounds = array<i64: 1, 32>}, {pipeline_mode = #tpu.pipeline_mode<synchronous>, transform_indices = @transform_3, window_bounds = array<i64: 32, 2>}, {pipeline_mode = #tpu.pipeline_mode<synchronous>, transform_indices = @transform_4, window_bounds = array<i64: 1, 2>}, {transform_indices = @transform_5, window_bounds = array<i64: 16, 32>}, {transform_indices = @transform_6, window_bounds = array<i64: 16, 2>}]} {
    %c0 = arith.constant 0 : index
    %c0_0 = arith.constant 0 : index
    %0 = vector.load %arg1[%c0, %c0_0] : memref<16x32xf32, #tpu.memory_space<vmem>>, vector<16x32xf32>
    %cst = arith.constant dense<0.000000e+00> : vector<16xf32>
    %1 = vector.multi_reduction <add>, %0, %cst [1] : vector<16x32xf32> to vector<16xf32>
    %2 = vector.shape_cast %1 : vector<16xf32> to vector<16x1xf32>
    %cst_1 = arith.constant 3.200000e+01 : f32
    %3 = vector.broadcast %cst_1 : f32 to vector<16x1xf32>
    %4 = arith.divf %2, %3 : vector<16x1xf32>
    %5 = vector.broadcast %4 : vector<16x1xf32> to vector<16x32xf32>
    %6 = arith.subf %0, %5 : vector<16x32xf32>
    %7 = arith.mulf %6, %6 : vector<16x32xf32>
    %cst_2 = arith.constant dense<0.000000e+00> : vector<16xf32>
    %8 = vector.multi_reduction <add>, %7, %cst_2 [1] : vector<16x32xf32> to vector<16xf32>
    %9 = vector.shape_cast %8 : vector<16xf32> to vector<16x1xf32>
    %cst_3 = arith.constant 3.200000e+01 : f32
    %10 = vector.broadcast %cst_3 : f32 to vector<16x1xf32>
    %11 = arith.divf %9, %10 : vector<16x1xf32>
    %12 = vector.broadcast %4 : vector<16x1xf32> to vector<16x32xf32>
    %13 = arith.subf %0, %12 : vector<16x32xf32>
    %cst_4 = arith.constant 9.99999974E-6 : f32
    %14 = vector.broadcast %cst_4 : f32 to vector<16x1xf32>
    %15 = arith.addf %11, %14 : vector<16x1xf32>
    %16 = math.rsqrt %15 : vector<16x1xf32>
    %17 = vector.broadcast %16 : vector<16x1xf32> to vector<16x32xf32>
    %18 = arith.mulf %13, %17 : vector<16x32xf32>
    %c0_5 = arith.constant 0 : index
    %c0_6 = arith.constant 0 : index
    %19 = vector.load %arg2[%c0_5, %c0_6] : memref<1x32xf32, #tpu.memory_space<vmem>>, vector<1x32xf32>
    %20 = vector.broadcast %19 : vector<1x32xf32> to vector<16x32xf32>
    %21 = arith.mulf %18, %20 : vector<16x32xf32>
    %c0_7 = arith.constant 0 : index
    %c0_8 = arith.constant 0 : index
    %22 = vector.load %arg3[%c0_7, %c0_8] : memref<1x32xf32, #tpu.memory_space<vmem>>, vector<1x32xf32>
    %23 = vector.broadcast %22 : vector<1x32xf32> to vector<16x32xf32>
    %24 = arith.addf %21, %23 : vector<16x32xf32>
    %25 = arith.truncf %24 : vector<16x32xf32> to vector<16x32xbf16>
    %c0_9 = arith.constant 0 : index
    %c0_10 = arith.constant 0 : index
    %26 = vector.load %arg6[%c0_9, %c0_10] : memref<16x32xbf16, #tpu.memory_space<vmem>>, vector<16x32xbf16>
    tpu.vector_store %arg6[%c0_9, %c0_10], %25 {strides = array<i32>} : memref<16x32xbf16, #tpu.memory_space<vmem>>, vector<16x32xbf16>,
    %27 = arith.truncf %24 : vector<16x32xf32> to vector<16x32xbf16>
    %c0_11 = arith.constant 0 : index
    %c0_12 = arith.constant 0 : index
    %28 = vector.load %arg4[%c0_11, %c0_12] : memref<32x2xbf16, #tpu.memory_space<vmem>>, vector<32x2xbf16>
    %cst_13 = arith.constant dense<0.000000e+00> : vector<16x2xf32>
    %29 = tpu.matmul %27, %28, %cst_13 {dimension_numbers = #tpu.dot_dimension_numbers<[1], [0], [0], [1], [0, 0, 1, 1], [], []>} : vector<16x32xbf16>, vector<32x2xbf16>, vector<16x2xf32> -> vector<16x2xf32>
    %c0_14 = arith.constant 0 : index
    %c0_15 = arith.constant 0 : index
    %30 = vector.load %arg5[%c0_14, %c0_15] : memref<1x2xf32, #tpu.memory_space<vmem>>, vector<1x2xf32>
    %31 = vector.broadcast %30 : vector<1x2xf32> to vector<16x2xf32>
    %32 = arith.addf %29, %31 : vector<16x2xf32>
    %cst_16 = arith.constant dense<0xFF800000> : vector<16xf32>
    %33 = vector.multi_reduction <maximumf>, %32, %cst_16 [1] : vector<16x2xf32> to vector<16xf32>
    %cst_17 = arith.constant 0xFF800000 : f32
    %34 = vector.broadcast %cst_17 : f32 to vector<16xf32>
    %35 = arith.maximumf %34, %33 : vector<16xf32>
    %36 = vector.shape_cast %35 : vector<16xf32> to vector<16x1xf32>
    %37 = vector.broadcast %36 : vector<16x1xf32> to vector<16x2xf32>
    %38 = arith.subf %32, %37 : vector<16x2xf32>
    %39 = math.exp %38 : vector<16x2xf32>
    %cst_18 = arith.constant dense<0.000000e+00> : vector<16xf32>
    %40 = vector.multi_reduction <add>, %39, %cst_18 [1] : vector<16x2xf32> to vector<16xf32>
    %41 = vector.shape_cast %40 : vector<16xf32> to vector<16x1xf32>
    %42 = vector.broadcast %41 : vector<16x1xf32> to vector<16x2xf32>
    %43 = arith.divf %39, %42 : vector<16x2xf32>
    %c0_19 = arith.constant 0 : index
    %c0_20 = arith.constant 0 : index
    %44 = vector.load %arg7[%c0_19, %c0_20] : memref<16x2xf32, #tpu.memory_space<vmem>>, vector<16x2xf32>
    tpu.vector_store %arg7[%c0_19, %c0_20], %43 {strides = array<i32>} : memref<16x2xf32, #tpu.memory_space<vmem>>, vector<16x2xf32>,
    return
  }
  func.func @transform_0(%arg0: i32) -> (i32, i32) {
    %c0_i32 = arith.constant 0 : i32
    %c0_i32_0 = arith.constant 0 : i32
    return %arg0, %c0_i32 : i32, i32
  }
  func.func @transform_1(%arg0: i32) -> (i32, i32) {
    %c0_i32 = arith.constant 0 : i32
    %c0_i32_0 = arith.constant 0 : i32
    %c0_i32_1 = arith.constant 0 : i32
    return %c0_i32, %c0_i32_0 : i32, i32
  }
  func.func @transform_2(%arg0: i32) -> (i32, i32) {
    %c0_i32 = arith.constant 0 : i32
    %c0_i32_0 = arith.constant 0 : i32
    %c0_i32_1 = arith.constant 0 : i32
    return %c0_i32, %c0_i32_0 : i32, i32
  }
  func.func @transform_3(%arg0: i32) -> (i32, i32) {
    %c0_i32 = arith.constant 0 : i32
    %c0_i32_0 = arith.constant 0 : i32
    %c0_i32_1 = arith.constant 0 : i32
    return %c0_i32, %c0_i32_0 : i32, i32
  }
  func.func @transform_4(%arg0: i32) -> (i32, i32) {
    %c0_i32 = arith.constant 0 : i32
    %c0_i32_0 = arith.constant 0 : i32
    %c0_i32_1 = arith.constant 0 : i32
    return %c0_i32, %c0_i32_0 : i32, i32
  }
  func.func @transform_5(%arg0: i32) -> (i32, i32) {
    %c0_i32 = arith.constant 0 : i32
    %c0_i32_0 = arith.constant 0 : i32
    return %arg0, %c0_i32 : i32, i32
  }
  func.func @transform_6(%arg0: i32) -> (i32, i32) {
    %c0_i32 = arith.constant 0 : i32
    %c0_i32_0 = arith.constant 0 : i32
    return %arg0, %c0_i32 : i32, i32
  }
}

module attributes {stable_mosaic.version = 11 : i64} {
  func.func @_moe_kernel(%arg0: i32, %arg1: i32, %arg2: memref<16x32xbf16, #tpu.memory_space<vmem>>, %arg3: memref<16x2xf32, #tpu.memory_space<vmem>>, %arg4: memref<16x32xf32, #tpu.memory_space<vmem>>, %arg5: memref<1x32x64xbf16, #tpu.memory_space<vmem>>, %arg6: memref<1x1x64xf32, #tpu.memory_space<vmem>>, %arg7: memref<1x32x64xbf16, #tpu.memory_space<vmem>>, %arg8: memref<1x1x64xf32, #tpu.memory_space<vmem>>, %arg9: memref<1x64x32xbf16, #tpu.memory_space<vmem>>, %arg10: memref<1x1x32xf32, #tpu.memory_space<vmem>>, %arg11: memref<16x32xf32, #tpu.memory_space<vmem>>, %arg12: memref<16x32xf32, #tpu.memory_space<vmem>>) attributes {dimension_semantics = [#tpu.dimension_semantics<parallel>, #tpu.dimension_semantics<arbitrary>], iteration_bounds = array<i64: 1, 2>, scalar_prefetch = 0 : i64, scratch_operands = 1 : i64, tpu.core_type = #tpu.core_type<tc>, window_params = [{transform_indices = @transform_0, window_bounds = array<i64: 16, 32>}, {transform_indices = @transform_1, window_bounds = array<i64: 16, 2>}, {transform_indices = @transform_2, window_bounds = array<i64: 16, 32>}, {transform_indices = @transform_3, window_bounds = array<i64: 1, 32, 64>}, {transform_indices = @transform_4, window_bounds = array<i64: 1, 1, 64>}, {transform_indices = @transform_5, window_bounds = array<i64: 1, 32, 64>}, {transform_indices = @transform_6, window_bounds = array<i64: 1, 1, 64>}, {transform_indices = @transform_7, window_bounds = array<i64: 1, 64, 32>}, {transform_indices = @transform_8, window_bounds = array<i64: 1, 1, 32>}, {transform_indices = @transform_9, window_bounds = array<i64: 16, 32>}]} {
    %c0_i32 = arith.constant 0 : i32
    %0 = arith.cmpi eq, %arg1, %c0_i32 : i32
    %1 = arith.extui %0 : i1 to i32
    %c0_i32_0 = arith.constant 0 : i32
    %2 = arith.cmpi ne, %1, %c0_i32_0 : i32
    scf.if %2 {
      %c0_34 = arith.constant 0 : index
      %c0_35 = arith.constant 0 : index
      %53 = vector.load %arg4[%c0_34, %c0_35] : memref<16x32xf32, #tpu.memory_space<vmem>>, vector<16x32xf32>
      %c0_36 = arith.constant 0 : index
      %c0_37 = arith.constant 0 : index
      %54 = vector.load %arg12[%c0_36, %c0_37] : memref<16x32xf32, #tpu.memory_space<vmem>>, vector<16x32xf32>
      tpu.vector_store %arg12[%c0_36, %c0_37], %53 {strides = array<i32>} : memref<16x32xf32, #tpu.memory_space<vmem>>, vector<16x32xf32>,
    } else {
    }
    %c0 = arith.constant 0 : index
    %c0_1 = arith.constant 0 : index
    %3 = vector.load %arg2[%c0, %c0_1] : memref<16x32xbf16, #tpu.memory_space<vmem>>, vector<16x32xbf16>
    %c0_2 = arith.constant 0 : index
    %c0_3 = arith.constant 0 : index
    %c0_4 = arith.constant 0 : index
    %4 = vector.load %arg5[%c0_2, %c0_3, %c0_4] : memref<1x32x64xbf16, #tpu.memory_space<vmem>>, vector<1x32x64xbf16>
    %5 = vector.shape_cast %4 : vector<1x32x64xbf16> to vector<32x64xbf16>
    %cst = arith.constant dense<0.000000e+00> : vector<16x64xf32>
    %6 = tpu.matmul %3, %5, %cst {dimension_numbers = #tpu.dot_dimension_numbers<[1], [0], [0], [1], [0, 0, 1, 1], [], []>} : vector<16x32xbf16>, vector<32x64xbf16>, vector<16x64xf32> -> vector<16x64xf32>
    %c0_5 = arith.constant 0 : index
    %c0_6 = arith.constant 0 : index
    %c0_7 = arith.constant 0 : index
    %7 = vector.load %arg6[%c0_5, %c0_6, %c0_7] : memref<1x1x64xf32, #tpu.memory_space<vmem>>, vector<1x1x64xf32>
    %8 = vector.shape_cast %7 : vector<1x1x64xf32> to vector<1x64xf32>
    %9 = vector.broadcast %8 : vector<1x64xf32> to vector<16x64xf32>
    %10 = arith.addf %6, %9 : vector<16x64xf32>
    %c0_8 = arith.constant 0 : index
    %c0_9 = arith.constant 0 : index
    %c0_10 = arith.constant 0 : index
    %11 = vector.load %arg7[%c0_8, %c0_9, %c0_10] : memref<1x32x64xbf16, #tpu.memory_space<vmem>>, vector<1x32x64xbf16>
    %12 = vector.shape_cast %11 : vector<1x32x64xbf16> to vector<32x64xbf16>
    %cst_11 = arith.constant dense<0.000000e+00> : vector<16x64xf32>
    %13 = tpu.matmul %3, %12, %cst_11 {dimension_numbers = #tpu.dot_dimension_numbers<[1], [0], [0], [1], [0, 0, 1, 1], [], []>} : vector<16x32xbf16>, vector<32x64xbf16>, vector<16x64xf32> -> vector<16x64xf32>
    %c0_12 = arith.constant 0 : index
    %c0_13 = arith.constant 0 : index
    %c0_14 = arith.constant 0 : index
    %14 = vector.load %arg8[%c0_12, %c0_13, %c0_14] : memref<1x1x64xf32, #tpu.memory_space<vmem>>, vector<1x1x64xf32>
    %15 = vector.shape_cast %14 : vector<1x1x64xf32> to vector<1x64xf32>
    %16 = vector.broadcast %15 : vector<1x64xf32> to vector<16x64xf32>
    %17 = arith.addf %13, %16 : vector<16x64xf32>
    %cst_15 = arith.constant 5.000000e-01 : f32
    %18 = vector.broadcast %cst_15 : f32 to vector<16x64xf32>
    %19 = arith.mulf %18, %17 : vector<16x64xf32>
    %cst_16 = arith.constant 0.707106769 : f32
    %20 = vector.broadcast %cst_16 : f32 to vector<16x64xf32>
    %21 = arith.mulf %17, %20 : vector<16x64xf32>
    %22 = math.erf %21 : vector<16x64xf32>
    %cst_17 = arith.constant 1.000000e+00 : f32
    %23 = vector.broadcast %cst_17 : f32 to vector<16x64xf32>
    %24 = arith.addf %23, %22 : vector<16x64xf32>
    %25 = arith.mulf %19, %24 : vector<16x64xf32>
    %26 = arith.mulf %10, %25 : vector<16x64xf32>
    %27 = arith.truncf %26 : vector<16x64xf32> to vector<16x64xbf16>
    %c0_18 = arith.constant 0 : index
    %c0_19 = arith.constant 0 : index
    %c0_20 = arith.constant 0 : index
    %28 = vector.load %arg9[%c0_18, %c0_19, %c0_20] : memref<1x64x32xbf16, #tpu.memory_space<vmem>>, vector<1x64x32xbf16>
    %29 = vector.shape_cast %28 : vector<1x64x32xbf16> to vector<64x32xbf16>
    %cst_21 = arith.constant dense<0.000000e+00> : vector<16x32xf32>
    %30 = tpu.matmul %27, %29, %cst_21 {dimension_numbers = #tpu.dot_dimension_numbers<[1], [0], [0], [1], [0, 0, 1, 1], [], []>} : vector<16x64xbf16>, vector<64x32xbf16>, vector<16x32xf32> -> vector<16x32xf32>
    %c0_22 = arith.constant 0 : index
    %c0_23 = arith.constant 0 : index
    %c0_24 = arith.constant 0 : index
    %31 = vector.load %arg10[%c0_22, %c0_23, %c0_24] : memref<1x1x32xf32, #tpu.memory_space<vmem>>, vector<1x1x32xf32>
    %32 = vector.shape_cast %31 : vector<1x1x32xf32> to vector<1x32xf32>
    %33 = vector.broadcast %32 : vector<1x32xf32> to vector<16x32xf32>
    %34 = arith.addf %30, %33 : vector<16x32xf32>
    %35 = tpu.iota {dimensions = array<i32: 1>} : vector<1x2xi32>
    %36 = vector.broadcast %arg1 : i32 to vector<1x2xi32>
    %37 = arith.cmpi eq, %35, %36 : vector<1x2xi32>
    %c0_25 = arith.constant 0 : index
    %c0_26 = arith.constant 0 : index
    %38 = vector.load %arg3[%c0_25, %c0_26] : memref<16x2xf32, #tpu.memory_space<vmem>>, vector<16x2xf32>
    %cst_27 = arith.constant 0.000000e+00 : f32
    %39 = vector.shape_cast %37 : vector<1x2xi1> to vector<1x2xi1>
    %40 = vector.broadcast %39 : vector<1x2xi1> to vector<16x2xi1>
    %41 = vector.broadcast %cst_27 : f32 to vector<16x2xf32>
    %42 = arith.select %40, %38, %41 : vector<16x2xi1>, vector<16x2xf32>
    %cst_28 = arith.constant dense<0.000000e+00> : vector<16xf32>
    %43 = vector.multi_reduction <add>, %42, %cst_28 [1] : vector<16x2xf32> to vector<16xf32>
    %44 = vector.shape_cast %43 : vector<16xf32> to vector<16x1xf32>
    %c0_29 = arith.constant 0 : index
    %c0_30 = arith.constant 0 : index
    %45 = vector.load %arg12[%c0_29, %c0_30] : memref<16x32xf32, #tpu.memory_space<vmem>>, vector<16x32xf32>
    %46 = vector.broadcast %44 : vector<16x1xf32> to vector<16x32xf32>
    %47 = arith.mulf %46, %34 : vector<16x32xf32>
    %48 = arith.addf %45, %47 : vector<16x32xf32>
    %c0_31 = arith.constant 0 : index
    %c0_32 = arith.constant 0 : index
    %49 = vector.load %arg12[%c0_31, %c0_32] : memref<16x32xf32, #tpu.memory_space<vmem>>, vector<16x32xf32>
    tpu.vector_store %arg12[%c0_31, %c0_32], %48 {strides = array<i32>} : memref<16x32xf32, #tpu.memory_space<vmem>>, vector<16x32xf32>,
    %c1_i32 = arith.constant 1 : i32
    %50 = arith.cmpi eq, %arg1, %c1_i32 : i32
    %51 = arith.extui %50 : i1 to i32
    %c0_i32_33 = arith.constant 0 : i32
    %52 = arith.cmpi ne, %51, %c0_i32_33 : i32
    scf.if %52 {
      %c0_34 = arith.constant 0 : index
      %c0_35 = arith.constant 0 : index
      %53 = vector.load %arg12[%c0_34, %c0_35] : memref<16x32xf32, #tpu.memory_space<vmem>>, vector<16x32xf32>
      %c0_36 = arith.constant 0 : index
      %c0_37 = arith.constant 0 : index
      %54 = vector.load %arg11[%c0_36, %c0_37] : memref<16x32xf32, #tpu.memory_space<vmem>>, vector<16x32xf32>
      tpu.vector_store %arg11[%c0_36, %c0_37], %53 {strides = array<i32>} : memref<16x32xf32, #tpu.memory_space<vmem>>, vector<16x32xf32>,
    } else {
    }
    return
  }
  func.func @transform_0(%arg0: i32, %arg1: i32) -> (i32, i32) {
    %c0_i32 = arith.constant 0 : i32
    %c0_i32_0 = arith.constant 0 : i32
    return %arg0, %c0_i32 : i32, i32
  }
  func.func @transform_1(%arg0: i32, %arg1: i32) -> (i32, i32) {
    %c0_i32 = arith.constant 0 : i32
    %c0_i32_0 = arith.constant 0 : i32
    return %arg0, %c0_i32 : i32, i32
  }
  func.func @transform_2(%arg0: i32, %arg1: i32) -> (i32, i32) {
    %c0_i32 = arith.constant 0 : i32
    %c0_i32_0 = arith.constant 0 : i32
    return %arg0, %c0_i32 : i32, i32
  }
  func.func @transform_3(%arg0: i32, %arg1: i32) -> (i32, i32, i32) {
    %c0_i32 = arith.constant 0 : i32
    %c0_i32_0 = arith.constant 0 : i32
    %c0_i32_1 = arith.constant 0 : i32
    return %arg1, %c0_i32, %c0_i32_0 : i32, i32, i32
  }
  func.func @transform_4(%arg0: i32, %arg1: i32) -> (i32, i32, i32) {
    %c0_i32 = arith.constant 0 : i32
    %c0_i32_0 = arith.constant 0 : i32
    %c0_i32_1 = arith.constant 0 : i32
    return %arg1, %c0_i32, %c0_i32_0 : i32, i32, i32
  }
  func.func @transform_5(%arg0: i32, %arg1: i32) -> (i32, i32, i32) {
    %c0_i32 = arith.constant 0 : i32
    %c0_i32_0 = arith.constant 0 : i32
    %c0_i32_1 = arith.constant 0 : i32
    return %arg1, %c0_i32, %c0_i32_0 : i32, i32, i32
  }
  func.func @transform_6(%arg0: i32, %arg1: i32) -> (i32, i32, i32) {
    %c0_i32 = arith.constant 0 : i32
    %c0_i32_0 = arith.constant 0 : i32
    %c0_i32_1 = arith.constant 0 : i32
    return %arg1, %c0_i32, %c0_i32_0 : i32, i32, i32
  }
  func.func @transform_7(%arg0: i32, %arg1: i32) -> (i32, i32, i32) {
    %c0_i32 = arith.constant 0 : i32
    %c0_i32_0 = arith.constant 0 : i32
    %c0_i32_1 = arith.constant 0 : i32
    return %arg1, %c0_i32, %c0_i32_0 : i32, i32, i32
  }
  func.func @transform_8(%arg0: i32, %arg1: i32) -> (i32, i32, i32) {
    %c0_i32 = arith.constant 0 : i32
    %c0_i32_0 = arith.constant 0 : i32
    %c0_i32_1 = arith.constant 0 : i32
    return %arg1, %c0_i32, %c0_i32_0 : i32, i32, i32
  }
  func.func @transform_9(%arg0: i32, %arg1: i32) -> (i32, i32) {
    %c0_i32 = arith.constant 0 : i32
    %c0_i32_0 = arith.constant 0 : i32
    return %arg0, %c0_i32 : i32, i32
  }
}

module attributes {stable_mosaic.version = 11 : i64} {
  func.func @_ln_matmul_kernel(%arg0: i32, %arg1: i32, %arg2: memref<16x32xf32, #tpu.memory_space<vmem>>, %arg3: memref<1x32xf32, #tpu.memory_space<vmem>>, %arg4: memref<1x32xf32, #tpu.memory_space<vmem>>, %arg5: memref<32x64xbf16, #tpu.memory_space<vmem>>, %arg6: memref<1x64xf32, #tpu.memory_space<vmem>>, %arg7: memref<16x64xf32, #tpu.memory_space<vmem>>) attributes {dimension_semantics = [#tpu.dimension_semantics<parallel>, #tpu.dimension_semantics<parallel>], iteration_bounds = array<i64: 1, 1>, scalar_prefetch = 0 : i64, scratch_operands = 0 : i64, tpu.core_type = #tpu.core_type<tc>, window_params = [{transform_indices = @transform_0, window_bounds = array<i64: 16, 32>}, {pipeline_mode = #tpu.pipeline_mode<synchronous>, transform_indices = @transform_1, window_bounds = array<i64: 1, 32>}, {pipeline_mode = #tpu.pipeline_mode<synchronous>, transform_indices = @transform_2, window_bounds = array<i64: 1, 32>}, {transform_indices = @transform_3, window_bounds = array<i64: 32, 64>}, {transform_indices = @transform_4, window_bounds = array<i64: 1, 64>}, {transform_indices = @transform_5, window_bounds = array<i64: 16, 64>}]} {
    %c0 = arith.constant 0 : index
    %c0_0 = arith.constant 0 : index
    %0 = vector.load %arg2[%c0, %c0_0] : memref<16x32xf32, #tpu.memory_space<vmem>>, vector<16x32xf32>
    %cst = arith.constant dense<0.000000e+00> : vector<16xf32>
    %1 = vector.multi_reduction <add>, %0, %cst [1] : vector<16x32xf32> to vector<16xf32>
    %2 = vector.shape_cast %1 : vector<16xf32> to vector<16x1xf32>
    %cst_1 = arith.constant 3.200000e+01 : f32
    %3 = vector.broadcast %cst_1 : f32 to vector<16x1xf32>
    %4 = arith.divf %2, %3 : vector<16x1xf32>
    %5 = vector.broadcast %4 : vector<16x1xf32> to vector<16x32xf32>
    %6 = arith.subf %0, %5 : vector<16x32xf32>
    %7 = arith.mulf %6, %6 : vector<16x32xf32>
    %cst_2 = arith.constant dense<0.000000e+00> : vector<16xf32>
    %8 = vector.multi_reduction <add>, %7, %cst_2 [1] : vector<16x32xf32> to vector<16xf32>
    %9 = vector.shape_cast %8 : vector<16xf32> to vector<16x1xf32>
    %cst_3 = arith.constant 3.200000e+01 : f32
    %10 = vector.broadcast %cst_3 : f32 to vector<16x1xf32>
    %11 = arith.divf %9, %10 : vector<16x1xf32>
    %12 = vector.broadcast %4 : vector<16x1xf32> to vector<16x32xf32>
    %13 = arith.subf %0, %12 : vector<16x32xf32>
    %cst_4 = arith.constant 9.99999974E-6 : f32
    %14 = vector.broadcast %cst_4 : f32 to vector<16x1xf32>
    %15 = arith.addf %11, %14 : vector<16x1xf32>
    %16 = math.rsqrt %15 : vector<16x1xf32>
    %17 = vector.broadcast %16 : vector<16x1xf32> to vector<16x32xf32>
    %18 = arith.mulf %13, %17 : vector<16x32xf32>
    %c0_5 = arith.constant 0 : index
    %c0_6 = arith.constant 0 : index
    %19 = vector.load %arg3[%c0_5, %c0_6] : memref<1x32xf32, #tpu.memory_space<vmem>>, vector<1x32xf32>
    %20 = vector.broadcast %19 : vector<1x32xf32> to vector<16x32xf32>
    %21 = arith.mulf %18, %20 : vector<16x32xf32>
    %c0_7 = arith.constant 0 : index
    %c0_8 = arith.constant 0 : index
    %22 = vector.load %arg4[%c0_7, %c0_8] : memref<1x32xf32, #tpu.memory_space<vmem>>, vector<1x32xf32>
    %23 = vector.broadcast %22 : vector<1x32xf32> to vector<16x32xf32>
    %24 = arith.addf %21, %23 : vector<16x32xf32>
    %25 = arith.truncf %24 : vector<16x32xf32> to vector<16x32xbf16>
    %c0_9 = arith.constant 0 : index
    %c0_10 = arith.constant 0 : index
    %26 = vector.load %arg5[%c0_9, %c0_10] : memref<32x64xbf16, #tpu.memory_space<vmem>>, vector<32x64xbf16>
    %cst_11 = arith.constant dense<0.000000e+00> : vector<16x64xf32>
    %27 = tpu.matmul %25, %26, %cst_11 {dimension_numbers = #tpu.dot_dimension_numbers<[1], [0], [0], [1], [0, 0, 1, 1], [], []>} : vector<16x32xbf16>, vector<32x64xbf16>, vector<16x64xf32> -> vector<16x64xf32>
    %c0_12 = arith.constant 0 : index
    %c0_13 = arith.constant 0 : index
    %28 = vector.load %arg6[%c0_12, %c0_13] : memref<1x64xf32, #tpu.memory_space<vmem>>, vector<1x64xf32>
    %29 = vector.broadcast %28 : vector<1x64xf32> to vector<16x64xf32>
    %30 = arith.addf %27, %29 : vector<16x64xf32>
    %c0_14 = arith.constant 0 : index
    %c0_15 = arith.constant 0 : index
    %31 = vector.load %arg7[%c0_14, %c0_15] : memref<16x64xf32, #tpu.memory_space<vmem>>, vector<16x64xf32>
    tpu.vector_store %arg7[%c0_14, %c0_15], %30 {strides = array<i32>} : memref<16x64xf32, #tpu.memory_space<vmem>>, vector<16x64xf32>,
    return
  }
  func.func @transform_0(%arg0: i32, %arg1: i32) -> (i32, i32) {
    %c0_i32 = arith.constant 0 : i32
    %c0_i32_0 = arith.constant 0 : i32
    return %arg0, %c0_i32 : i32, i32
  }
  func.func @transform_1(%arg0: i32, %arg1: i32) -> (i32, i32) {
    %c0_i32 = arith.constant 0 : i32
    %c0_i32_0 = arith.constant 0 : i32
    %c0_i32_1 = arith.constant 0 : i32
    return %c0_i32, %c0_i32_0 : i32, i32
  }
  func.func @transform_2(%arg0: i32, %arg1: i32) -> (i32, i32) {
    %c0_i32 = arith.constant 0 : i32
    %c0_i32_0 = arith.constant 0 : i32
    %c0_i32_1 = arith.constant 0 : i32
    return %c0_i32, %c0_i32_0 : i32, i32
  }
  func.func @transform_3(%arg0: i32, %arg1: i32) -> (i32, i32) {
    %c0_i32 = arith.constant 0 : i32
    %c0_i32_0 = arith.constant 0 : i32
    return %c0_i32, %arg1 : i32, i32
  }
  func.func @transform_4(%arg0: i32, %arg1: i32) -> (i32, i32) {
    %c0_i32 = arith.constant 0 : i32
    %c0_i32_0 = arith.constant 0 : i32
    return %c0_i32, %arg1 : i32, i32
  }
  func.func @transform_5(%arg0: i32, %arg1: i32) -> (i32, i32) {
    %c0_i32 = arith.constant 0 : i32
    return %arg0, %arg1 : i32, i32
  }
}

</mosaic_0001>

<llo_original>
// kernel: _lambda_.11
$region0: #{_lambda_.11}
  #allocation0 [shape = 'u32[]', space=smem, size = 0x4, offset = 0x4, fixed_abs, tag = 'smem constant byte address 0x4 - core index']
  #allocation1 [shape = 'u32[144,128]{1,0:T(1,128)}', space=vmem, size = 0x12000, scoped, tag = 'internal scratch']
  %s0 = inlined_call_operand.vmem [shape: f32[16,32], index: 0, kind: input, shape index: {}]
  %s1 = inlined_call_operand.vmem [shape: f32[1,32], index: 1, kind: input, shape index: {}]
  %s2 = inlined_call_operand.vmem [shape: f32[1,32], index: 2, kind: input, shape index: {}]
  %s3 = inlined_call_operand.vmem [shape: bf16[32,96], index: 3, kind: input, shape index: {}]
  %s4 = inlined_call_operand.vmem [shape: f32[1,96], index: 4, kind: input, shape index: {}]
  %s5 = inlined_call_operand.vmem [shape: f32[16,96], index: 5, kind: output, shape index: {}]
  %s6 = sld [smem:[#allocation0]]
  $region30: #{_lambda_.11} parent=0
    _
  %s8 = ssub.s32 1, %s6
  %s9 = scalar_select 0, %s8, %s6
  // Predicated region
  $region2: #{_lambda_.11} parent=0 // pred_check
    _
  $region3: #{_lambda_.11} parent=0 // pred_check_branch
    %11 = sbr.rel (0) target = $region5
  $region4: #{_lambda_.11} parent=0 // pred_region
    _
  $region5: #{_lambda_.11} parent=0 // pred_fallthru
    _
  // Predicated region
  $region6: #{_lambda_.11} parent=0 // pred_check
    _
  $region7: #{_lambda_.11} parent=0 // pred_check_branch
    %13 = sbr.rel (0) target = $region9
  $region8: #{_lambda_.11} parent=0 // pred_region
    _
  $region9: #{_lambda_.11} parent=0 // pred_fallthru
    _
  // Predicated region
  $region10: #{_lambda_.11} parent=0 // pred_check
    _
  $region11: #{_lambda_.11} parent=0 // pred_check_branch
    %15 = sbr.rel (0) target = $region13
  $region12: #{_lambda_.11} parent=0 // pred_region
    _
  $region13: #{_lambda_.11} parent=0 // pred_fallthru
    _
  // Predicated region
  $region14: #{_lambda_.11} parent=0 // pred_check
    _
  $region15: #{_lambda_.11} parent=0 // pred_check_branch
    %17 = sbr.rel (0) target = $region17
  $region16: #{_lambda_.11} parent=0 // pred_region
    _
  $region17: #{_lambda_.11} parent=0 // pred_fallthru
    _
  // Predicated region
  $region18: #{_lambda_.11} parent=0 // pred_check
    _
  $region19: #{_lambda_.11} parent=0 // pred_check_branch
    %19 = sbr.rel (0) target = $region21
  $region20: #{_lambda_.11} parent=0 // pred_region
    _
  $region21: #{_lambda_.11} parent=0 // pred_fallthru
    _
  %v21 = vld [vmem:[%s0] sm:$0xff]
  %v22 = vld [vmem:[%s0 + $0x8] sm:$0xff]
  %vm23 = vcmask 261120
  %v24 = vsel %vm23, %v21, 0.0
  %25 = vadd.xlane.f32.xlu0 %v24
  %v26 = vpop.xlane.xlu0 %25
  %v27 = vsel %vm23, %v22, 0.0
  %28 = vadd.xlane.f32.xlu0 %v27
  %v29 = vpop.xlane.xlu0 %28
  %v30 = vrcp.pop 32.0
  %v31 = vmul.f32 %v26, %v30
  %v32 = vmul.f32 %v29, %v30
  %v33 = vsub.f32 %v21, %v31
  %v34 = vsub.f32 %v22, %v32
  %v35 = vmul.f32 %v33, %v33
  %v36 = vmul.f32 %v34, %v34
  %v37 = vsel %vm23, %v35, 0.0
  %38 = vadd.xlane.f32.xlu0 %v37
  %v39 = vpop.xlane.xlu0 %38
  %v40 = vsel %vm23, %v36, 0.0
  %41 = vadd.xlane.f32.xlu0 %v40
  %v42 = vpop.xlane.xlu0 %41
  %v43 = vmul.f32 %v39, %v30
  %v44 = vmul.f32 %v42, %v30
  %v45 = vadd.f32 %v43, 1e-05
  %v46 = vadd.f32 %v44, 1e-05
  %v47 = vrsqrt.pop %v45
  %v48 = vrsqrt.pop %v46
  %v49 = vmul.f32 %v33, %v47
  %v50 = vmul.f32 %v34, %v48
  %v51 = vld [vmem:[%s1] sm:$0x1]
  %v53 = vlaneseq
  %v54 = vshrl.u32 %v53, 7
  %v55 = vsub.s32 0, %v54
  %v56 = vrot.slane %v51, %v55
  %v58 = vmul.f32 %v49, %v56
  %v59 = vmul.f32 %v50, %v56
  %v60 = vld [vmem:[%s2] sm:$0x1]
  %v62 = vlaneseq
  %v63 = vshrl.u32 %v62, 7
  %v64 = vsub.s32 0, %v63
  %v65 = vrot.slane %v60, %v64
  %v67 = vadd.f32 %v58, %v65
  %v68 = vadd.f32 %v59, %v65
  %v69 = vpack.c.bf16 %v68, %v67
  %v70 = vld [vmem:[%s3] sm:$0xf]
  %v71 = vld [vmem:[%s3 + $0x4] sm:$0xf]
  %v72 = vld [vmem:[%s3 + $0x8] sm:$0xf]
  %v73 = vld [vmem:[%s3 + $0xc] sm:$0xf]
  %v74 = vld [vmem:[%s4] sm:$0x1]
  %v76 = vlaneseq
  %v77 = vshrl.u32 %v76, 7
  %v78 = vsub.s32 0, %v77
  %v79 = vrot.slane %v74, %v78
  %v85 = vunpack.c.l.b16 %v70
  %v86 = vunpack.c.l.b16 %v71
  %v87 = vunpack.c.l.b16 %v72
  %v88 = vunpack.c.l.b16 %v73
  %v89 = vpack.c.b16 %v86, %v85
  %v90 = vpack.c.b16 %v88, %v87
  %v94 = vsel %vm23, %v69, 0
  %96 = vmatprep.subr.bf16.mxu0 0
  %97 = vmatpush1.bf16.msra.mxu0 0
  %98 = vmatprep.subr.bf16.mxu0 0
  %99 = vmatpush1.bf16.msra.mxu0 0
  %100 = vmatprep.subr.bf16.mxu0 0
  %101 = vmatpush1.bf16.msra.mxu0 0
  %102 = vmatprep.subr.bf16.mxu0 0
  %103 = vmatpush1.bf16.msra.mxu0 0
  %104 = vmatprep.subr.bf16.mxu0 0
  %105 = vmatpush1.bf16.msra.mxu0 0
  %106 = vmatprep.subr.bf16.mxu0 0
  %107 = vmatpush1.bf16.msra.mxu0 0
  %108 = vmatprep.subr.bf16.mxu0 0
  %109 = vmatpush1.bf16.msra.mxu0 %v90
  %110 = vmatprep.subr.bf16.mxu0 0
  %111 = vmatpush1.bf16.msra.mxu0 %v89
  %112 = vmatprep.subr.bf16.mxu0 0
  %113 = vmatpush2.bf16.msra.mxu0 0
  %114 = vmatprep.subr.bf16.mxu0 0
  %115 = vmatpush2.bf16.msra.mxu0 0
  %116 = vmatprep.subr.bf16.mxu0 0
  %117 = vmatpush2.bf16.msra.mxu0 0
  %118 = vmatprep.subr.bf16.mxu0 0
  %119 = vmatpush2.bf16.msra.mxu0 0
  %120 = vmatprep.subr.bf16.mxu0 0
  %121 = vmatpush2.bf16.msra.mxu0 0
  %122 = vmatprep.subr.bf16.mxu0 0
  %123 = vmatpush2.bf16.msra.mxu0 0
  %124 = vmatprep.subr.bf16.mxu0 0
  %125 = vmatpush2.bf16.msra.mxu0 0
  %126 = vmatprep.subr.bf16.mxu0 0
  %127 = vmatpush2.bf16.msra.mxu0 0
  %128 = vmatprep.mubr.bf16.mxu0 0
  %129 = vmatmul.mubr.bf16.gmra.mxu0 %v94
  %v130 = vpop.f32.mrf.mxu0
  %v131 = vadd.f32 %v79, %v130
  %v132 = vpop.f32.mrf.mxu0
  %v133 = vpop.f32.mrf.mxu0
  %v134 = vadd.f32 %v79, %v133
  %v135 = vpop.f32.mrf.mxu0
  %136 = vdwg.mxu0
  %vm137 = vcmask 785408
  %138 = vst.msk [vmem:[%s5] sm:$0xff] %vm137, %v131
  %139 = vst.msk [vmem:[%s5 + $0x8] sm:$0xff] %vm137, %v134
  // Predicated region
  $region22: #{_lambda_.11} parent=0 // pred_check
    _
  $region23: #{_lambda_.11} parent=0 // pred_check_branch
    %141 = sbr.rel (0) target = $region25
  $region24: #{_lambda_.11} parent=0 // pred_region
    _
  $region25: #{_lambda_.11} parent=0 // pred_fallthru
    _
  // Predicated region
  $region26: #{_lambda_.11} parent=0 // pred_check
    _
  $region27: #{_lambda_.11} parent=0 // pred_check_branch
    %143 = sbr.rel (0) target = $region29
  $region28: #{_lambda_.11} parent=0 // pred_region
    _
  $region29: #{_lambda_.11} parent=0 // pred_fallthru
    _

// kernel: _lambda_.13
$region0: #{_lambda_.13}
  #allocation0 [shape = 'u32[]', space=smem, size = 0x4, offset = 0x4, fixed_abs, tag = 'smem constant byte address 0x4 - core index']
  #allocation1 [shape = 'u32[144,128]{1,0:T(1,128)}', space=vmem, size = 0x12000, scoped, tag = 'internal scratch']
  %s0 = inlined_call_operand.vmem [shape: f32[16,32], index: 0, kind: input, shape index: {}]
  %s1 = inlined_call_operand.vmem [shape: bf16[32,32], index: 1, kind: input, shape index: {}]
  %s2 = inlined_call_operand.vmem [shape: f32[1,32], index: 2, kind: input, shape index: {}]
  %s3 = inlined_call_operand.vmem [shape: f32[16,32], index: 3, kind: input, shape index: {}]
  %s4 = inlined_call_operand.vmem [shape: f32[16,32], index: 4, kind: output, shape index: {}]
  %s5 = sld [smem:[#allocation0]]
  $region26: #{_lambda_.13} parent=0
    _
  %s7 = ssub.s32 1, %s5
  %s8 = scalar_select 0, %s7, %s5
  // Predicated region
  $region2: #{_lambda_.13} parent=0 // pred_check
    _
  $region3: #{_lambda_.13} parent=0 // pred_check_branch
    %10 = sbr.rel (0) target = $region5
  $region4: #{_lambda_.13} parent=0 // pred_region
    _
  $region5: #{_lambda_.13} parent=0 // pred_fallthru
    _
  // Predicated region
  $region6: #{_lambda_.13} parent=0 // pred_check
    _
  $region7: #{_lambda_.13} parent=0 // pred_check_branch
    %12 = sbr.rel (0) target = $region9
  $region8: #{_lambda_.13} parent=0 // pred_region
    _
  $region9: #{_lambda_.13} parent=0 // pred_fallthru
    _
  // Predicated region
  $region10: #{_lambda_.13} parent=0 // pred_check
    _
  $region11: #{_lambda_.13} parent=0 // pred_check_branch
    %14 = sbr.rel (0) target = $region13
  $region12: #{_lambda_.13} parent=0 // pred_region
    _
  $region13: #{_lambda_.13} parent=0 // pred_fallthru
    _
  // Predicated region
  $region14: #{_lambda_.13} parent=0 // pred_check
    _
  $region15: #{_lambda_.13} parent=0 // pred_check_branch
    %16 = sbr.rel (0) target = $region17
  $region16: #{_lambda_.13} parent=0 // pred_region
    _
  $region17: #{_lambda_.13} parent=0 // pred_fallthru
    _
  %v18 = vld [vmem:[%s3] sm:$0xff]
  %v19 = vld [vmem:[%s3 + $0x8] sm:$0xff]
  %v20 = vld [vmem:[%s2] sm:$0x1]
  %v22 = vlaneseq
  %v23 = vshrl.u32 %v22, 7
  %v24 = vsub.s32 0, %v23
  %v25 = vrot.slane %v20, %v24
  %v27 = vadd.f32 %v18, %v25
  %v28 = vadd.f32 %v19, %v25
  %v29 = vld [vmem:[%s0] sm:$0xff]
  %v30 = vld [vmem:[%s0 + $0x8] sm:$0xff]
  %v31 = vpack.c.bf16 %v30, %v29
  %v32 = vld [vmem:[%s1] sm:$0xf]
  %v33 = vld [vmem:[%s1 + $0x4] sm:$0xf]
  %v34 = vld [vmem:[%s1 + $0x8] sm:$0xf]
  %v35 = vld [vmem:[%s1 + $0xc] sm:$0xf]
  %v40 = vunpack.c.l.b16 %v32
  %v41 = vunpack.c.l.b16 %v33
  %v42 = vunpack.c.l.b16 %v34
  %v43 = vunpack.c.l.b16 %v35
  %v44 = vpack.c.b16 %v41, %v40
  %v45 = vpack.c.b16 %v43, %v42
  %vm48 = vcmask 261120
  %v50 = vsel %vm48, %v31, 0
  %52 = vmatprep.subr.bf16.mxu0 0
  %53 = vmatpush1.bf16.msra.mxu0 0
  %54 = vmatprep.subr.bf16.mxu0 0
  %55 = vmatpush1.bf16.msra.mxu0 0
  %56 = vmatprep.subr.bf16.mxu0 0
  %57 = vmatpush1.bf16.msra.mxu0 0
  %58 = vmatprep.subr.bf16.mxu0 0
  %59 = vmatpush1.bf16.msra.mxu0 0
  %60 = vmatprep.subr.bf16.mxu0 0
  %61 = vmatpush1.bf16.msra.mxu0 0
  %62 = vmatprep.subr.bf16.mxu0 0
  %63 = vmatpush1.bf16.msra.mxu0 0
  %64 = vmatprep.subr.bf16.mxu0 0
  %65 = vmatpush1.bf16.msra.mxu0 %v45
  %66 = vmatprep.subr.bf16.mxu0 0
  %67 = vmatpush1.bf16.msra.mxu0 %v44
  %68 = vmatprep.subr.bf16.mxu0 0
  %69 = vmatpush2.bf16.msra.mxu0 0
  %70 = vmatprep.subr.bf16.mxu0 0
  %71 = vmatpush2.bf16.msra.mxu0 0
  %72 = vmatprep.subr.bf16.mxu0 0
  %73 = vmatpush2.bf16.msra.mxu0 0
  %74 = vmatprep.subr.bf16.mxu0 0
  %75 = vmatpush2.bf16.msra.mxu0 0
  %76 = vmatprep.subr.bf16.mxu0 0
  %77 = vmatpush2.bf16.msra.mxu0 0
  %78 = vmatprep.subr.bf16.mxu0 0
  %79 = vmatpush2.bf16.msra.mxu0 0
  %80 = vmatprep.subr.bf16.mxu0 0
  %81 = vmatpush2.bf16.msra.mxu0 0
  %82 = vmatprep.subr.bf16.mxu0 0
  %83 = vmatpush2.bf16.msra.mxu0 0
  %84 = vmatprep.mubr.bf16.mxu0 0
  %85 = vmatmul.mubr.bf16.gmra.mxu0 %v50
  %v86 = vpop.f32.mrf.mxu0
  %v87 = vadd.f32 0.0, %v86
  %v88 = vpop.f32.mrf.mxu0
  %v89 = vpop.f32.mrf.mxu0
  %v90 = vadd.f32 0.0, %v89
  %v91 = vpop.f32.mrf.mxu0
  %92 = vdwg.mxu0
  %v93 = vadd.f32 %v27, %v87
  %v94 = vadd.f32 %v28, %v90
  %95 = vst.msk [vmem:[%s4] sm:$0xff] %vm48, %v93
  %96 = vst.msk [vmem:[%s4 + $0x8] sm:$0xff] %vm48, %v94
  // Predicated region
  $region18: #{_lambda_.13} parent=0 // pred_check
    _
  $region19: #{_lambda_.13} parent=0 // pred_check_branch
    %98 = sbr.rel (0) target = $region21
  $region20: #{_lambda_.13} parent=0 // pred_region
    _
  $region21: #{_lambda_.13} parent=0 // pred_fallthru
    _
  // Predicated region
  $region22: #{_lambda_.13} parent=0 // pred_check
    _
  $region23: #{_lambda_.13} parent=0 // pred_check_branch
    %100 = sbr.rel (0) target = $region25
  $region24: #{_lambda_.13} parent=0 // pred_region
    _
  $region25: #{_lambda_.13} parent=0 // pred_fallthru
    _

// kernel: _lambda_.14
$region0: #{_lambda_.14}
  #allocation0 [shape = 'u32[]', space=smem, size = 0x4, offset = 0x4, fixed_abs, tag = 'smem constant byte address 0x4 - core index']
  #allocation1 [shape = 'u32[144,128]{1,0:T(1,128)}', space=vmem, size = 0x12000, scoped, tag = 'internal scratch']
  %s0 = inlined_call_operand.vmem [shape: f32[16,32], index: 0, kind: input, shape index: {}]
  %s1 = inlined_call_operand.vmem [shape: f32[1,32], index: 1, kind: input, shape index: {}]
  %s2 = inlined_call_operand.vmem [shape: f32[1,32], index: 2, kind: input, shape index: {}]
  %s3 = inlined_call_operand.vmem [shape: bf16[32,2], index: 3, kind: input, shape index: {}]
  %s4 = inlined_call_operand.vmem [shape: f32[1,2], index: 4, kind: input, shape index: {}]
  %s5 = inlined_call_operand.vmem [shape: bf16[16,32], index: 5, kind: output, shape index: {0}]
  %s6 = inlined_call_operand.vmem [shape: f32[16,2], index: 6, kind: output, shape index: {1}]
  %7 = xla_tuple %s5, %s6
  %s8 = sld [smem:[#allocation0]]
  $region38: #{_lambda_.14} parent=0
    _
  %s10 = ssub.s32 1, %s8
  %s11 = scalar_select 0, %s10, %s8
  // Predicated region
  $region2: #{_lambda_.14} parent=0 // pred_check
    _
  $region3: #{_lambda_.14} parent=0 // pred_check_branch
    %13 = sbr.rel (0) target = $region5
  $region4: #{_lambda_.14} parent=0 // pred_region
    _
  $region5: #{_lambda_.14} parent=0 // pred_fallthru
    _
  // Predicated region
  $region6: #{_lambda_.14} parent=0 // pred_check
    _
  $region7: #{_lambda_.14} parent=0 // pred_check_branch
    %15 = sbr.rel (0) target = $region9
  $region8: #{_lambda_.14} parent=0 // pred_region
    _
  $region9: #{_lambda_.14} parent=0 // pred_fallthru
    _
  // Predicated region
  $region10: #{_lambda_.14} parent=0 // pred_check
    _
  $region11: #{_lambda_.14} parent=0 // pred_check_branch
    %17 = sbr.rel (0) target = $region13
  $region12: #{_lambda_.14} parent=0 // pred_region
    _
  $region13: #{_lambda_.14} parent=0 // pred_fallthru
    _
  // Predicated region
  $region14: #{_lambda_.14} parent=0 // pred_check
    _
  $region15: #{_lambda_.14} parent=0 // pred_check_branch
    %19 = sbr.rel (0) target = $region17
  $region16: #{_lambda_.14} parent=0 // pred_region
    _
  $region17: #{_lambda_.14} parent=0 // pred_fallthru
    _
  // Predicated region
  $region18: #{_lambda_.14} parent=0 // pred_check
    _
  $region19: #{_lambda_.14} parent=0 // pred_check_branch
    %21 = sbr.rel (0) target = $region21
  $region20: #{_lambda_.14} parent=0 // pred_region
    _
  $region21: #{_lambda_.14} parent=0 // pred_fallthru
    _
  %v23 = vld [vmem:[%s0] sm:$0xff]
  %v24 = vld [vmem:[%s0 + $0x8] sm:$0xff]
  %vm25 = vcmask 261120
  %v26 = vsel %vm25, %v23, 0.0
  %27 = vadd.xlane.f32.xlu0 %v26
  %v28 = vpop.xlane.xlu0 %27
  %v29 = vsel %vm25, %v24, 0.0
  %30 = vadd.xlane.f32.xlu0 %v29
  %v31 = vpop.xlane.xlu0 %30
  %v32 = vrcp.pop 32.0
  %v33 = vmul.f32 %v28, %v32
  %v34 = vmul.f32 %v31, %v32
  %v35 = vsub.f32 %v23, %v33
  %v36 = vsub.f32 %v24, %v34
  %v37 = vmul.f32 %v35, %v35
  %v38 = vmul.f32 %v36, %v36
  %v39 = vsel %vm25, %v37, 0.0
  %40 = vadd.xlane.f32.xlu0 %v39
  %v41 = vpop.xlane.xlu0 %40
  %v42 = vsel %vm25, %v38, 0.0
  %43 = vadd.xlane.f32.xlu0 %v42
  %v44 = vpop.xlane.xlu0 %43
  %v45 = vmul.f32 %v41, %v32
  %v46 = vmul.f32 %v44, %v32
  %v47 = vadd.f32 %v45, 1e-05
  %v48 = vadd.f32 %v46, 1e-05
  %v49 = vrsqrt.pop %v47
  %v50 = vrsqrt.pop %v48
  %v51 = vmul.f32 %v35, %v49
  %v52 = vmul.f32 %v36, %v50
  %v53 = vld [vmem:[%s1] sm:$0x1]
  %v55 = vlaneseq
  %v56 = vshrl.u32 %v55, 7
  %v57 = vsub.s32 0, %v56
  %v58 = vrot.slane %v53, %v57
  %v60 = vmul.f32 %v51, %v58
  %v61 = vmul.f32 %v52, %v58
  %v62 = vld [vmem:[%s2] sm:$0x1]
  %v64 = vlaneseq
  %v65 = vshrl.u32 %v64, 7
  %v66 = vsub.s32 0, %v65
  %v67 = vrot.slane %v62, %v66
  %v69 = vadd.f32 %v60, %v67
  %v70 = vadd.f32 %v61, %v67
  %v71 = vpack.c.bf16 %v70, %v69
  %v73 = vunpack.c.l.b16 %v71
  %v74 = vunpack.c.h.b16 %v71
  %v75 = vpack.c.b16 %v73, %v73
  %v76 = vpack.c.b16 %v74, %v74
  %vm79 = vcmask 257024
  %80 = vst.msk [vmem:[%s5] sm:$0xf] %vm79, %v75
  %81 = vst.msk [vmem:[%s5 + $0x4] sm:$0xf] %vm79, %v76
  %v82 = vld [vmem:[%s3] sm:$0xf]
  %v83 = vld [vmem:[%s3 + $0x4] sm:$0xf]
  %v84 = vld [vmem:[%s3 + $0x8] sm:$0xf]
  %v85 = vld [vmem:[%s3 + $0xc] sm:$0xf]
  %v86 = vld [vmem:[%s4] sm:$0x1]
  %v88 = vlaneseq
  %v89 = vshrl.u32 %v88, 7
  %v90 = vsub.s32 0, %v89
  %v91 = vrot.slane %v86, %v90
  %v97 = vunpack.c.l.b16 %v82
  %v98 = vunpack.c.l.b16 %v83
  %v99 = vunpack.c.l.b16 %v84
  %v100 = vunpack.c.l.b16 %v85
  %v101 = vpack.c.b16 %v98, %v97
  %v102 = vpack.c.b16 %v100, %v99
  %v106 = vsel %vm25, %v71, 0
  %108 = vmatprep.subr.bf16.mxu0 0
  %109 = vmatpush1.bf16.msra.mxu0 0
  %110 = vmatprep.subr.bf16.mxu0 0
  %111 = vmatpush1.bf16.msra.mxu0 0
  %112 = vmatprep.subr.bf16.mxu0 0
  %113 = vmatpush1.bf16.msra.mxu0 0
  %114 = vmatprep.subr.bf16.mxu0 0
  %115 = vmatpush1.bf16.msra.mxu0 0
  %116 = vmatprep.subr.bf16.mxu0 0
  %117 = vmatpush1.bf16.msra.mxu0 0
  %118 = vmatprep.subr.bf16.mxu0 0
  %119 = vmatpush1.bf16.msra.mxu0 0
  %120 = vmatprep.subr.bf16.mxu0 0
  %121 = vmatpush1.bf16.msra.mxu0 %v102
  %122 = vmatprep.subr.bf16.mxu0 0
  %123 = vmatpush1.bf16.msra.mxu0 %v101
  %124 = vmatprep.subr.bf16.mxu0 0
  %125 = vmatpush2.bf16.msra.mxu0 0
  %126 = vmatprep.subr.bf16.mxu0 0
  %127 = vmatpush2.bf16.msra.mxu0 0
  %128 = vmatprep.subr.bf16.mxu0 0
  %129 = vmatpush2.bf16.msra.mxu0 0
  %130 = vmatprep.subr.bf16.mxu0 0
  %131 = vmatpush2.bf16.msra.mxu0 0
  %132 = vmatprep.subr.bf16.mxu0 0
  %133 = vmatpush2.bf16.msra.mxu0 0
  %134 = vmatprep.subr.bf16.mxu0 0
  %135 = vmatpush2.bf16.msra.mxu0 0
  %136 = vmatprep.subr.bf16.mxu0 0
  %137 = vmatpush2.bf16.msra.mxu0 0
  %138 = vmatprep.subr.bf16.mxu0 0
  %139 = vmatpush2.bf16.msra.mxu0 0
  %140 = vmatprep.mubr.bf16.mxu0 0
  %141 = vmatmul.mubr.bf16.gmra.mxu0 %v106
  %v142 = vpop.f32.mrf.mxu0
  %v143 = vadd.f32 %v91, %v142
  %v144 = vpop.f32.mrf.mxu0
  %v145 = vpop.f32.mrf.mxu0
  %v146 = vadd.f32 %v91, %v145
  %v147 = vpop.f32.mrf.mxu0
  %148 = vdwg.mxu0
  %vm149 = vcmask 15360
  %v150 = vsel %vm149, %v143, -inf
  %151 = vmax.xlane.f32.xlu0 %v150
  %v152 = vpop.xlane.xlu0 %151
  %v153 = vsel %vm149, %v146, -inf
  %154 = vmax.xlane.f32.xlu0 %v153
  %v155 = vpop.xlane.xlu0 %154
  %v156 = vsub.f32 %v143, %v152
  %v157 = vsub.f32 %v146, %v155
  %v158 = vmul.f32 %v156, 1.442695
  %v159 = vpow.pop %v158
  %v160 = vmul.f32 %v157, 1.442695
  %v161 = vpow.pop %v160
  %v162 = vsel %vm149, %v159, 0.0
  %163 = vadd.xlane.f32.xlu0 %v162
  %v164 = vpop.xlane.xlu0 %163
  %v165 = vsel %vm149, %v161, 0.0
  %166 = vadd.xlane.f32.xlu0 %v165
  %v167 = vpop.xlane.xlu0 %166
  %v168 = vrcp.pop %v164
  %v169 = vmul.f32 %v159, %v168
  %v170 = vrcp.pop %v167
  %v171 = vmul.f32 %v161, %v170
  %172 = vst.msk [vmem:[%s6] sm:$0xff] %vm149, %v169
  %173 = vst.msk [vmem:[%s6 + $0x8] sm:$0xff] %vm149, %v171
  // Predicated region
  $region22: #{_lambda_.14} parent=0 // pred_check
    _
  $region23: #{_lambda_.14} parent=0 // pred_check_branch
    %175 = sbr.rel (0) target = $region25
  $region24: #{_lambda_.14} parent=0 // pred_region
    _
  $region25: #{_lambda_.14} parent=0 // pred_fallthru
    _
  // Predicated region
  $region26: #{_lambda_.14} parent=0 // pred_check
    _
  $region27: #{_lambda_.14} parent=0 // pred_check_branch
    %177 = sbr.rel (0) target = $region29
  $region28: #{_lambda_.14} parent=0 // pred_region
    _
  $region29: #{_lambda_.14} parent=0 // pred_fallthru
    _
  // Predicated region
  $region30: #{_lambda_.14} parent=0 // pred_check
    _
  $region31: #{_lambda_.14} parent=0 // pred_check_branch
    %179 = sbr.rel (0) target = $region33
  $region32: #{_lambda_.14} parent=0 // pred_region
    _
  $region33: #{_lambda_.14} parent=0 // pred_fallthru
    _
  // Predicated region
  $region34: #{_lambda_.14} parent=0 // pred_check
    _
  $region35: #{_lambda_.14} parent=0 // pred_check_branch
    %181 = sbr.rel (0) target = $region37
  $region36: #{_lambda_.14} parent=0 // pred_region
    _
  $region37: #{_lambda_.14} parent=0 // pred_fallthru
    _

// kernel: _lambda_.15
$region0: #{_lambda_.15}
  #allocation0 [shape = 'u32[]', space=smem, size = 0x4, offset = 0x4, fixed_abs, tag = 'smem constant byte address 0x4 - core index']
  #allocation1 [shape = 'u32[144,128]{1,0:T(1,128)}', space=vmem, size = 0x12000, scoped, tag = 'internal scratch']
  #allocation2 [shape = 'f32[16,32]{1,0:T(8,128)}', space=vmem, size = 0x2000, scoped, tag = 'scratch operand']
  %s0 = inlined_call_operand.vmem [shape: bf16[16,32], index: 0, kind: input, shape index: {}]
  %s1 = inlined_call_operand.vmem [shape: f32[16,2], index: 1, kind: input, shape index: {}]
  %s2 = inlined_call_operand.vmem [shape: f32[16,32], index: 2, kind: input, shape index: {}]
  %s3 = inlined_call_operand.vmem [shape: bf16[2,32,64], index: 3, kind: input, shape index: {}]
  %s4 = inlined_call_operand.vmem [shape: f32[2,1,64], index: 4, kind: input, shape index: {}]
  %s5 = inlined_call_operand.vmem [shape: bf16[2,32,64], index: 5, kind: input, shape index: {}]
  %s6 = inlined_call_operand.vmem [shape: f32[2,1,64], index: 6, kind: input, shape index: {}]
  %s7 = inlined_call_operand.vmem [shape: bf16[2,64,32], index: 7, kind: input, shape index: {}]
  %s8 = inlined_call_operand.vmem [shape: f32[2,1,32], index: 8, kind: input, shape index: {}]
  %s9 = inlined_call_operand.vmem [shape: f32[16,32], index: 9, kind: output, shape index: {}]
  %s10 = sld [smem:[#allocation0]]
  $region77: #{_lambda_.15} parent=0
    _
  %s12 = ssub.s32 1, %s10
  %s13 = scalar_select 0, %s12, %s10
  loop: start=0, step=1, limit=4
  $region2: #{_lambda_.15} parent=0 // loop_pre_header
    _
  $region3: #{_lambda_.15} parent=0 // loop_header
    %s15 = sphi 0, %s19
    %p16 = scmp.ge.s32.totalorder %s15, 4
    %s22 = sphi 0, %s34
    %s23 = sphi 0, %s30
    %s24 = sphi 0, %s22
    %s25 = sphi 0, %s23
    %s26 = sphi 0, %s24
    %s27 = sphi 0, %s25
    %s37 = sphi 0, %s39
    %s40 = sphi 0, %s37
    %s41 = sphi 0, %s40
    %s57 = sphi 0, %s41
    %s63 = sphi 0, %s65
    %s66 = sphi 0, %s63
    %s67 = sphi 0, %s66
    %s83 = sphi 0, %s67
    %s89 = sphi 0, %s91
    %s92 = sphi 0, %s89
    %s93 = sphi 0, %s92
    %s109 = sphi 0, %s93
    %s115 = sphi 0, %s117
    %s118 = sphi 0, %s115
    %s119 = sphi 0, %s118
    %s135 = sphi 0, %s119
    %s141 = sphi 0, %s143
    %s144 = sphi 0, %s141
    %s145 = sphi 0, %s144
    %s161 = sphi 0, %s145
    %s167 = sphi 0, %s169
    %s170 = sphi 0, %s167
    %s171 = sphi 0, %s170
    %s187 = sphi 0, %s171
    %s193 = sphi 0, %s195
    %s196 = sphi 0, %s193
    %s197 = sphi 0, %s196
    %s213 = sphi 0, %s197
    %s219 = sphi 0, %s221
    %s222 = sphi 0, %s219
    %s223 = sphi 0, %s222
    %s239 = sphi 0, %s223
    %s245 = sphi 0, %s247
    %s248 = sphi 0, %s245
    %s249 = sphi 0, %s248
    %s265 = sphi 0, %s249
    %s271 = sphi 0, %s273
    %s274 = sphi 0, %s271
    %s275 = sphi 0, %s274
    %s291 = sphi 0, %s275
  $region4: #{_lambda_.15} parent=0 // loop_header_branch
    %18 = sbr.rel (%p16) target = $region8
  $region5: #{_lambda_.15} parent=0 // loop_body
    %s20 = ssub.s32 %s15, 1
    %s21 = ssub.s32 %s15, 2
    %s28 = sadd.s32 1, %s23
    %p29 = scmp.ge.s32.totalorder %s28, 2
    %s30 = scalar_select %p29, 0, %s28
    %s31 = sadd.s32 1, %s22
    %s32 = scalar_select %p29, %s31, %s22
    %p33 = scmp.ge.s32.totalorder %s32, 1
    %s34 = scalar_select %p33, 0, %s32
    %s35 = ssub.s32 %s22, %s34
    %p36 = scmp.eq.s32.totalorder %s35, 0
    %s38 = sadd.s32 %s37, 1
    %s39 = scalar_select %p36, %s37, %s38
    %p42 = pneg %p36
    %p43 = scmp.eq.s32.totalorder %s15, 1
    %p44 = por %p42, %p43
    %p45 = scmp.ne.s32.totalorder %s37, %s40
    %p46 = scmp.eq.s32.totalorder %s15, 0
    %p47 = por %p45, %p46
    %p48 = scmp.ne.s32.totalorder %s37, %s40
    %p49 = scmp.eq.s32.totalorder %s20, 1
    %p50 = por %p48, %p49
    %p51 = scmp.ne.s32.totalorder %s40, %s41
    %p52 = scmp.eq.s32.totalorder %s20, 0
    %p53 = por %p51, %p52
    %p54 = scmp.ne.s32.totalorder %s40, %s41
    %p55 = scmp.eq.s32.totalorder %s21, 1
    %p56 = por %p54, %p55
    %p58 = scmp.ne.s32.totalorder %s41, %s57
    %p59 = scmp.eq.s32.totalorder %s21, 0
    %p60 = por %p58, %p59
    %s61 = ssub.s32 %s22, %s34
    %p62 = scmp.eq.s32.totalorder %s61, 0
    %s64 = sadd.s32 %s63, 1
    %s65 = scalar_select %p62, %s63, %s64
    %p68 = pneg %p62
    %p69 = scmp.eq.s32.totalorder %s15, 1
    %p70 = por %p68, %p69
    %p71 = scmp.ne.s32.totalorder %s63, %s66
    %p72 = scmp.eq.s32.totalorder %s15, 0
    %p73 = por %p71, %p72
    %p74 = scmp.ne.s32.totalorder %s63, %s66
    %p75 = scmp.eq.s32.totalorder %s20, 1
    %p76 = por %p74, %p75
    %p77 = scmp.ne.s32.totalorder %s66, %s67
    %p78 = scmp.eq.s32.totalorder %s20, 0
    %p79 = por %p77, %p78
    %p80 = scmp.ne.s32.totalorder %s66, %s67
    %p81 = scmp.eq.s32.totalorder %s21, 1
    %p82 = por %p80, %p81
    %p84 = scmp.ne.s32.totalorder %s67, %s83
    %p85 = scmp.eq.s32.totalorder %s21, 0
    %p86 = por %p84, %p85
    %s87 = ssub.s32 %s22, %s34
    %p88 = scmp.eq.s32.totalorder %s87, 0
    %s90 = sadd.s32 %s89, 1
    %s91 = scalar_select %p88, %s89, %s90
    %p94 = pneg %p88
    %p95 = scmp.eq.s32.totalorder %s15, 1
    %p96 = por %p94, %p95
    %p97 = scmp.ne.s32.totalorder %s89, %s92
    %p98 = scmp.eq.s32.totalorder %s15, 0
    %p99 = por %p97, %p98
    %p100 = scmp.ne.s32.totalorder %s89, %s92
    %p101 = scmp.eq.s32.totalorder %s20, 1
    %p102 = por %p100, %p101
    %p103 = scmp.ne.s32.totalorder %s92, %s93
    %p104 = scmp.eq.s32.totalorder %s20, 0
    %p105 = por %p103, %p104
    %p106 = scmp.ne.s32.totalorder %s92, %s93
    %p107 = scmp.eq.s32.totalorder %s21, 1
    %p108 = por %p106, %p107
    %p110 = scmp.ne.s32.totalorder %s93, %s109
    %p111 = scmp.eq.s32.totalorder %s21, 0
    %p112 = por %p110, %p111
    %s113 = ssub.s32 %s23, %s30
    %p114 = scmp.eq.s32.totalorder %s113, 0
    %s116 = sadd.s32 %s115, 1
    %s117 = scalar_select %p114, %s115, %s116
    %p120 = pneg %p114
    %p121 = scmp.eq.s32.totalorder %s15, 1
    %p122 = por %p120, %p121
    %p123 = scmp.ne.s32.totalorder %s115, %s118
    %p124 = scmp.eq.s32.totalorder %s15, 0
    %p125 = por %p123, %p124
    %p126 = scmp.ne.s32.totalorder %s115, %s118
    %p127 = scmp.eq.s32.totalorder %s20, 1
    %p128 = por %p126, %p127
    %p129 = scmp.ne.s32.totalorder %s118, %s119
    %p130 = scmp.eq.s32.totalorder %s20, 0
    %p131 = por %p129, %p130
    %p132 = scmp.ne.s32.totalorder %s118, %s119
    %p133 = scmp.eq.s32.totalorder %s21, 1
    %p134 = por %p132, %p133
    %p136 = scmp.ne.s32.totalorder %s119, %s135
    %p137 = scmp.eq.s32.totalorder %s21, 0
    %p138 = por %p136, %p137
    %s139 = ssub.s32 %s23, %s30
    %p140 = scmp.eq.s32.totalorder %s139, 0
    %s142 = sadd.s32 %s141, 1
    %s143 = scalar_select %p140, %s141, %s142
    %p146 = pneg %p140
    %p147 = scmp.eq.s32.totalorder %s15, 1
    %p148 = por %p146, %p147
    %p149 = scmp.ne.s32.totalorder %s141, %s144
    %p150 = scmp.eq.s32.totalorder %s15, 0
    %p151 = por %p149, %p150
    %p152 = scmp.ne.s32.totalorder %s141, %s144
    %p153 = scmp.eq.s32.totalorder %s20, 1
    %p154 = por %p152, %p153
    %p155 = scmp.ne.s32.totalorder %s144, %s145
    %p156 = scmp.eq.s32.totalorder %s20, 0
    %p157 = por %p155, %p156
    %p158 = scmp.ne.s32.totalorder %s144, %s145
    %p159 = scmp.eq.s32.totalorder %s21, 1
    %p160 = por %p158, %p159
    %p162 = scmp.ne.s32.totalorder %s145, %s161
    %p163 = scmp.eq.s32.totalorder %s21, 0
    %p164 = por %p162, %p163
    %s165 = ssub.s32 %s23, %s30
    %p166 = scmp.eq.s32.totalorder %s165, 0
    %s168 = sadd.s32 %s167, 1
    %s169 = scalar_select %p166, %s167, %s168
    %p172 = pneg %p166
    %p173 = scmp.eq.s32.totalorder %s15, 1
    %p174 = por %p172, %p173
    %p175 = scmp.ne.s32.totalorder %s167, %s170
    %p176 = scmp.eq.s32.totalorder %s15, 0
    %p177 = por %p175, %p176
    %p178 = scmp.ne.s32.totalorder %s167, %s170
    %p179 = scmp.eq.s32.totalorder %s20, 1
    %p180 = por %p178, %p179
    %p181 = scmp.ne.s32.totalorder %s170, %s171
    %p182 = scmp.eq.s32.totalorder %s20, 0
    %p183 = por %p181, %p182
    %p184 = scmp.ne.s32.totalorder %s170, %s171
    %p185 = scmp.eq.s32.totalorder %s21, 1
    %p186 = por %p184, %p185
    %p188 = scmp.ne.s32.totalorder %s171, %s187
    %p189 = scmp.eq.s32.totalorder %s21, 0
    %p190 = por %p188, %p189
    %s191 = ssub.s32 %s23, %s30
    %p192 = scmp.eq.s32.totalorder %s191, 0
    %s194 = sadd.s32 %s193, 1
    %s195 = scalar_select %p192, %s193, %s194
    %p198 = pneg %p192
    %p199 = scmp.eq.s32.totalorder %s15, 1
    %p200 = por %p198, %p199
    %p201 = scmp.ne.s32.totalorder %s193, %s196
    %p202 = scmp.eq.s32.totalorder %s15, 0
    %p203 = por %p201, %p202
    %p204 = scmp.ne.s32.totalorder %s193, %s196
    %p205 = scmp.eq.s32.totalorder %s20, 1
    %p206 = por %p204, %p205
    %p207 = scmp.ne.s32.totalorder %s196, %s197
    %p208 = scmp.eq.s32.totalorder %s20, 0
    %p209 = por %p207, %p208
    %p210 = scmp.ne.s32.totalorder %s196, %s197
    %p211 = scmp.eq.s32.totalorder %s21, 1
    %p212 = por %p210, %p211
    %p214 = scmp.ne.s32.totalorder %s197, %s213
    %p215 = scmp.eq.s32.totalorder %s21, 0
    %p216 = por %p214, %p215
    %s217 = ssub.s32 %s23, %s30
    %p218 = scmp.eq.s32.totalorder %s217, 0
    %s220 = sadd.s32 %s219, 1
    %s221 = scalar_select %p218, %s219, %s220
    %p224 = pneg %p218
    %p225 = scmp.eq.s32.totalorder %s15, 1
    %p226 = por %p224, %p225
    %p227 = scmp.ne.s32.totalorder %s219, %s222
    %p228 = scmp.eq.s32.totalorder %s15, 0
    %p229 = por %p227, %p228
    %p230 = scmp.ne.s32.totalorder %s219, %s222
    %p231 = scmp.eq.s32.totalorder %s20, 1
    %p232 = por %p230, %p231
    %p233 = scmp.ne.s32.totalorder %s222, %s223
    %p234 = scmp.eq.s32.totalorder %s20, 0
    %p235 = por %p233, %p234
    %p236 = scmp.ne.s32.totalorder %s222, %s223
    %p237 = scmp.eq.s32.totalorder %s21, 1
    %p238 = por %p236, %p237
    %p240 = scmp.ne.s32.totalorder %s223, %s239
    %p241 = scmp.eq.s32.totalorder %s21, 0
    %p242 = por %p240, %p241
    %s243 = ssub.s32 %s23, %s30
    %p244 = scmp.eq.s32.totalorder %s243, 0
    %s246 = sadd.s32 %s245, 1
    %s247 = scalar_select %p244, %s245, %s246
    %p250 = pneg %p244
    %p251 = scmp.eq.s32.totalorder %s15, 1
    %p252 = por %p250, %p251
    %p253 = scmp.ne.s32.totalorder %s245, %s248
    %p254 = scmp.eq.s32.totalorder %s15, 0
    %p255 = por %p253, %p254
    %p256 = scmp.ne.s32.totalorder %s245, %s248
    %p257 = scmp.eq.s32.totalorder %s20, 1
    %p258 = por %p256, %p257
    %p259 = scmp.ne.s32.totalorder %s248, %s249
    %p260 = scmp.eq.s32.totalorder %s20, 0
    %p261 = por %p259, %p260
    %p262 = scmp.ne.s32.totalorder %s248, %s249
    %p263 = scmp.eq.s32.totalorder %s21, 1
    %p264 = por %p262, %p263
    %p266 = scmp.ne.s32.totalorder %s249, %s265
    %p267 = scmp.eq.s32.totalorder %s21, 0
    %p268 = por %p266, %p267
    %s269 = ssub.s32 %s22, %s34
    %p270 = scmp.eq.s32.totalorder %s269, 0
    %s272 = sadd.s32 %s271, 1
    %s273 = scalar_select %p270, %s271, %s272
    %p276 = pneg %p270
    %p277 = scmp.eq.s32.totalorder %s15, 1
    %p278 = por %p276, %p277
    %p279 = scmp.ne.s32.totalorder %s271, %s274
    %p280 = scmp.eq.s32.totalorder %s15, 0
    %p281 = por %p279, %p280
    %p282 = scmp.ne.s32.totalorder %s271, %s274
    %p283 = scmp.eq.s32.totalorder %s20, 1
    %p284 = por %p282, %p283
    %p285 = scmp.ne.s32.totalorder %s274, %s275
    %p286 = scmp.eq.s32.totalorder %s20, 0
    %p287 = por %p285, %p286
    %p288 = scmp.ne.s32.totalorder %s274, %s275
    %p289 = scmp.eq.s32.totalorder %s21, 1
    %p290 = por %p288, %p289
    %p292 = scmp.ne.s32.totalorder %s275, %s291
    %p293 = scmp.eq.s32.totalorder %s21, 0
    %p294 = por %p292, %p293
    %p295 = scmp.le.s32.totalorder 1, %s15
    %p296 = scmp.lt.s32.totalorder %s15, 3
    %p297 = pnand %p295, %p296
    %p298 = pneg %p297
    // Predicated region
    $region9: #{_lambda_.15} parent=5 // pred_check
      _
    $region10: #{_lambda_.15} parent=5 // pred_check_branch
      %300 = sbr.rel (%p297) target = $region12
    $region11: #{_lambda_.15} parent=5 // pred_region
      %s301 = ssub.s32 %s15, 1
      // Predicated region
      $region13: #{_lambda_.15} parent=11 // pred_check
        %p302 = pneg %p53
      $region14: #{_lambda_.15} parent=11 // pred_check_branch
        %304 = sbr.rel (%p302) target = $region16
      $region15: #{_lambda_.15} parent=11 // pred_region
        %s305 = smul.u32 2, %s24
        %p306 = scmp.lt.s32.totalorder %s305, 1
        %s307 = scalar_select %p306, %s305, 1
        %s308 = smul.addr %s307, 4
        %s309 = scalar_lea.vmem %s0, %s308
        %s310 = smul.u32 2, %s24
      $region16: #{_lambda_.15} parent=11 // pred_fallthru
        _
      // Predicated region
      $region17: #{_lambda_.15} parent=11 // pred_check
        %p311 = pneg %p79
      $region18: #{_lambda_.15} parent=11 // pred_check_branch
        %313 = sbr.rel (%p311) target = $region20
      $region19: #{_lambda_.15} parent=11 // pred_region
        %s314 = smul.u32 2, %s24
        %p315 = scmp.lt.s32.totalorder %s314, 1
        %s316 = scalar_select %p315, %s314, 1
        %s317 = smul.addr %s316, 8
        %s318 = scalar_lea.vmem %s1, %s317
        %s319 = smul.u32 2, %s24
      $region20: #{_lambda_.15} parent=11 // pred_fallthru
        _
      // Predicated region
      $region21: #{_lambda_.15} parent=11 // pred_check
        %p320 = pneg %p105
      $region22: #{_lambda_.15} parent=11 // pred_check_branch
        %322 = sbr.rel (%p320) target = $region24
      $region23: #{_lambda_.15} parent=11 // pred_region
        %s323 = smul.u32 2, %s24
        %p324 = scmp.lt.s32.totalorder %s323, 1
        %s325 = scalar_select %p324, %s323, 1
        %s326 = smul.addr %s325, 8
        %s327 = scalar_lea.vmem %s2, %s326
        %s328 = smul.u32 2, %s24
      $region24: #{_lambda_.15} parent=11 // pred_fallthru
        _
    $region12: #{_lambda_.15} parent=5 // pred_fallthru
      _
    %p329 = scmp.lt.s32.totalorder %s15, 2
    // Predicated region
    $region25: #{_lambda_.15} parent=5 // pred_check
      %p330 = pneg %p329
    $region26: #{_lambda_.15} parent=5 // pred_check_branch
      %332 = sbr.rel (%p330) target = $region28
    $region27: #{_lambda_.15} parent=5 // pred_region
      // Predicated region
      $region29: #{_lambda_.15} parent=27 // pred_check
        %p333 = pneg %p125
      $region30: #{_lambda_.15} parent=27 // pred_check_branch
        %335 = sbr.rel (%p333) target = $region32
      $region31: #{_lambda_.15} parent=27 // pred_region
        %p336 = scmp.lt.s32.totalorder %s23, 1
        %s337 = scalar_select %p336, %s23, 1
        %s338 = smul.addr %s337, 4
        %s339 = smul.addr %s338, 4
        %s340 = scalar_lea.vmem %s3, %s339
      $region32: #{_lambda_.15} parent=27 // pred_fallthru
        _
      // Predicated region
      $region33: #{_lambda_.15} parent=27 // pred_check
        %p341 = pneg %p151
      $region34: #{_lambda_.15} parent=27 // pred_check_branch
        %343 = sbr.rel (%p341) target = $region36
      $region35: #{_lambda_.15} parent=27 // pred_region
        %p344 = scmp.lt.s32.totalorder %s23, 1
        %s345 = scalar_select %p344, %s23, 1
        %s346 = scalar_lea.vmem %s4, %s345
      $region36: #{_lambda_.15} parent=27 // pred_fallthru
        _
      // Predicated region
      $region37: #{_lambda_.15} parent=27 // pred_check
        %p347 = pneg %p177
      $region38: #{_lambda_.15} parent=27 // pred_check_branch
        %349 = sbr.rel (%p347) target = $region40
      $region39: #{_lambda_.15} parent=27 // pred_region
        %p350 = scmp.lt.s32.totalorder %s23, 1
        %s351 = scalar_select %p350, %s23, 1
        %s352 = smul.addr %s351, 4
        %s353 = smul.addr %s352, 4
        %s354 = scalar_lea.vmem %s5, %s353
      $region40: #{_lambda_.15} parent=27 // pred_fallthru
        _
      // Predicated region
      $region41: #{_lambda_.15} parent=27 // pred_check
        %p355 = pneg %p203
      $region42: #{_lambda_.15} parent=27 // pred_check_branch
        %357 = sbr.rel (%p355) target = $region44
      $region43: #{_lambda_.15} parent=27 // pred_region
        %p358 = scmp.lt.s32.totalorder %s23, 1
        %s359 = scalar_select %p358, %s23, 1
        %s360 = scalar_lea.vmem %s6, %s359
      $region44: #{_lambda_.15} parent=27 // pred_fallthru
        _
      // Predicated region
      $region45: #{_lambda_.15} parent=27 // pred_check
        %p361 = pneg %p229
      $region46: #{_lambda_.15} parent=27 // pred_check_branch
        %363 = sbr.rel (%p361) target = $region48
      $region47: #{_lambda_.15} parent=27 // pred_region
        %p364 = scmp.lt.s32.totalorder %s23, 1
        %s365 = scalar_select %p364, %s23, 1
        %s366 = smul.addr %s365, 8
        %s367 = smul.addr %s366, 4
        %s368 = scalar_lea.vmem %s7, %s367
      $region48: #{_lambda_.15} parent=27 // pred_fallthru
        _
      // Predicated region
      $region49: #{_lambda_.15} parent=27 // pred_check
        %p369 = pneg %p255
      $region50: #{_lambda_.15} parent=27 // pred_check_branch
        %371 = sbr.rel (%p369) target = $region52
      $region51: #{_lambda_.15} parent=27 // pred_region
        %p372 = scmp.lt.s32.totalorder %s23, 1
        %s373 = scalar_select %p372, %s23, 1
        %s374 = scalar_lea.vmem %s8, %s373
      $region52: #{_lambda_.15} parent=27 // pred_fallthru
        _
    $region28: #{_lambda_.15} parent=5 // pred_fallthru
      _
    %p375 = scmp.le.s32.totalorder 1, %s15
    %p376 = scmp.lt.s32.totalorder %s15, 3
    %p377 = pnand %p375, %p376
    %p378 = pneg %p377
    // Predicated region
    $region53: #{_lambda_.15} parent=5 // pred_check
      _
    $region54: #{_lambda_.15} parent=5 // pred_check_branch
      %380 = sbr.rel (%p377) target = $region56
    $region55: #{_lambda_.15} parent=5 // pred_region
      %s381 = ssub.s32 %s15, 1
      %s382 = smul.u32 2, %s24
      %p383 = scmp.lt.s32.totalorder %s382, 1
      %s384 = scalar_select %p383, %s382, 1
      %s385 = smul.addr %s384, 4
      %s386 = scalar_lea.vmem %s0, %s385
      %p387 = pneg %p53
      %p388 = pneg %p50
      %s389 = smul.u32 2, %s24
      %p390 = scmp.lt.s32.totalorder %s389, 1
      %s391 = scalar_select %p390, %s389, 1
      %s392 = smul.addr %s391, 8
      %s393 = scalar_lea.vmem %s1, %s392
      %p394 = pneg %p79
      %p395 = pneg %p76
      %s396 = smul.u32 2, %s24
      %p397 = scmp.lt.s32.totalorder %s396, 1
      %s398 = scalar_select %p397, %s396, 1
      %s399 = smul.addr %s398, 8
      %s400 = scalar_lea.vmem %s2, %s399
      %p401 = pneg %p105
      %p402 = pneg %p102
      %p403 = scmp.lt.s32.totalorder %s25, 1
      %s404 = scalar_select %p403, %s25, 1
      %s405 = smul.addr %s404, 4
      %s406 = smul.addr %s405, 4
      %s407 = scalar_lea.vmem %s3, %s406
      %p408 = pneg %p131
      %p409 = pneg %p128
      %p410 = scmp.lt.s32.totalorder %s25, 1
      %s411 = scalar_select %p410, %s25, 1
      %s412 = scalar_lea.vmem %s4, %s411
      %p413 = pneg %p157
      %p414 = pneg %p154
      %p415 = scmp.lt.s32.totalorder %s25, 1
      %s416 = scalar_select %p415, %s25, 1
      %s417 = smul.addr %s416, 4
      %s418 = smul.addr %s417, 4
      %s419 = scalar_lea.vmem %s5, %s418
      %p420 = pneg %p183
      %p421 = pneg %p180
      %p422 = scmp.lt.s32.totalorder %s25, 1
      %s423 = scalar_select %p422, %s25, 1
      %s424 = scalar_lea.vmem %s6, %s423
      %p425 = pneg %p209
      %p426 = pneg %p206
      %p427 = scmp.lt.s32.totalorder %s25, 1
      %s428 = scalar_select %p427, %s25, 1
      %s429 = smul.addr %s428, 8
      %s430 = smul.addr %s429, 4
      %s431 = scalar_lea.vmem %s7, %s430
      %p432 = pneg %p235
      %p433 = pneg %p232
      %p434 = scmp.lt.s32.totalorder %s25, 1
      %s435 = scalar_select %p434, %s25, 1
      %s436 = scalar_lea.vmem %s8, %s435
      %p437 = pneg %p261
      %p438 = pneg %p258
      %p439 = pneg %p287
      %p440 = pneg %p284
      %s441 = smul.u32 2, %s24
      %p442 = scmp.lt.s32.totalorder %s441, 1
      %s443 = scalar_select %p442, %s441, 1
      %s444 = smul.addr %s443, 8
      %s445 = scalar_lea.vmem %s9, %s444
      %s446 = smul.u32 2, %s24
      %p447 = scmp.lt.s32.totalorder %s446, 1
      %s448 = scalar_select %p447, %s446, 1
      %s449 = smul.addr %s448, 4
      %s450 = scalar_lea.vmem %s0, %s449
      %s451 = smul.u32 2, %s24
      %s452 = smul.u32 2, %s24
      %p453 = scmp.lt.s32.totalorder %s452, 1
      %s454 = scalar_select %p453, %s452, 1
      %s455 = smul.addr %s454, 8
      %s456 = scalar_lea.vmem %s1, %s455
      %s457 = smul.u32 2, %s24
      %s458 = smul.u32 2, %s24
      %p459 = scmp.lt.s32.totalorder %s458, 1
      %s460 = scalar_select %p459, %s458, 1
      %s461 = smul.addr %s460, 8
      %s462 = scalar_lea.vmem %s2, %s461
      %s463 = smul.u32 2, %s24
      %p464 = scmp.lt.s32.totalorder %s25, 1
      %s465 = scalar_select %p464, %s25, 1
      %s466 = smul.addr %s465, 4
      %s467 = smul.addr %s466, 4
      %s468 = scalar_lea.vmem %s3, %s467
      %p469 = scmp.lt.s32.totalorder %s25, 1
      %s470 = scalar_select %p469, %s25, 1
      %s471 = scalar_lea.vmem %s4, %s470
      %p472 = scmp.lt.s32.totalorder %s25, 1
      %s473 = scalar_select %p472, %s25, 1
      %s474 = smul.addr %s473, 4
      %s475 = smul.addr %s474, 4
      %s476 = scalar_lea.vmem %s5, %s475
      %p477 = scmp.lt.s32.totalorder %s25, 1
      %s478 = scalar_select %p477, %s25, 1
      %s479 = scalar_lea.vmem %s6, %s478
      %p480 = scmp.lt.s32.totalorder %s25, 1
      %s481 = scalar_select %p480, %s25, 1
      %s482 = smul.addr %s481, 8
      %s483 = smul.addr %s482, 4
      %s484 = scalar_lea.vmem %s7, %s483
      %p485 = scmp.lt.s32.totalorder %s25, 1
      %s486 = scalar_select %p485, %s25, 1
      %s487 = scalar_lea.vmem %s8, %s486
      %s488 = smul.u32 2, %s24
      %p489 = scmp.lt.s32.totalorder %s488, 1
      %s490 = scalar_select %p489, %s488, 1
      %s491 = smul.addr %s490, 8
      %s492 = scalar_lea.vmem %s9, %s491
      %s493 = smul.u32 2, %s24
      %p495 = scmp.eq.s32.totalorder %s25, 0
      // Predicated region
      $region57: #{_lambda_.15} parent=55 // pred_check
        %p496 = pneg %p495
      $region58: #{_lambda_.15} parent=55 // pred_check_branch
        %498 = sbr.rel (%p496) target = $region60
      $region59: #{_lambda_.15} parent=55 // pred_region
        %v499 = vld [vmem:[%s462] sm:$0xff]
        %v500 = vld [vmem:[%s462 + $0x8] sm:$0xff]
        %vm501 = vcmask 261120
        %502 = vst.msk [vmem:[#allocation2] sm:$0xff] %vm501, %v499
        %503 = vst.msk [vmem:[#allocation2 + $0x8] sm:$0xff] %vm501, %v500
      $region60: #{_lambda_.15} parent=55 // pred_fallthru
        _
      %v504 = vld [vmem:[%s450] sm:$0xf]
      %v505 = vld [vmem:[%s450 + $0x4] sm:$0xf]
      %v506 = vld [vmem:[%s468] sm:$0xf]
      %v507 = vld [vmem:[%s468 + $0x4] sm:$0xf]
      %v508 = vld [vmem:[%s468 + $0x8] sm:$0xf]
      %v509 = vld [vmem:[%s468 + $0xc] sm:$0xf]
      %v510 = vld [vmem:[%s471] sm:$0x1]
      %v512 = vlaneseq
      %v513 = vshrl.u32 %v512, 7
      %v514 = vsub.s32 0, %v513
      %v515 = vrot.slane %v510, %v514
      %v519 = vunpack.c.l.b16 %v504
      %v520 = vunpack.c.l.b16 %v505
      %v521 = vpack.c.b16 %v520, %v519
      %v526 = vunpack.c.l.b16 %v506
      %v527 = vunpack.c.l.b16 %v507
      %v528 = vunpack.c.l.b16 %v508
      %v529 = vunpack.c.l.b16 %v509
      %v530 = vpack.c.b16 %v527, %v526
      %v531 = vpack.c.b16 %v529, %v528
      %vm534 = vcmask 261120
      %v536 = vsel %vm534, %v521, 0
      %538 = vmatprep.subr.bf16.mxu0 0
      %539 = vmatpush1.bf16.msra.mxu0 0
      %540 = vmatprep.subr.bf16.mxu0 0
      %541 = vmatpush1.bf16.msra.mxu0 0
      %542 = vmatprep.subr.bf16.mxu0 0
      %543 = vmatpush1.bf16.msra.mxu0 0
      %544 = vmatprep.subr.bf16.mxu0 0
      %545 = vmatpush1.bf16.msra.mxu0 0
      %546 = vmatprep.subr.bf16.mxu0 0
      %547 = vmatpush1.bf16.msra.mxu0 0
      %548 = vmatprep.subr.bf16.mxu0 0
      %549 = vmatpush1.bf16.msra.mxu0 0
      %550 = vmatprep.subr.bf16.mxu0 0
      %551 = vmatpush1.bf16.msra.mxu0 %v531
      %552 = vmatprep.subr.bf16.mxu0 0
      %553 = vmatpush1.bf16.msra.mxu0 %v530
      %554 = vmatprep.subr.bf16.mxu0 0
      %555 = vmatpush2.bf16.msra.mxu0 0
      %556 = vmatprep.subr.bf16.mxu0 0
      %557 = vmatpush2.bf16.msra.mxu0 0
      %558 = vmatprep.subr.bf16.mxu0 0
      %559 = vmatpush2.bf16.msra.mxu0 0
      %560 = vmatprep.subr.bf16.mxu0 0
      %561 = vmatpush2.bf16.msra.mxu0 0
      %562 = vmatprep.subr.bf16.mxu0 0
      %563 = vmatpush2.bf16.msra.mxu0 0
      %564 = vmatprep.subr.bf16.mxu0 0
      %565 = vmatpush2.bf16.msra.mxu0 0
      %566 = vmatprep.subr.bf16.mxu0 0
      %567 = vmatpush2.bf16.msra.mxu0 0
      %568 = vmatprep.subr.bf16.mxu0 0
      %569 = vmatpush2.bf16.msra.mxu0 0
      %570 = vmatprep.mubr.bf16.mxu0 0
      %571 = vmatmul.mubr.bf16.gmra.mxu0 %v536
      %v572 = vpop.f32.mrf.mxu0
      %v573 = vadd.f32 %v515, %v572
      %v574 = vpop.f32.mrf.mxu0
      %v575 = vpop.f32.mrf.mxu0
      %v576 = vadd.f32 %v515, %v575
      %v577 = vpop.f32.mrf.mxu0
      %578 = vdwg.mxu0
      %v579 = vld [vmem:[%s476] sm:$0xf]
      %v580 = vld [vmem:[%s476 + $0x4] sm:$0xf]
      %v581 = vld [vmem:[%s476 + $0x8] sm:$0xf]
      %v582 = vld [vmem:[%s476 + $0xc] sm:$0xf]
      %v583 = vld [vmem:[%s479] sm:$0x1]
      %v585 = vlaneseq
      %v586 = vshrl.u32 %v585, 7
      %v587 = vsub.s32 0, %v586
      %v588 = vrot.slane %v583, %v587
      %v594 = vunpack.c.l.b16 %v579
      %v595 = vunpack.c.l.b16 %v580
      %v596 = vunpack.c.l.b16 %v581
      %v597 = vunpack.c.l.b16 %v582
      %v598 = vpack.c.b16 %v595, %v594
      %v599 = vpack.c.b16 %v597, %v596
      %602 = vmatprep.subr.bf16.mxu0 0
      %603 = vmatpush1.bf16.msra.mxu0 0
      %604 = vmatprep.subr.bf16.mxu0 0
      %605 = vmatpush1.bf16.msra.mxu0 0
      %606 = vmatprep.subr.bf16.mxu0 0
      %607 = vmatpush1.bf16.msra.mxu0 0
      %608 = vmatprep.subr.bf16.mxu0 0
      %609 = vmatpush1.bf16.msra.mxu0 0
      %610 = vmatprep.subr.bf16.mxu0 0
      %611 = vmatpush1.bf16.msra.mxu0 0
      %612 = vmatprep.subr.bf16.mxu0 0
      %613 = vmatpush1.bf16.msra.mxu0 0
      %614 = vmatprep.subr.bf16.mxu0 0
      %615 = vmatpush1.bf16.msra.mxu0 %v599
      %616 = vmatprep.subr.bf16.mxu0 0
      %617 = vmatpush1.bf16.msra.mxu0 %v598
      %618 = vmatprep.subr.bf16.mxu0 0
      %619 = vmatpush2.bf16.msra.mxu0 0
      %620 = vmatprep.subr.bf16.mxu0 0
      %621 = vmatpush2.bf16.msra.mxu0 0
      %622 = vmatprep.subr.bf16.mxu0 0
      %623 = vmatpush2.bf16.msra.mxu0 0
      %624 = vmatprep.subr.bf16.mxu0 0
      %625 = vmatpush2.bf16.msra.mxu0 0
      %626 = vmatprep.subr.bf16.mxu0 0
      %627 = vmatpush2.bf16.msra.mxu0 0
      %628 = vmatprep.subr.bf16.mxu0 0
      %629 = vmatpush2.bf16.msra.mxu0 0
      %630 = vmatprep.subr.bf16.mxu0 0
      %631 = vmatpush2.bf16.msra.mxu0 0
      %632 = vmatprep.subr.bf16.mxu0 0
      %633 = vmatpush2.bf16.msra.mxu0 0
      %634 = vmatprep.mubr.bf16.mxu0 0
      %635 = vmatmul.mubr.bf16.gmra.mxu0 %v536
      %v636 = vpop.f32.mrf.mxu0
      %v637 = vadd.f32 %v588, %v636
      %v638 = vpop.f32.mrf.mxu0
      %v639 = vpop.f32.mrf.mxu0
      %v640 = vadd.f32 %v588, %v639
      %v641 = vpop.f32.mrf.mxu0
      %642 = vdwg.mxu0
      %v643 = vmul.f32 %v637, 0.5
      %v644 = vmul.f32 %v640, 0.5
      %v645 = vmul.f32 %v637, 0.70710677
      %v646 = vmul.f32 %v640, 0.70710677
      %v647 = verf.f32.pop %v645
      %v648 = verf.f32.pop %v646
      %v649 = vadd.f32 %v647, 1.0
      %v650 = vadd.f32 %v648, 1.0
      %v651 = vmul.f32 %v643, %v649
      %v652 = vmul.f32 %v644, %v650
      %v653 = vmul.f32 %v573, %v651
      %v654 = vmul.f32 %v576, %v652
      %v655 = vpack.c.bf16 %v654, %v653
      %v656 = vld [vmem:[%s484] sm:$0xf]
      %v657 = vld [vmem:[%s484 + $0x4] sm:$0xf]
      %v658 = vld [vmem:[%s484 + $0x8] sm:$0xf]
      %v659 = vld [vmem:[%s484 + $0xc] sm:$0xf]
      %v660 = vld [vmem:[%s484 + $0x10] sm:$0xf]
      %v661 = vld [vmem:[%s484 + $0x14] sm:$0xf]
      %v662 = vld [vmem:[%s484 + $0x18] sm:$0xf]
      %v663 = vld [vmem:[%s484 + $0x1c] sm:$0xf]
      %v664 = vld [vmem:[%s487] sm:$0x1]
      %v666 = vlaneseq
      %v667 = vshrl.u32 %v666, 7
      %v668 = vsub.s32 0, %v667
      %v669 = vrot.slane %v664, %v668
      %v679 = vunpack.c.l.b16 %v656
      %v680 = vunpack.c.l.b16 %v657
      %v681 = vunpack.c.l.b16 %v658
      %v682 = vunpack.c.l.b16 %v659
      %v683 = vunpack.c.l.b16 %v660
      %v684 = vunpack.c.l.b16 %v661
      %v685 = vunpack.c.l.b16 %v662
      %v686 = vunpack.c.l.b16 %v663
      %v687 = vpack.c.b16 %v680, %v679
      %v688 = vpack.c.b16 %v682, %v681
      %v689 = vpack.c.b16 %v684, %v683
      %v690 = vpack.c.b16 %v686, %v685
      %vm695 = vcmask 523264
      %v697 = vsel %vm695, %v655, 0
      %699 = vmatprep.subr.bf16.mxu0 0
      %700 = vmatpush1.bf16.msra.mxu0 0
      %701 = vmatprep.subr.bf16.mxu0 0
      %702 = vmatpush1.bf16.msra.mxu0 0
      %703 = vmatprep.subr.bf16.mxu0 0
      %704 = vmatpush1.bf16.msra.mxu0 0
      %705 = vmatprep.subr.bf16.mxu0 0
      %706 = vmatpush1.bf16.msra.mxu0 0
      %707 = vmatprep.subr.bf16.mxu0 0
      %708 = vmatpush1.bf16.msra.mxu0 %v690
      %709 = vmatprep.subr.bf16.mxu0 0
      %710 = vmatpush1.bf16.msra.mxu0 %v689
      %711 = vmatprep.subr.bf16.mxu0 0
      %712 = vmatpush1.bf16.msra.mxu0 %v688
      %713 = vmatprep.subr.bf16.mxu0 0
      %714 = vmatpush1.bf16.msra.mxu0 %v687
      %715 = vmatprep.subr.bf16.mxu0 0
      %716 = vmatpush2.bf16.msra.mxu0 0
      %717 = vmatprep.subr.bf16.mxu0 0
      %718 = vmatpush2.bf16.msra.mxu0 0
      %719 = vmatprep.subr.bf16.mxu0 0
      %720 = vmatpush2.bf16.msra.mxu0 0
      %721 = vmatprep.subr.bf16.mxu0 0
      %722 = vmatpush2.bf16.msra.mxu0 0
      %723 = vmatprep.subr.bf16.mxu0 0
      %724 = vmatpush2.bf16.msra.mxu0 0
      %725 = vmatprep.subr.bf16.mxu0 0
      %726 = vmatpush2.bf16.msra.mxu0 0
      %727 = vmatprep.subr.bf16.mxu0 0
      %728 = vmatpush2.bf16.msra.mxu0 0
      %729 = vmatprep.subr.bf16.mxu0 0
      %730 = vmatpush2.bf16.msra.mxu0 0
      %731 = vmatprep.mubr.bf16.mxu0 0
      %732 = vmatmul.mubr.bf16.gmra.mxu0 %v697
      %v733 = vpop.f32.mrf.mxu0
      %v734 = vadd.f32 %v669, %v733
      %v735 = vpop.f32.mrf.mxu0
      %v736 = vpop.f32.mrf.mxu0
      %v737 = vadd.f32 %v669, %v736
      %v738 = vpop.f32.mrf.mxu0
      %739 = vdwg.mxu0
      %v740 = vlaneseq
      %v741 = vand.u32 %v740, 127
      %v742 = vstv %s25
      %vm743 = vcmp.eq.s32.totalorder %v741, %v742
      %v744 = vld [vmem:[%s456] sm:$0xff]
      %v745 = vld [vmem:[%s456 + $0x8] sm:$0xff]
      %v746 = vsel %vm743, 1, 0
      %vm747 = vcmp.eq.s32.totalorder %v746, 1
      %v748 = vsel %vm747, %v744, 0.0
      %v749 = vsel %vm747, %v745, 0.0
      %vm750 = vcmask 15360
      %v751 = vsel %vm750, %v748, 0.0
      %752 = vadd.xlane.f32.xlu0 %v751
      %v753 = vpop.xlane.xlu0 %752
      %v754 = vsel %vm750, %v749, 0.0
      %755 = vadd.xlane.f32.xlu0 %v754
      %v756 = vpop.xlane.xlu0 %755
      %v757 = vld [vmem:[#allocation2] sm:$0xff]
      %v758 = vld [vmem:[#allocation2 + $0x8] sm:$0xff]
      %v759 = vmul.f32 %v753, %v734
      %v760 = vmul.f32 %v756, %v737
      %v761 = vadd.f32 %v757, %v759
      %v762 = vadd.f32 %v758, %v760
      %763 = vst.msk [vmem:[#allocation2] sm:$0xff] %vm534, %v761
      %764 = vst.msk [vmem:[#allocation2 + $0x8] sm:$0xff] %vm534, %v762
      %p765 = scmp.eq.s32.totalorder %s25, 1
      // Predicated region
      $region61: #{_lambda_.15} parent=55 // pred_check
        %p766 = pneg %p765
      $region62: #{_lambda_.15} parent=55 // pred_check_branch
        %768 = sbr.rel (%p766) target = $region64
      $region63: #{_lambda_.15} parent=55 // pred_region
        %v769 = vld [vmem:[#allocation2] sm:$0xff]
        %v770 = vld [vmem:[#allocation2 + $0x8] sm:$0xff]
        %771 = vst.msk [vmem:[%s492] sm:$0xff] %vm534, %v769
        %772 = vst.msk [vmem:[%s492 + $0x8] sm:$0xff] %vm534, %v770
      $region64: #{_lambda_.15} parent=55 // pred_fallthru
        _
      %s773 = smul.u32 2, %s24
      %p774 = scmp.lt.s32.totalorder %s773, 1
      %s775 = scalar_select %p774, %s773, 1
      %s776 = smul.addr %s775, 8
      %s777 = scalar_lea.vmem %s9, %s776
      // Predicated region
      $region65: #{_lambda_.15} parent=55 // pred_check
        %p778 = pneg %p284
      $region66: #{_lambda_.15} parent=55 // pred_check_branch
        %780 = sbr.rel (%p778) target = $region68
      $region67: #{_lambda_.15} parent=55 // pred_region
        %s781 = smul.u32 2, %s24
      $region68: #{_lambda_.15} parent=55 // pred_fallthru
        _
      // Predicated region
      $region69: #{_lambda_.15} parent=55 // pred_check
        %p782 = pneg %p284
      $region70: #{_lambda_.15} parent=55 // pred_check_branch
        %784 = sbr.rel (%p782) target = $region72
      $region71: #{_lambda_.15} parent=55 // pred_region
        %s785 = smul.u32 2, %s24
        %p786 = scmp.lt.s32.totalorder %s785, 1
        %s787 = scalar_select %p786, %s785, 1
        %s788 = smul.addr %s787, 8
        %s789 = scalar_lea.vmem %s9, %s788
      $region72: #{_lambda_.15} parent=55 // pred_fallthru
        _
    $region56: #{_lambda_.15} parent=5 // pred_fallthru
      _
    %p790 = scmp.le.s32.totalorder 2, %s15
    // Predicated region
    $region73: #{_lambda_.15} parent=5 // pred_check
      %p791 = pneg %p790
    $region74: #{_lambda_.15} parent=5 // pred_check_branch
      %793 = sbr.rel (%p791) target = $region76
    $region75: #{_lambda_.15} parent=5 // pred_region
      %s794 = ssub.s32 %s15, 2
    $region76: #{_lambda_.15} parent=5 // pred_fallthru
      _
  $region6: #{_lambda_.15} parent=0 // loop_footer
    %s19 = sadd.s32 1, %s15
  $region7: #{_lambda_.15} parent=0 // loop_footer_branch
    %14 = sbr.rel target = $region3
  $region8: #{_lambda_.15} parent=0 // loop_exit
    _

// kernel: _lambda_.12
$region0: #{_lambda_.12}
  #allocation0 [shape = 'u32[]', space=smem, size = 0x4, offset = 0x4, fixed_abs, tag = 'smem constant byte address 0x4 - core index']
  #allocation1 [shape = 'u32[144,128]{1,0:T(1,128)}', space=vmem, size = 0x12000, scoped, tag = 'internal scratch']
  #allocation2 [shape = 'f32[8,8,1]{2,1,0:T(8,128)}', space=vmem, size = 0x8000, scoped, tag = 'scratch operand']
  #allocation3 [shape = 'f32[8,8,1]{2,1,0:T(8,128)}', space=vmem, size = 0x8000, scoped, tag = 'scratch operand']
  #allocation4 [shape = 'f32[8,8,8]{2,1,0:T(8,128)}', space=vmem, size = 0x8000, scoped, tag = 'scratch operand']
  %s0 = inlined_call_operand.vmem [shape: f32[8,8,8], index: 0, kind: input, shape index: {}]
  %s1 = inlined_call_operand.vmem [shape: f32[8,8,8], index: 1, kind: input, shape index: {}]
  %s2 = inlined_call_operand.vmem [shape: f32[8,8,8], index: 2, kind: input, shape index: {}]
  %s3 = inlined_call_operand.vmem [shape: f32[8,4], index: 3, kind: input, shape index: {}, may-alias: {3,5}]
  %s4 = inlined_call_operand.vmem [shape: f32[8,4], index: 4, kind: input, shape index: {}, may-alias: {4,6}]
  %s5 = inlined_call_operand.vmem [shape: f32[8,4], index: 5, kind: input, shape index: {}, may-alias: {3,5}]
  %s6 = inlined_call_operand.vmem [shape: f32[8,4], index: 6, kind: input, shape index: {}, may-alias: {4,6}]
  %s7 = inlined_call_operand.vmem [shape: f32[8,8,8], index: 7, kind: output, shape index: {}]
  %s8 = sld [smem:[#allocation0]]
  $region50: #{_lambda_.12} parent=0
    _
  %s10 = ssub.s32 1, %s8
  %s11 = scalar_select 0, %s10, %s8
  // Predicated region
  $region2: #{_lambda_.12} parent=0 // pred_check
    _
  $region3: #{_lambda_.12} parent=0 // pred_check_branch
    %13 = sbr.rel (0) target = $region5
  $region4: #{_lambda_.12} parent=0 // pred_region
    _
  $region5: #{_lambda_.12} parent=0 // pred_fallthru
    _
  // Predicated region
  $region6: #{_lambda_.12} parent=0 // pred_check
    _
  $region7: #{_lambda_.12} parent=0 // pred_check_branch
    %15 = sbr.rel (0) target = $region9
  $region8: #{_lambda_.12} parent=0 // pred_region
    _
  $region9: #{_lambda_.12} parent=0 // pred_fallthru
    _
  // Predicated region
  $region10: #{_lambda_.12} parent=0 // pred_check
    _
  $region11: #{_lambda_.12} parent=0 // pred_check_branch
    %17 = sbr.rel (0) target = $region13
  $region12: #{_lambda_.12} parent=0 // pred_region
    _
  $region13: #{_lambda_.12} parent=0 // pred_fallthru
    _
  // Predicated region
  $region14: #{_lambda_.12} parent=0 // pred_check
    _
  $region15: #{_lambda_.12} parent=0 // pred_check_branch
    %19 = sbr.rel (0) target = $region17
  $region16: #{_lambda_.12} parent=0 // pred_region
    _
  $region17: #{_lambda_.12} parent=0 // pred_fallthru
    _
  // Predicated region
  $region18: #{_lambda_.12} parent=0 // pred_check
    _
  $region19: #{_lambda_.12} parent=0 // pred_check_branch
    %21 = sbr.rel (0) target = $region21
  $region20: #{_lambda_.12} parent=0 // pred_region
    _
  $region21: #{_lambda_.12} parent=0 // pred_fallthru
    _
  // Predicated region
  $region22: #{_lambda_.12} parent=0 // pred_check
    _
  $region23: #{_lambda_.12} parent=0 // pred_check_branch
    %23 = sbr.rel (0) target = $region25
  $region24: #{_lambda_.12} parent=0 // pred_region
    _
  $region25: #{_lambda_.12} parent=0 // pred_fallthru
    _
  // Predicated region
  $region26: #{_lambda_.12} parent=0 // pred_check
    _
  $region27: #{_lambda_.12} parent=0 // pred_check_branch
    %25 = sbr.rel (0) target = $region29
  $region28: #{_lambda_.12} parent=0 // pred_region
    _
  $region29: #{_lambda_.12} parent=0 // pred_fallthru
    _
  %p27 = scmp.eq.s32.totalorder 0, 0
  // Predicated region
  $region30: #{_lambda_.12} parent=0 // pred_check
    %p28 = pneg %p27
  $region31: #{_lambda_.12} parent=0 // pred_check_branch
    %30 = sbr.rel (%p28) target = $region33
  $region32: #{_lambda_.12} parent=0 // pred_region
    %vm31 = vcmask 7168
    %32 = vst.msk [vmem:[#allocation2] sm:$0xff] %vm31, -1e+30
    %33 = vst.msk [vmem:[#allocation2 + $0x8] sm:$0xff] %vm31, -1e+30
    %34 = vst.msk [vmem:[#allocation2 + $0x10] sm:$0xff] %vm31, -1e+30
    %35 = vst.msk [vmem:[#allocation2 + $0x18] sm:$0xff] %vm31, -1e+30
    %36 = vst.msk [vmem:[#allocation2 + $0x20] sm:$0xff] %vm31, -1e+30
    %37 = vst.msk [vmem:[#allocation2 + $0x28] sm:$0xff] %vm31, -1e+30
    %38 = vst.msk [vmem:[#allocation2 + $0x30] sm:$0xff] %vm31, -1e+30
    %39 = vst.msk [vmem:[#allocation2 + $0x38] sm:$0xff] %vm31, -1e+30
    %40 = vst.msk [vmem:[#allocation3] sm:$0xff] %vm31, 0.0
    %41 = vst.msk [vmem:[#allocation3 + $0x8] sm:$0xff] %vm31, 0.0
    %42 = vst.msk [vmem:[#allocation3 + $0x10] sm:$0xff] %vm31, 0.0
    %43 = vst.msk [vmem:[#allocation3 + $0x18] sm:$0xff] %vm31, 0.0
    %44 = vst.msk [vmem:[#allocation3 + $0x20] sm:$0xff] %vm31, 0.0
    %45 = vst.msk [vmem:[#allocation3 + $0x28] sm:$0xff] %vm31, 0.0
    %46 = vst.msk [vmem:[#allocation3 + $0x30] sm:$0xff] %vm31, 0.0
    %47 = vst.msk [vmem:[#allocation3 + $0x38] sm:$0xff] %vm31, 0.0
    %vm48 = vcmask 64512
    %49 = vst.msk [vmem:[#allocation4] sm:$0xff] %vm48, 0.0
    %50 = vst.msk [vmem:[#allocation4 + $0x8] sm:$0xff] %vm48, 0.0
    %51 = vst.msk [vmem:[#allocation4 + $0x10] sm:$0xff] %vm48, 0.0
    %52 = vst.msk [vmem:[#allocation4 + $0x18] sm:$0xff] %vm48, 0.0
    %53 = vst.msk [vmem:[#allocation4 + $0x20] sm:$0xff] %vm48, 0.0
    %54 = vst.msk [vmem:[#allocation4 + $0x28] sm:$0xff] %vm48, 0.0
    %55 = vst.msk [vmem:[#allocation4 + $0x30] sm:$0xff] %vm48, 0.0
    %56 = vst.msk [vmem:[#allocation4 + $0x38] sm:$0xff] %vm48, 0.0
  $region33: #{_lambda_.12} parent=0 // pred_fallthru
    _
  %s57 = smul.u32 0, 8
  %s58 = smul.u32 0, 8
  %s59 = sadd.s32 %s57, 8
  %p60 = scmp.lt.s32.totalorder %s58, %s59
  %s61 = sadd.s32 %s58, 8
  %s62 = ssub.s32 %s57, 3
  %p63 = scmp.gt.s32.totalorder %s61, %s62
  %p64 = pnand %p60, %p63
  %p65 = pneg %p64
  // Predicated region
  $region34: #{_lambda_.12} parent=0 // pred_check
    _
  $region35: #{_lambda_.12} parent=0 // pred_check_branch
    %67 = sbr.rel (%p64) target = $region37
  $region36: #{_lambda_.12} parent=0 // pred_region
    %v68 = vld [vmem:[%s0] sm:$0xff]
    %v69 = vld [vmem:[%s0 + $0x8] sm:$0xff]
    %v70 = vld [vmem:[%s0 + $0x10] sm:$0xff]
    %v71 = vld [vmem:[%s0 + $0x18] sm:$0xff]
    %v72 = vld [vmem:[%s0 + $0x20] sm:$0xff]
    %v73 = vld [vmem:[%s0 + $0x28] sm:$0xff]
    %v74 = vld [vmem:[%s0 + $0x30] sm:$0xff]
    %v75 = vld [vmem:[%s0 + $0x38] sm:$0xff]
    %v76 = vld [vmem:[%s3] sm:$0xff]
    %v77 = vld [vmem:[%s4] sm:$0xff]
    %v78 = vmul.f32 %v68, %v76
    %v79 = vmul.f32 %v69, %v76
    %v80 = vmul.f32 %v70, %v76
    %v81 = vmul.f32 %v71, %v76
    %v82 = vmul.f32 %v72, %v76
    %v83 = vmul.f32 %v73, %v76
    %v84 = vmul.f32 %v74, %v76
    %v85 = vmul.f32 %v75, %v76
    %87 = vrot.lane.b32.xlu0 %v77, 4
    %v88 = vpop.permute.xlu0 %87
    %v90 = vmul.f32 %v68, %v88
    %v91 = vmul.f32 %v69, %v88
    %v92 = vmul.f32 %v70, %v88
    %v93 = vmul.f32 %v71, %v88
    %v94 = vmul.f32 %v72, %v88
    %v95 = vmul.f32 %v73, %v88
    %v96 = vmul.f32 %v74, %v88
    %v97 = vmul.f32 %v75, %v88
    %106 = vrot.lane.b32.xlu0 %v90, 124
    %v107 = vpop.permute.xlu0 %106
    %108 = vrot.lane.b32.xlu0 %v91, 124
    %v109 = vpop.permute.xlu0 %108
    %110 = vrot.lane.b32.xlu0 %v92, 124
    %v111 = vpop.permute.xlu0 %110
    %112 = vrot.lane.b32.xlu0 %v93, 124
    %v113 = vpop.permute.xlu0 %112
    %114 = vrot.lane.b32.xlu0 %v94, 124
    %v115 = vpop.permute.xlu0 %114
    %116 = vrot.lane.b32.xlu0 %v95, 124
    %v117 = vpop.permute.xlu0 %116
    %118 = vrot.lane.b32.xlu0 %v96, 124
    %v119 = vpop.permute.xlu0 %118
    %120 = vrot.lane.b32.xlu0 %v97, 124
    %v121 = vpop.permute.xlu0 %120
    %v130 = vsub.f32 %v78, %v107
    %v131 = vsub.f32 %v79, %v109
    %v132 = vsub.f32 %v80, %v111
    %v133 = vsub.f32 %v81, %v113
    %v134 = vsub.f32 %v82, %v115
    %v135 = vsub.f32 %v83, %v117
    %v136 = vsub.f32 %v84, %v119
    %v137 = vsub.f32 %v85, %v121
    %v138 = vmul.f32 %v68, %v77
    %v139 = vmul.f32 %v69, %v77
    %v140 = vmul.f32 %v70, %v77
    %v141 = vmul.f32 %v71, %v77
    %v142 = vmul.f32 %v72, %v77
    %v143 = vmul.f32 %v73, %v77
    %v144 = vmul.f32 %v74, %v77
    %v145 = vmul.f32 %v75, %v77
    %147 = vrot.lane.b32.xlu0 %v76, 4
    %v148 = vpop.permute.xlu0 %147
    %v150 = vmul.f32 %v68, %v148
    %v151 = vmul.f32 %v69, %v148
    %v152 = vmul.f32 %v70, %v148
    %v153 = vmul.f32 %v71, %v148
    %v154 = vmul.f32 %v72, %v148
    %v155 = vmul.f32 %v73, %v148
    %v156 = vmul.f32 %v74, %v148
    %v157 = vmul.f32 %v75, %v148
    %166 = vrot.lane.b32.xlu0 %v150, 124
    %v167 = vpop.permute.xlu0 %166
    %168 = vrot.lane.b32.xlu0 %v151, 124
    %v169 = vpop.permute.xlu0 %168
    %170 = vrot.lane.b32.xlu0 %v152, 124
    %v171 = vpop.permute.xlu0 %170
    %172 = vrot.lane.b32.xlu0 %v153, 124
    %v173 = vpop.permute.xlu0 %172
    %174 = vrot.lane.b32.xlu0 %v154, 124
    %v175 = vpop.permute.xlu0 %174
    %176 = vrot.lane.b32.xlu0 %v155, 124
    %v177 = vpop.permute.xlu0 %176
    %178 = vrot.lane.b32.xlu0 %v156, 124
    %v179 = vpop.permute.xlu0 %178
    %180 = vrot.lane.b32.xlu0 %v157, 124
    %v181 = vpop.permute.xlu0 %180
    %v190 = vadd.f32 %v138, %v167
    %v191 = vadd.f32 %v139, %v169
    %v192 = vadd.f32 %v140, %v171
    %v193 = vadd.f32 %v141, %v173
    %v194 = vadd.f32 %v142, %v175
    %v195 = vadd.f32 %v143, %v177
    %v196 = vadd.f32 %v144, %v179
    %v197 = vadd.f32 %v145, %v181
    %206 = vrot.lane.b32.xlu0 %v190, 4
    %v207 = vpop.permute.xlu0 %206
    %208 = vrot.lane.b32.xlu0 %v191, 4
    %v209 = vpop.permute.xlu0 %208
    %210 = vrot.lane.b32.xlu0 %v192, 4
    %v211 = vpop.permute.xlu0 %210
    %212 = vrot.lane.b32.xlu0 %v193, 4
    %v213 = vpop.permute.xlu0 %212
    %214 = vrot.lane.b32.xlu0 %v194, 4
    %v215 = vpop.permute.xlu0 %214
    %216 = vrot.lane.b32.xlu0 %v195, 4
    %v217 = vpop.permute.xlu0 %216
    %218 = vrot.lane.b32.xlu0 %v196, 4
    %v219 = vpop.permute.xlu0 %218
    %220 = vrot.lane.b32.xlu0 %v197, 4
    %v221 = vpop.permute.xlu0 %220
    %vm230 = vcmask 31744
    %v231 = vsel %vm230, %v130, %v207
    %v232 = vsel %vm230, %v131, %v209
    %v233 = vsel %vm230, %v132, %v211
    %v234 = vsel %vm230, %v133, %v213
    %v235 = vsel %vm230, %v134, %v215
    %v236 = vsel %vm230, %v135, %v217
    %v237 = vsel %vm230, %v136, %v219
    %v238 = vsel %vm230, %v137, %v221
    %v239 = vmul.f32 %v231, 0.35355338
    %v240 = vmul.f32 %v232, 0.35355338
    %v241 = vmul.f32 %v233, 0.35355338
    %v242 = vmul.f32 %v234, 0.35355338
    %v243 = vmul.f32 %v235, 0.35355338
    %v244 = vmul.f32 %v236, 0.35355338
    %v245 = vmul.f32 %v237, 0.35355338
    %v246 = vmul.f32 %v238, 0.35355338
    %v247 = vld [vmem:[%s1] sm:$0xff]
    %v248 = vld [vmem:[%s1 + $0x8] sm:$0xff]
    %v249 = vld [vmem:[%s1 + $0x10] sm:$0xff]
    %v250 = vld [vmem:[%s1 + $0x18] sm:$0xff]
    %v251 = vld [vmem:[%s1 + $0x20] sm:$0xff]
    %v252 = vld [vmem:[%s1 + $0x28] sm:$0xff]
    %v253 = vld [vmem:[%s1 + $0x30] sm:$0xff]
    %v254 = vld [vmem:[%s1 + $0x38] sm:$0xff]
    %v255 = vld [vmem:[%s5] sm:$0xff]
    %v256 = vld [vmem:[%s6] sm:$0xff]
    %v257 = vmul.f32 %v247, %v255
    %v258 = vmul.f32 %v248, %v255
    %v259 = vmul.f32 %v249, %v255
    %v260 = vmul.f32 %v250, %v255
    %v261 = vmul.f32 %v251, %v255
    %v262 = vmul.f32 %v252, %v255
    %v263 = vmul.f32 %v253, %v255
    %v264 = vmul.f32 %v254, %v255
    %266 = vrot.lane.b32.xlu0 %v256, 4
    %v267 = vpop.permute.xlu0 %266
    %v269 = vmul.f32 %v247, %v267
    %v270 = vmul.f32 %v248, %v267
    %v271 = vmul.f32 %v249, %v267
    %v272 = vmul.f32 %v250, %v267
    %v273 = vmul.f32 %v251, %v267
    %v274 = vmul.f32 %v252, %v267
    %v275 = vmul.f32 %v253, %v267
    %v276 = vmul.f32 %v254, %v267
    %285 = vrot.lane.b32.xlu0 %v269, 124
    %v286 = vpop.permute.xlu0 %285
    %287 = vrot.lane.b32.xlu0 %v270, 124
    %v288 = vpop.permute.xlu0 %287
    %289 = vrot.lane.b32.xlu0 %v271, 124
    %v290 = vpop.permute.xlu0 %289
    %291 = vrot.lane.b32.xlu0 %v272, 124
    %v292 = vpop.permute.xlu0 %291
    %293 = vrot.lane.b32.xlu0 %v273, 124
    %v294 = vpop.permute.xlu0 %293
    %295 = vrot.lane.b32.xlu0 %v274, 124
    %v296 = vpop.permute.xlu0 %295
    %297 = vrot.lane.b32.xlu0 %v275, 124
    %v298 = vpop.permute.xlu0 %297
    %299 = vrot.lane.b32.xlu0 %v276, 124
    %v300 = vpop.permute.xlu0 %299
    %v309 = vsub.f32 %v257, %v286
    %v310 = vsub.f32 %v258, %v288
    %v311 = vsub.f32 %v259, %v290
    %v312 = vsub.f32 %v260, %v292
    %v313 = vsub.f32 %v261, %v294
    %v314 = vsub.f32 %v262, %v296
    %v315 = vsub.f32 %v263, %v298
    %v316 = vsub.f32 %v264, %v300
    %v317 = vmul.f32 %v247, %v256
    %v318 = vmul.f32 %v248, %v256
    %v319 = vmul.f32 %v249, %v256
    %v320 = vmul.f32 %v250, %v256
    %v321 = vmul.f32 %v251, %v256
    %v322 = vmul.f32 %v252, %v256
    %v323 = vmul.f32 %v253, %v256
    %v324 = vmul.f32 %v254, %v256
    %326 = vrot.lane.b32.xlu0 %v255, 4
    %v327 = vpop.permute.xlu0 %326
    %v329 = vmul.f32 %v247, %v327
    %v330 = vmul.f32 %v248, %v327
    %v331 = vmul.f32 %v249, %v327
    %v332 = vmul.f32 %v250, %v327
    %v333 = vmul.f32 %v251, %v327
    %v334 = vmul.f32 %v252, %v327
    %v335 = vmul.f32 %v253, %v327
    %v336 = vmul.f32 %v254, %v327
    %345 = vrot.lane.b32.xlu0 %v329, 124
    %v346 = vpop.permute.xlu0 %345
    %347 = vrot.lane.b32.xlu0 %v330, 124
    %v348 = vpop.permute.xlu0 %347
    %349 = vrot.lane.b32.xlu0 %v331, 124
    %v350 = vpop.permute.xlu0 %349
    %351 = vrot.lane.b32.xlu0 %v332, 124
    %v352 = vpop.permute.xlu0 %351
    %353 = vrot.lane.b32.xlu0 %v333, 124
    %v354 = vpop.permute.xlu0 %353
    %355 = vrot.lane.b32.xlu0 %v334, 124
    %v356 = vpop.permute.xlu0 %355
    %357 = vrot.lane.b32.xlu0 %v335, 124
    %v358 = vpop.permute.xlu0 %357
    %359 = vrot.lane.b32.xlu0 %v336, 124
    %v360 = vpop.permute.xlu0 %359
    %v369 = vadd.f32 %v317, %v346
    %v370 = vadd.f32 %v318, %v348
    %v371 = vadd.f32 %v319, %v350
    %v372 = vadd.f32 %v320, %v352
    %v373 = vadd.f32 %v321, %v354
    %v374 = vadd.f32 %v322, %v356
    %v375 = vadd.f32 %v323, %v358
    %v376 = vadd.f32 %v324, %v360
    %385 = vrot.lane.b32.xlu0 %v369, 4
    %v386 = vpop.permute.xlu0 %385
    %387 = vrot.lane.b32.xlu0 %v370, 4
    %v388 = vpop.permute.xlu0 %387
    %389 = vrot.lane.b32.xlu0 %v371, 4
    %v390 = vpop.permute.xlu0 %389
    %391 = vrot.lane.b32.xlu0 %v372, 4
    %v392 = vpop.permute.xlu0 %391
    %393 = vrot.lane.b32.xlu0 %v373, 4
    %v394 = vpop.permute.xlu0 %393
    %395 = vrot.lane.b32.xlu0 %v374, 4
    %v396 = vpop.permute.xlu0 %395
    %397 = vrot.lane.b32.xlu0 %v375, 4
    %v398 = vpop.permute.xlu0 %397
    %399 = vrot.lane.b32.xlu0 %v376, 4
    %v400 = vpop.permute.xlu0 %399
    %v409 = vsel %vm230, %v309, %v386
    %v410 = vsel %vm230, %v310, %v388
    %v411 = vsel %vm230, %v311, %v390
    %v412 = vsel %vm230, %v312, %v392
    %v413 = vsel %vm230, %v313, %v394
    %v414 = vsel %vm230, %v314, %v396
    %v415 = vsel %vm230, %v315, %v398
    %v416 = vsel %vm230, %v316, %v400
    %v417 = vpack.c.bf16 %v239, %v239
    %v418 = vpack.c.bf16 %v240, %v240
    %v419 = vpack.c.bf16 %v241, %v241
    %v420 = vpack.c.bf16 %v242, %v242
    %v421 = vpack.c.bf16 %v243, %v243
    %v422 = vpack.c.bf16 %v244, %v244
    %v423 = vpack.c.bf16 %v245, %v245
    %v424 = vpack.c.bf16 %v246, %v246
    %v425 = vpack.c.bf16 %v409, %v409
    %v426 = vpack.c.bf16 %v410, %v410
    %v427 = vpack.c.bf16 %v411, %v411
    %v428 = vpack.c.bf16 %v412, %v412
    %v429 = vpack.c.bf16 %v413, %v413
    %v430 = vpack.c.bf16 %v414, %v414
    %v431 = vpack.c.bf16 %v415, %v415
    %v432 = vpack.c.bf16 %v416, %v416
    %vm433 = vcmask 64512
    %v435 = vsel %vm433, %v417, 0
    %v438 = vsel %vm433, %v425, 0
    %440 = vmatprep.subr.bf16.mxu0 0
    %441 = vmatpush1.bf16.xpose.msra.mxu0 0
    %442 = vmatprep.subr.bf16.mxu0 0
    %443 = vmatpush1.bf16.xpose.msra.mxu0 0
    %444 = vmatprep.subr.bf16.mxu0 0
    %445 = vmatpush1.bf16.xpose.msra.mxu0 0
    %446 = vmatprep.subr.bf16.mxu0 0
    %447 = vmatpush1.bf16.xpose.msra.mxu0 0
    %448 = vmatprep.subr.bf16.mxu0 0
    %449 = vmatpush1.bf16.xpose.msra.mxu0 0
    %450 = vmatprep.subr.bf16.mxu0 0
    %451 = vmatpush1.bf16.xpose.msra.mxu0 0
    %452 = vmatprep.subr.bf16.mxu0 0
    %453 = vmatpush1.bf16.xpose.msra.mxu0 0
    %454 = vmatprep.subr.bf16.mxu0 0
    %455 = vmatpush1.bf16.xpose.msra.mxu0 %v438
    %456 = vmatprep.subr.bf16.mxu0 0
    %457 = vmatpush2.bf16.xpose.msra.mxu0 0
    %458 = vmatprep.subr.bf16.mxu0 0
    %459 = vmatpush2.bf16.xpose.msra.mxu0 0
    %460 = vmatprep.subr.bf16.mxu0 0
    %461 = vmatpush2.bf16.xpose.msra.mxu0 0
    %462 = vmatprep.subr.bf16.mxu0 0
    %463 = vmatpush2.bf16.xpose.msra.mxu0 0
    %464 = vmatprep.subr.bf16.mxu0 0
    %465 = vmatpush2.bf16.xpose.msra.mxu0 0
    %466 = vmatprep.subr.bf16.mxu0 0
    %467 = vmatpush2.bf16.xpose.msra.mxu0 0
    %468 = vmatprep.subr.bf16.mxu0 0
    %469 = vmatpush2.bf16.xpose.msra.mxu0 0
    %470 = vmatprep.subr.bf16.mxu0 0
    %471 = vmatpush2.bf16.xpose.msra.mxu0 0
    %472 = vmatprep.mubr.bf16.mxu0 0
    %473 = vmatmul.mubr.bf16.gmra.mxu0 %v435
    %v474 = vpop.f32.mrf.mxu0
    %v475 = vadd.f32 0.0, %v474
    %v476 = vpop.f32.mrf.mxu0
    %v477 = vpop.f32.mrf.mxu0
    %v478 = vpop.f32.mrf.mxu0
    %479 = vdwg.mxu0
    %v481 = vsel %vm433, %v418, 0
    %v484 = vsel %vm433, %v426, 0
    %486 = vmatprep.subr.bf16.mxu0 0
    %487 = vmatpush1.bf16.xpose.msra.mxu0 0
    %488 = vmatprep.subr.bf16.mxu0 0
    %489 = vmatpush1.bf16.xpose.msra.mxu0 0
    %490 = vmatprep.subr.bf16.mxu0 0
    %491 = vmatpush1.bf16.xpose.msra.mxu0 0
    %492 = vmatprep.subr.bf16.mxu0 0
    %493 = vmatpush1.bf16.xpose.msra.mxu0 0
    %494 = vmatprep.subr.bf16.mxu0 0
    %495 = vmatpush1.bf16.xpose.msra.mxu0 0
    %496 = vmatprep.subr.bf16.mxu0 0
    %497 = vmatpush1.bf16.xpose.msra.mxu0 0
    %498 = vmatprep.subr.bf16.mxu0 0
    %499 = vmatpush1.bf16.xpose.msra.mxu0 0
    %500 = vmatprep.subr.bf16.mxu0 0
    %501 = vmatpush1.bf16.xpose.msra.mxu0 %v484
    %502 = vmatprep.subr.bf16.mxu0 0
    %503 = vmatpush2.bf16.xpose.msra.mxu0 0
    %504 = vmatprep.subr.bf16.mxu0 0
    %505 = vmatpush2.bf16.xpose.msra.mxu0 0
    %506 = vmatprep.subr.bf16.mxu0 0
    %507 = vmatpush2.bf16.xpose.msra.mxu0 0
    %508 = vmatprep.subr.bf16.mxu0 0
    %509 = vmatpush2.bf16.xpose.msra.mxu0 0
    %510 = vmatprep.subr.bf16.mxu0 0
    %511 = vmatpush2.bf16.xpose.msra.mxu0 0
    %512 = vmatprep.subr.bf16.mxu0 0
    %513 = vmatpush2.bf16.xpose.msra.mxu0 0
    %514 = vmatprep.subr.bf16.mxu0 0
    %515 = vmatpush2.bf16.xpose.msra.mxu0 0
    %516 = vmatprep.subr.bf16.mxu0 0
    %517 = vmatpush2.bf16.xpose.msra.mxu0 0
    %518 = vmatprep.mubr.bf16.mxu0 0
    %519 = vmatmul.mubr.bf16.gmra.mxu0 %v481
    %v520 = vpop.f32.mrf.mxu0
    %v521 = vadd.f32 0.0, %v520
    %v522 = vpop.f32.mrf.mxu0
    %v523 = vpop.f32.mrf.mxu0
    %v524 = vpop.f32.mrf.mxu0
    %525 = vdwg.mxu0
    %v527 = vsel %vm433, %v419, 0
    %v530 = vsel %vm433, %v427, 0
    %532 = vmatprep.subr.bf16.mxu0 0
    %533 = vmatpush1.bf16.xpose.msra.mxu0 0
    %534 = vmatprep.subr.bf16.mxu0 0
    %535 = vmatpush1.bf16.xpose.msra.mxu0 0
    %536 = vmatprep.subr.bf16.mxu0 0
    %537 = vmatpush1.bf16.xpose.msra.mxu0 0
    %538 = vmatprep.subr.bf16.mxu0 0
    %539 = vmatpush1.bf16.xpose.msra.mxu0 0
    %540 = vmatprep.subr.bf16.mxu0 0
    %541 = vmatpush1.bf16.xpose.msra.mxu0 0
    %542 = vmatprep.subr.bf16.mxu0 0
    %543 = vmatpush1.bf16.xpose.msra.mxu0 0
    %544 = vmatprep.subr.bf16.mxu0 0
    %545 = vmatpush1.bf16.xpose.msra.mxu0 0
    %546 = vmatprep.subr.bf16.mxu0 0
    %547 = vmatpush1.bf16.xpose.msra.mxu0 %v530
    %548 = vmatprep.subr.bf16.mxu0 0
    %549 = vmatpush2.bf16.xpose.msra.mxu0 0
    %550 = vmatprep.subr.bf16.mxu0 0
    %551 = vmatpush2.bf16.xpose.msra.mxu0 0
    %552 = vmatprep.subr.bf16.mxu0 0
    %553 = vmatpush2.bf16.xpose.msra.mxu0 0
    %554 = vmatprep.subr.bf16.mxu0 0
    %555 = vmatpush2.bf16.xpose.msra.mxu0 0
    %556 = vmatprep.subr.bf16.mxu0 0
    %557 = vmatpush2.bf16.xpose.msra.mxu0 0
    %558 = vmatprep.subr.bf16.mxu0 0
    %559 = vmatpush2.bf16.xpose.msra.mxu0 0
    %560 = vmatprep.subr.bf16.mxu0 0
    %561 = vmatpush2.bf16.xpose.msra.mxu0 0
    %562 = vmatprep.subr.bf16.mxu0 0
    %563 = vmatpush2.bf16.xpose.msra.mxu0 0
    %564 = vmatprep.mubr.bf16.mxu0 0
    %565 = vmatmul.mubr.bf16.gmra.mxu0 %v527
    %v566 = vpop.f32.mrf.mxu0
    %v567 = vadd.f32 0.0, %v566
    %v568 = vpop.f32.mrf.mxu0
    %v569 = vpop.f32.mrf.mxu0
    %v570 = vpop.f32.mrf.mxu0
    %571 = vdwg.mxu0
    %v573 = vsel %vm433, %v420, 0
    %v576 = vsel %vm433, %v428, 0
    %578 = vmatprep.subr.bf16.mxu0 0
    %579 = vmatpush1.bf16.xpose.msra.mxu0 0
    %580 = vmatprep.subr.bf16.mxu0 0
    %581 = vmatpush1.bf16.xpose.msra.mxu0 0
    %582 = vmatprep.subr.bf16.mxu0 0
    %583 = vmatpush1.bf16.xpose.msra.mxu0 0
    %584 = vmatprep.subr.bf16.mxu0 0
    %585 = vmatpush1.bf16.xpose.msra.mxu0 0
    %586 = vmatprep.subr.bf16.mxu0 0
    %587 = vmatpush1.bf16.xpose.msra.mxu0 0
    %588 = vmatprep.subr.bf16.mxu0 0
    %589 = vmatpush1.bf16.xpose.msra.mxu0 0
    %590 = vmatprep.subr.bf16.mxu0 0
    %591 = vmatpush1.bf16.xpose.msra.mxu0 0
    %592 = vmatprep.subr.bf16.mxu0 0
    %593 = vmatpush1.bf16.xpose.msra.mxu0 %v576
    %594 = vmatprep.subr.bf16.mxu0 0
    %595 = vmatpush2.bf16.xpose.msra.mxu0 0
    %596 = vmatprep.subr.bf16.mxu0 0
    %597 = vmatpush2.bf16.xpose.msra.mxu0 0
    %598 = vmatprep.subr.bf16.mxu0 0
    %599 = vmatpush2.bf16.xpose.msra.mxu0 0
    %600 = vmatprep.subr.bf16.mxu0 0
    %601 = vmatpush2.bf16.xpose.msra.mxu0 0
    %602 = vmatprep.subr.bf16.mxu0 0
    %603 = vmatpush2.bf16.xpose.msra.mxu0 0
    %604 = vmatprep.subr.bf16.mxu0 0
    %605 = vmatpush2.bf16.xpose.msra.mxu0 0
    %606 = vmatprep.subr.bf16.mxu0 0
    %607 = vmatpush2.bf16.xpose.msra.mxu0 0
    %608 = vmatprep.subr.bf16.mxu0 0
    %609 = vmatpush2.bf16.xpose.msra.mxu0 0
    %610 = vmatprep.mubr.bf16.mxu0 0
    %611 = vmatmul.mubr.bf16.gmra.mxu0 %v573
    %v612 = vpop.f32.mrf.mxu0
    %v613 = vadd.f32 0.0, %v612
    %v614 = vpop.f32.mrf.mxu0
    %v615 = vpop.f32.mrf.mxu0
    %v616 = vpop.f32.mrf.mxu0
    %617 = vdwg.mxu0
    %v619 = vsel %vm433, %v421, 0
    %v622 = vsel %vm433, %v429, 0
    %624 = vmatprep.subr.bf16.mxu0 0
    %625 = vmatpush1.bf16.xpose.msra.mxu0 0
    %626 = vmatprep.subr.bf16.mxu0 0
    %627 = vmatpush1.bf16.xpose.msra.mxu0 0
    %628 = vmatprep.subr.bf16.mxu0 0
    %629 = vmatpush1.bf16.xpose.msra.mxu0 0
    %630 = vmatprep.subr.bf16.mxu0 0
    %631 = vmatpush1.bf16.xpose.msra.mxu0 0
    %632 = vmatprep.subr.bf16.mxu0 0
    %633 = vmatpush1.bf16.xpose.msra.mxu0 0
    %634 = vmatprep.subr.bf16.mxu0 0
    %635 = vmatpush1.bf16.xpose.msra.mxu0 0
    %636 = vmatprep.subr.bf16.mxu0 0
    %637 = vmatpush1.bf16.xpose.msra.mxu0 0
    %638 = vmatprep.subr.bf16.mxu0 0
    %639 = vmatpush1.bf16.xpose.msra.mxu0 %v622
    %640 = vmatprep.subr.bf16.mxu0 0
    %641 = vmatpush2.bf16.xpose.msra.mxu0 0
    %642 = vmatprep.subr.bf16.mxu0 0
    %643 = vmatpush2.bf16.xpose.msra.mxu0 0
    %644 = vmatprep.subr.bf16.mxu0 0
    %645 = vmatpush2.bf16.xpose.msra.mxu0 0
    %646 = vmatprep.subr.bf16.mxu0 0
    %647 = vmatpush2.bf16.xpose.msra.mxu0 0
    %648 = vmatprep.subr.bf16.mxu0 0
    %649 = vmatpush2.bf16.xpose.msra.mxu0 0
    %650 = vmatprep.subr.bf16.mxu0 0
    %651 = vmatpush2.bf16.xpose.msra.mxu0 0
    %652 = vmatprep.subr.bf16.mxu0 0
    %653 = vmatpush2.bf16.xpose.msra.mxu0 0
    %654 = vmatprep.subr.bf16.mxu0 0
    %655 = vmatpush2.bf16.xpose.msra.mxu0 0
    %656 = vmatprep.mubr.bf16.mxu0 0
    %657 = vmatmul.mubr.bf16.gmra.mxu0 %v619
    %v658 = vpop.f32.mrf.mxu0
    %v659 = vadd.f32 0.0, %v658
    %v660 = vpop.f32.mrf.mxu0
    %v661 = vpop.f32.mrf.mxu0
    %v662 = vpop.f32.mrf.mxu0
    %663 = vdwg.mxu0
    %v665 = vsel %vm433, %v422, 0
    %v668 = vsel %vm433, %v430, 0
    %670 = vmatprep.subr.bf16.mxu0 0
    %671 = vmatpush1.bf16.xpose.msra.mxu0 0
    %672 = vmatprep.subr.bf16.mxu0 0
    %673 = vmatpush1.bf16.xpose.msra.mxu0 0
    %674 = vmatprep.subr.bf16.mxu0 0
    %675 = vmatpush1.bf16.xpose.msra.mxu0 0
    %676 = vmatprep.subr.bf16.mxu0 0
    %677 = vmatpush1.bf16.xpose.msra.mxu0 0
    %678 = vmatprep.subr.bf16.mxu0 0
    %679 = vmatpush1.bf16.xpose.msra.mxu0 0
    %680 = vmatprep.subr.bf16.mxu0 0
    %681 = vmatpush1.bf16.xpose.msra.mxu0 0
    %682 = vmatprep.subr.bf16.mxu0 0
    %683 = vmatpush1.bf16.xpose.msra.mxu0 0
    %684 = vmatprep.subr.bf16.mxu0 0
    %685 = vmatpush1.bf16.xpose.msra.mxu0 %v668
    %686 = vmatprep.subr.bf16.mxu0 0
    %687 = vmatpush2.bf16.xpose.msra.mxu0 0
    %688 = vmatprep.subr.bf16.mxu0 0
    %689 = vmatpush2.bf16.xpose.msra.mxu0 0
    %690 = vmatprep.subr.bf16.mxu0 0
    %691 = vmatpush2.bf16.xpose.msra.mxu0 0
    %692 = vmatprep.subr.bf16.mxu0 0
    %693 = vmatpush2.bf16.xpose.msra.mxu0 0
    %694 = vmatprep.subr.bf16.mxu0 0
    %695 = vmatpush2.bf16.xpose.msra.mxu0 0
    %696 = vmatprep.subr.bf16.mxu0 0
    %697 = vmatpush2.bf16.xpose.msra.mxu0 0
    %698 = vmatprep.subr.bf16.mxu0 0
    %699 = vmatpush2.bf16.xpose.msra.mxu0 0
    %700 = vmatprep.subr.bf16.mxu0 0
    %701 = vmatpush2.bf16.xpose.msra.mxu0 0
    %702 = vmatprep.mubr.bf16.mxu0 0
    %703 = vmatmul.mubr.bf16.gmra.mxu0 %v665
    %v704 = vpop.f32.mrf.mxu0
    %v705 = vadd.f32 0.0, %v704
    %v706 = vpop.f32.mrf.mxu0
    %v707 = vpop.f32.mrf.mxu0
    %v708 = vpop.f32.mrf.mxu0
    %709 = vdwg.mxu0
    %v711 = vsel %vm433, %v423, 0
    %v714 = vsel %vm433, %v431, 0
    %716 = vmatprep.subr.bf16.mxu0 0
    %717 = vmatpush1.bf16.xpose.msra.mxu0 0
    %718 = vmatprep.subr.bf16.mxu0 0
    %719 = vmatpush1.bf16.xpose.msra.mxu0 0
    %720 = vmatprep.subr.bf16.mxu0 0
    %721 = vmatpush1.bf16.xpose.msra.mxu0 0
    %722 = vmatprep.subr.bf16.mxu0 0
    %723 = vmatpush1.bf16.xpose.msra.mxu0 0
    %724 = vmatprep.subr.bf16.mxu0 0
    %725 = vmatpush1.bf16.xpose.msra.mxu0 0
    %726 = vmatprep.subr.bf16.mxu0 0
    %727 = vmatpush1.bf16.xpose.msra.mxu0 0
    %728 = vmatprep.subr.bf16.mxu0 0
    %729 = vmatpush1.bf16.xpose.msra.mxu0 0
    %730 = vmatprep.subr.bf16.mxu0 0
    %731 = vmatpush1.bf16.xpose.msra.mxu0 %v714
    %732 = vmatprep.subr.bf16.mxu0 0
    %733 = vmatpush2.bf16.xpose.msra.mxu0 0
    %734 = vmatprep.subr.bf16.mxu0 0
    %735 = vmatpush2.bf16.xpose.msra.mxu0 0
    %736 = vmatprep.subr.bf16.mxu0 0
    %737 = vmatpush2.bf16.xpose.msra.mxu0 0
    %738 = vmatprep.subr.bf16.mxu0 0
    %739 = vmatpush2.bf16.xpose.msra.mxu0 0
    %740 = vmatprep.subr.bf16.mxu0 0
    %741 = vmatpush2.bf16.xpose.msra.mxu0 0
    %742 = vmatprep.subr.bf16.mxu0 0
    %743 = vmatpush2.bf16.xpose.msra.mxu0 0
    %744 = vmatprep.subr.bf16.mxu0 0
    %745 = vmatpush2.bf16.xpose.msra.mxu0 0
    %746 = vmatprep.subr.bf16.mxu0 0
    %747 = vmatpush2.bf16.xpose.msra.mxu0 0
    %748 = vmatprep.mubr.bf16.mxu0 0
    %749 = vmatmul.mubr.bf16.gmra.mxu0 %v711
    %v750 = vpop.f32.mrf.mxu0
    %v751 = vadd.f32 0.0, %v750
    %v752 = vpop.f32.mrf.mxu0
    %v753 = vpop.f32.mrf.mxu0
    %v754 = vpop.f32.mrf.mxu0
    %755 = vdwg.mxu0
    %v757 = vsel %vm433, %v424, 0
    %v760 = vsel %vm433, %v432, 0
    %762 = vmatprep.subr.bf16.mxu0 0
    %763 = vmatpush1.bf16.xpose.msra.mxu0 0
    %764 = vmatprep.subr.bf16.mxu0 0
    %765 = vmatpush1.bf16.xpose.msra.mxu0 0
    %766 = vmatprep.subr.bf16.mxu0 0
    %767 = vmatpush1.bf16.xpose.msra.mxu0 0
    %768 = vmatprep.subr.bf16.mxu0 0
    %769 = vmatpush1.bf16.xpose.msra.mxu0 0
    %770 = vmatprep.subr.bf16.mxu0 0
    %771 = vmatpush1.bf16.xpose.msra.mxu0 0
    %772 = vmatprep.subr.bf16.mxu0 0
    %773 = vmatpush1.bf16.xpose.msra.mxu0 0
    %774 = vmatprep.subr.bf16.mxu0 0
    %775 = vmatpush1.bf16.xpose.msra.mxu0 0
    %776 = vmatprep.subr.bf16.mxu0 0
    %777 = vmatpush1.bf16.xpose.msra.mxu0 %v760
    %778 = vmatprep.subr.bf16.mxu0 0
    %779 = vmatpush2.bf16.xpose.msra.mxu0 0
    %780 = vmatprep.subr.bf16.mxu0 0
    %781 = vmatpush2.bf16.xpose.msra.mxu0 0
    %782 = vmatprep.subr.bf16.mxu0 0
    %783 = vmatpush2.bf16.xpose.msra.mxu0 0
    %784 = vmatprep.subr.bf16.mxu0 0
    %785 = vmatpush2.bf16.xpose.msra.mxu0 0
    %786 = vmatprep.subr.bf16.mxu0 0
    %787 = vmatpush2.bf16.xpose.msra.mxu0 0
    %788 = vmatprep.subr.bf16.mxu0 0
    %789 = vmatpush2.bf16.xpose.msra.mxu0 0
    %790 = vmatprep.subr.bf16.mxu0 0
    %791 = vmatpush2.bf16.xpose.msra.mxu0 0
    %792 = vmatprep.subr.bf16.mxu0 0
    %793 = vmatpush2.bf16.xpose.msra.mxu0 0
    %794 = vmatprep.mubr.bf16.mxu0 0
    %795 = vmatmul.mubr.bf16.gmra.mxu0 %v757
    %v796 = vpop.f32.mrf.mxu0
    %v797 = vadd.f32 0.0, %v796
    %v798 = vpop.f32.mrf.mxu0
    %v799 = vpop.f32.mrf.mxu0
    %v800 = vpop.f32.mrf.mxu0
    %801 = vdwg.mxu0
    %v802 = vlaneseq
    %v803 = vshrl.u32 %v802, 7
    %v804 = vstv %s57
    %v805 = vadd.s32 %v804, %v803
    %v806 = vlaneseq
    %v807 = vand.u32 %v806, 127
    %v808 = vstv %s58
    %v809 = vadd.s32 %v808, %v807
    %vm810 = vcmp.gt.s32.totalorder %v809, %v805
    %v811 = vsub.s32 %v805, %v809
    %vm812 = vcmp.ge.s32.totalorder %v811, 4
    %vm813 = vmor %vm810, %vm812
    %v814 = vsel %vm813, 1, 0
    %vm815 = vcmp.eq.s32.totalorder %v814, 1
    %v816 = vsel %vm815, -1e+30, %v475
    %v817 = vsel %vm815, -1e+30, %v521
    %v818 = vsel %vm815, -1e+30, %v567
    %v819 = vsel %vm815, -1e+30, %v613
    %v820 = vsel %vm815, -1e+30, %v659
    %v821 = vsel %vm815, -1e+30, %v705
    %v822 = vsel %vm815, -1e+30, %v751
    %v823 = vsel %vm815, -1e+30, %v797
    %v824 = vld [vmem:[#allocation2] sm:$0xff]
    %v825 = vld [vmem:[#allocation2 + $0x8] sm:$0xff]
    %v826 = vld [vmem:[#allocation2 + $0x10] sm:$0xff]
    %v827 = vld [vmem:[#allocation2 + $0x18] sm:$0xff]
    %v828 = vld [vmem:[#allocation2 + $0x20] sm:$0xff]
    %v829 = vld [vmem:[#allocation2 + $0x28] sm:$0xff]
    %v830 = vld [vmem:[#allocation2 + $0x30] sm:$0xff]
    %v831 = vld [vmem:[#allocation2 + $0x38] sm:$0xff]
    %v832 = vsel %vm433, %v816, -inf
    %833 = vmax.xlane.f32.xlu0 %v832
    %v834 = vpop.xlane.xlu0 %833
    %v835 = vsel %vm433, %v817, -inf
    %836 = vmax.xlane.f32.xlu0 %v835
    %v837 = vpop.xlane.xlu0 %836
    %v838 = vsel %vm433, %v818, -inf
    %839 = vmax.xlane.f32.xlu0 %v838
    %v840 = vpop.xlane.xlu0 %839
    %v841 = vsel %vm433, %v819, -inf
    %842 = vmax.xlane.f32.xlu0 %v841
    %v843 = vpop.xlane.xlu0 %842
    %v844 = vsel %vm433, %v820, -inf
    %845 = vmax.xlane.f32.xlu0 %v844
    %v846 = vpop.xlane.xlu0 %845
    %v847 = vsel %vm433, %v821, -inf
    %848 = vmax.xlane.f32.xlu0 %v847
    %v849 = vpop.xlane.xlu0 %848
    %v850 = vsel %vm433, %v822, -inf
    %851 = vmax.xlane.f32.xlu0 %v850
    %v852 = vpop.xlane.xlu0 %851
    %v853 = vsel %vm433, %v823, -inf
    %854 = vmax.xlane.f32.xlu0 %v853
    %v855 = vpop.xlane.xlu0 %854
    %v856 = vmax.f32 %v824, %v834
    %v857 = vmax.f32 %v825, %v837
    %v858 = vmax.f32 %v826, %v840
    %v859 = vmax.f32 %v827, %v843
    %v860 = vmax.f32 %v828, %v846
    %v861 = vmax.f32 %v829, %v849
    %v862 = vmax.f32 %v830, %v852
    %v863 = vmax.f32 %v831, %v855
    %865 = vset.pattern.permute.xlu0 0
    %866 = vperm.xlu0 %865, %v856
    %v867 = vpop.permute.xlu0 %866
    %870 = vset.pattern.permute.xlu0 0
    %871 = vperm.xlu0 %870, %v857
    %v872 = vpop.permute.xlu0 %871
    %875 = vset.pattern.permute.xlu0 0
    %876 = vperm.xlu0 %875, %v858
    %v877 = vpop.permute.xlu0 %876
    %880 = vset.pattern.permute.xlu0 0
    %881 = vperm.xlu0 %880, %v859
    %v882 = vpop.permute.xlu0 %881
    %885 = vset.pattern.permute.xlu0 0
    %886 = vperm.xlu0 %885, %v860
    %v887 = vpop.permute.xlu0 %886
    %890 = vset.pattern.permute.xlu0 0
    %891 = vperm.xlu0 %890, %v861
    %v892 = vpop.permute.xlu0 %891
    %895 = vset.pattern.permute.xlu0 0
    %896 = vperm.xlu0 %895, %v862
    %v897 = vpop.permute.xlu0 %896
    %900 = vset.pattern.permute.xlu0 0
    %901 = vperm.xlu0 %900, %v863
    %v902 = vpop.permute.xlu0 %901
    %v904 = vsub.f32 %v816, %v867
    %v905 = vsub.f32 %v817, %v872
    %v906 = vsub.f32 %v818, %v877
    %v907 = vsub.f32 %v819, %v882
    %v908 = vsub.f32 %v820, %v887
    %v909 = vsub.f32 %v821, %v892
    %v910 = vsub.f32 %v822, %v897
    %v911 = vsub.f32 %v823, %v902
    %v912 = vmul.f32 %v904, 1.442695
    %v913 = vpow.pop %v912
    %v914 = vmul.f32 %v905, 1.442695
    %v915 = vpow.pop %v914
    %v916 = vmul.f32 %v906, 1.442695
    %v917 = vpow.pop %v916
    %v918 = vmul.f32 %v907, 1.442695
    %v919 = vpow.pop %v918
    %v920 = vmul.f32 %v908, 1.442695
    %v921 = vpow.pop %v920
    %v922 = vmul.f32 %v909, 1.442695
    %v923 = vpow.pop %v922
    %v924 = vmul.f32 %v910, 1.442695
    %v925 = vpow.pop %v924
    %v926 = vmul.f32 %v911, 1.442695
    %v927 = vpow.pop %v926
    %v928 = vsel %vm815, 0.0, %v913
    %v929 = vsel %vm815, 0.0, %v915
    %v930 = vsel %vm815, 0.0, %v917
    %v931 = vsel %vm815, 0.0, %v919
    %v932 = vsel %vm815, 0.0, %v921
    %v933 = vsel %vm815, 0.0, %v923
    %v934 = vsel %vm815, 0.0, %v925
    %v935 = vsel %vm815, 0.0, %v927
    %v936 = vsub.f32 %v824, %v856
    %v937 = vsub.f32 %v825, %v857
    %v938 = vsub.f32 %v826, %v858
    %v939 = vsub.f32 %v827, %v859
    %v940 = vsub.f32 %v828, %v860
    %v941 = vsub.f32 %v829, %v861
    %v942 = vsub.f32 %v830, %v862
    %v943 = vsub.f32 %v831, %v863
    %v944 = vmul.f32 %v936, 1.442695
    %v945 = vpow.pop %v944
    %v946 = vmul.f32 %v937, 1.442695
    %v947 = vpow.pop %v946
    %v948 = vmul.f32 %v938, 1.442695
    %v949 = vpow.pop %v948
    %v950 = vmul.f32 %v939, 1.442695
    %v951 = vpow.pop %v950
    %v952 = vmul.f32 %v940, 1.442695
    %v953 = vpow.pop %v952
    %v954 = vmul.f32 %v941, 1.442695
    %v955 = vpow.pop %v954
    %v956 = vmul.f32 %v942, 1.442695
    %v957 = vpow.pop %v956
    %v958 = vmul.f32 %v943, 1.442695
    %v959 = vpow.pop %v958
    %v960 = vld [vmem:[#allocation3] sm:$0xff]
    %v961 = vld [vmem:[#allocation3 + $0x8] sm:$0xff]
    %v962 = vld [vmem:[#allocation3 + $0x10] sm:$0xff]
    %v963 = vld [vmem:[#allocation3 + $0x18] sm:$0xff]
    %v964 = vld [vmem:[#allocation3 + $0x20] sm:$0xff]
    %v965 = vld [vmem:[#allocation3 + $0x28] sm:$0xff]
    %v966 = vld [vmem:[#allocation3 + $0x30] sm:$0xff]
    %v967 = vld [vmem:[#allocation3 + $0x38] sm:$0xff]
    %v968 = vmul.f32 %v945, %v960
    %v969 = vmul.f32 %v947, %v961
    %v970 = vmul.f32 %v949, %v962
    %v971 = vmul.f32 %v951, %v963
    %v972 = vmul.f32 %v953, %v964
    %v973 = vmul.f32 %v955, %v965
    %v974 = vmul.f32 %v957, %v966
    %v975 = vmul.f32 %v959, %v967
    %v976 = vsel %vm433, %v928, 0.0
    %977 = vadd.xlane.f32.xlu0 %v976
    %v978 = vpop.xlane.xlu0 %977
    %v979 = vsel %vm433, %v929, 0.0
    %980 = vadd.xlane.f32.xlu0 %v979
    %v981 = vpop.xlane.xlu0 %980
    %v982 = vsel %vm433, %v930, 0.0
    %983 = vadd.xlane.f32.xlu0 %v982
    %v984 = vpop.xlane.xlu0 %983
    %v985 = vsel %vm433, %v931, 0.0
    %986 = vadd.xlane.f32.xlu0 %v985
    %v987 = vpop.xlane.xlu0 %986
    %v988 = vsel %vm433, %v932, 0.0
    %989 = vadd.xlane.f32.xlu0 %v988
    %v990 = vpop.xlane.xlu0 %989
    %v991 = vsel %vm433, %v933, 0.0
    %992 = vadd.xlane.f32.xlu0 %v991
    %v993 = vpop.xlane.xlu0 %992
    %v994 = vsel %vm433, %v934, 0.0
    %995 = vadd.xlane.f32.xlu0 %v994
    %v996 = vpop.xlane.xlu0 %995
    %v997 = vsel %vm433, %v935, 0.0
    %998 = vadd.xlane.f32.xlu0 %v997
    %v999 = vpop.xlane.xlu0 %998
    %v1000 = vadd.f32 %v968, %v978
    %v1001 = vadd.f32 %v969, %v981
    %v1002 = vadd.f32 %v970, %v984
    %v1003 = vadd.f32 %v971, %v987
    %v1004 = vadd.f32 %v972, %v990
    %v1005 = vadd.f32 %v973, %v993
    %v1006 = vadd.f32 %v974, %v996
    %v1007 = vadd.f32 %v975, %v999
    %vm1008 = vcmask 7168
    %1009 = vst.msk [vmem:[#allocation3] sm:$0xff] %vm1008, %v1000
    %1010 = vst.msk [vmem:[#allocation3 + $0x8] sm:$0xff] %vm1008, %v1001
    %1011 = vst.msk [vmem:[#allocation3 + $0x10] sm:$0xff] %vm1008, %v1002
    %1012 = vst.msk [vmem:[#allocation3 + $0x18] sm:$0xff] %vm1008, %v1003
    %1013 = vst.msk [vmem:[#allocation3 + $0x20] sm:$0xff] %vm1008, %v1004
    %1014 = vst.msk [vmem:[#allocation3 + $0x28] sm:$0xff] %vm1008, %v1005
    %1015 = vst.msk [vmem:[#allocation3 + $0x30] sm:$0xff] %vm1008, %v1006
    %1016 = vst.msk [vmem:[#allocation3 + $0x38] sm:$0xff] %vm1008, %v1007
    %v1017 = vld [vmem:[#allocation4] sm:$0xff]
    %v1018 = vld [vmem:[#allocation4 + $0x8] sm:$0xff]
    %v1019 = vld [vmem:[#allocation4 + $0x10] sm:$0xff]
    %v1020 = vld [vmem:[#allocation4 + $0x18] sm:$0xff]
    %v1021 = vld [vmem:[#allocation4 + $0x20] sm:$0xff]
    %v1022 = vld [vmem:[#allocation4 + $0x28] sm:$0xff]
    %v1023 = vld [vmem:[#allocation4 + $0x30] sm:$0xff]
    %v1024 = vld [vmem:[#allocation4 + $0x38] sm:$0xff]
    %1026 = vset.pattern.permute.xlu0 0
    %1027 = vperm.xlu0 %1026, %v945
    %v1028 = vpop.permute.xlu0 %1027
    %1031 = vset.pattern.permute.xlu0 0
    %1032 = vperm.xlu0 %1031, %v947
    %v1033 = vpop.permute.xlu0 %1032
    %1036 = vset.pattern.permute.xlu0 0
    %1037 = vperm.xlu0 %1036, %v949
    %v1038 = vpop.permute.xlu0 %1037
    %1041 = vset.pattern.permute.xlu0 0
    %1042 = vperm.xlu0 %1041, %v951
    %v1043 = vpop.permute.xlu0 %1042
    %1046 = vset.pattern.permute.xlu0 0
    %1047 = vperm.xlu0 %1046, %v953
    %v1048 = vpop.permute.xlu0 %1047
    %1051 = vset.pattern.permute.xlu0 0
    %1052 = vperm.xlu0 %1051, %v955
    %v1053 = vpop.permute.xlu0 %1052
    %1056 = vset.pattern.permute.xlu0 0
    %1057 = vperm.xlu0 %1056, %v957
    %v1058 = vpop.permute.xlu0 %1057
    %1061 = vset.pattern.permute.xlu0 0
    %1062 = vperm.xlu0 %1061, %v959
    %v1063 = vpop.permute.xlu0 %1062
    %v1065 = vmul.f32 %v1028, %v1017
    %v1066 = vmul.f32 %v1033, %v1018
    %v1067 = vmul.f32 %v1038, %v1019
    %v1068 = vmul.f32 %v1043, %v1020
    %v1069 = vmul.f32 %v1048, %v1021
    %v1070 = vmul.f32 %v1053, %v1022
    %v1071 = vmul.f32 %v1058, %v1023
    %v1072 = vmul.f32 %v1063, %v1024
    %v1073 = vpack.c.bf16 %v928, %v928
    %v1074 = vpack.c.bf16 %v929, %v929
    %v1075 = vpack.c.bf16 %v930, %v930
    %v1076 = vpack.c.bf16 %v931, %v931
    %v1077 = vpack.c.bf16 %v932, %v932
    %v1078 = vpack.c.bf16 %v933, %v933
    %v1079 = vpack.c.bf16 %v934, %v934
    %v1080 = vpack.c.bf16 %v935, %v935
    %v1081 = vld [vmem:[%s2] sm:$0xff]
    %v1082 = vld [vmem:[%s2 + $0x8] sm:$0xff]
    %v1083 = vld [vmem:[%s2 + $0x10] sm:$0xff]
    %v1084 = vld [vmem:[%s2 + $0x18] sm:$0xff]
    %v1085 = vld [vmem:[%s2 + $0x20] sm:$0xff]
    %v1086 = vld [vmem:[%s2 + $0x28] sm:$0xff]
    %v1087 = vld [vmem:[%s2 + $0x30] sm:$0xff]
    %v1088 = vld [vmem:[%s2 + $0x38] sm:$0xff]
    %v1089 = vpack.c.bf16 %v1081, %v1081
    %v1090 = vpack.c.bf16 %v1082, %v1082
    %v1091 = vpack.c.bf16 %v1083, %v1083
    %v1092 = vpack.c.bf16 %v1084, %v1084
    %v1093 = vpack.c.bf16 %v1085, %v1085
    %v1094 = vpack.c.bf16 %v1086, %v1086
    %v1095 = vpack.c.bf16 %v1087, %v1087
    %v1096 = vpack.c.bf16 %v1088, %v1088
    %v1098 = vsel %vm433, %v1073, 0
    %vm1100 = vcmask 1043456
    %v1102 = vsel %vm1100, %v1089, 0
    %1104 = vmatprep.subr.bf16.mxu0 0
    %1105 = vmatpush1.bf16.msra.mxu0 0
    %1106 = vmatprep.subr.bf16.mxu0 0
    %1107 = vmatpush1.bf16.msra.mxu0 0
    %1108 = vmatprep.subr.bf16.mxu0 0
    %1109 = vmatpush1.bf16.msra.mxu0 0
    %1110 = vmatprep.subr.bf16.mxu0 0
    %1111 = vmatpush1.bf16.msra.mxu0 0
    %1112 = vmatprep.subr.bf16.mxu0 0
    %1113 = vmatpush1.bf16.msra.mxu0 0
    %1114 = vmatprep.subr.bf16.mxu0 0
    %1115 = vmatpush1.bf16.msra.mxu0 0
    %1116 = vmatprep.subr.bf16.mxu0 0
    %1117 = vmatpush1.bf16.msra.mxu0 0
    %1118 = vmatprep.subr.bf16.mxu0 0
    %1119 = vmatpush1.bf16.msra.mxu0 %v1102
    %1120 = vmatprep.subr.bf16.mxu0 0
    %1121 = vmatpush2.bf16.msra.mxu0 0
    %1122 = vmatprep.subr.bf16.mxu0 0
    %1123 = vmatpush2.bf16.msra.mxu0 0
    %1124 = vmatprep.subr.bf16.mxu0 0
    %1125 = vmatpush2.bf16.msra.mxu0 0
    %1126 = vmatprep.subr.bf16.mxu0 0
    %1127 = vmatpush2.bf16.msra.mxu0 0
    %1128 = vmatprep.subr.bf16.mxu0 0
    %1129 = vmatpush2.bf16.msra.mxu0 0
    %1130 = vmatprep.subr.bf16.mxu0 0
    %1131 = vmatpush2.bf16.msra.mxu0 0
    %1132 = vmatprep.subr.bf16.mxu0 0
    %1133 = vmatpush2.bf16.msra.mxu0 0
    %1134 = vmatprep.subr.bf16.mxu0 0
    %1135 = vmatpush2.bf16.msra.mxu0 0
    %1136 = vmatprep.mubr.bf16.mxu0 0
    %1137 = vmatmul.mubr.bf16.gmra.mxu0 %v1098
    %v1138 = vpop.f32.mrf.mxu0
    %v1139 = vadd.f32 0.0, %v1138
    %v1140 = vpop.f32.mrf.mxu0
    %v1141 = vpop.f32.mrf.mxu0
    %v1142 = vpop.f32.mrf.mxu0
    %1143 = vdwg.mxu0
    %v1145 = vsel %vm433, %v1074, 0
    %v1148 = vsel %vm1100, %v1090, 0
    %1150 = vmatprep.subr.bf16.mxu0 0
    %1151 = vmatpush1.bf16.msra.mxu0 0
    %1152 = vmatprep.subr.bf16.mxu0 0
    %1153 = vmatpush1.bf16.msra.mxu0 0
    %1154 = vmatprep.subr.bf16.mxu0 0
    %1155 = vmatpush1.bf16.msra.mxu0 0
    %1156 = vmatprep.subr.bf16.mxu0 0
    %1157 = vmatpush1.bf16.msra.mxu0 0
    %1158 = vmatprep.subr.bf16.mxu0 0
    %1159 = vmatpush1.bf16.msra.mxu0 0
    %1160 = vmatprep.subr.bf16.mxu0 0
    %1161 = vmatpush1.bf16.msra.mxu0 0
    %1162 = vmatprep.subr.bf16.mxu0 0
    %1163 = vmatpush1.bf16.msra.mxu0 0
    %1164 = vmatprep.subr.bf16.mxu0 0
    %1165 = vmatpush1.bf16.msra.mxu0 %v1148
    %1166 = vmatprep.subr.bf16.mxu0 0
    %1167 = vmatpush2.bf16.msra.mxu0 0
    %1168 = vmatprep.subr.bf16.mxu0 0
    %1169 = vmatpush2.bf16.msra.mxu0 0
    %1170 = vmatprep.subr.bf16.mxu0 0
    %1171 = vmatpush2.bf16.msra.mxu0 0
    %1172 = vmatprep.subr.bf16.mxu0 0
    %1173 = vmatpush2.bf16.msra.mxu0 0
    %1174 = vmatprep.subr.bf16.mxu0 0
    %1175 = vmatpush2.bf16.msra.mxu0 0
    %1176 = vmatprep.subr.bf16.mxu0 0
    %1177 = vmatpush2.bf16.msra.mxu0 0
    %1178 = vmatprep.subr.bf16.mxu0 0
    %1179 = vmatpush2.bf16.msra.mxu0 0
    %1180 = vmatprep.subr.bf16.mxu0 0
    %1181 = vmatpush2.bf16.msra.mxu0 0
    %1182 = vmatprep.mubr.bf16.mxu0 0
    %1183 = vmatmul.mubr.bf16.gmra.mxu0 %v1145
    %v1184 = vpop.f32.mrf.mxu0
    %v1185 = vadd.f32 0.0, %v1184
    %v1186 = vpop.f32.mrf.mxu0
    %v1187 = vpop.f32.mrf.mxu0
    %v1188 = vpop.f32.mrf.mxu0
    %1189 = vdwg.mxu0
    %v1191 = vsel %vm433, %v1075, 0
    %v1194 = vsel %vm1100, %v1091, 0
    %1196 = vmatprep.subr.bf16.mxu0 0
    %1197 = vmatpush1.bf16.msra.mxu0 0
    %1198 = vmatprep.subr.bf16.mxu0 0
    %1199 = vmatpush1.bf16.msra.mxu0 0
    %1200 = vmatprep.subr.bf16.mxu0 0
    %1201 = vmatpush1.bf16.msra.mxu0 0
    %1202 = vmatprep.subr.bf16.mxu0 0
    %1203 = vmatpush1.bf16.msra.mxu0 0
    %1204 = vmatprep.subr.bf16.mxu0 0
    %1205 = vmatpush1.bf16.msra.mxu0 0
    %1206 = vmatprep.subr.bf16.mxu0 0
    %1207 = vmatpush1.bf16.msra.mxu0 0
    %1208 = vmatprep.subr.bf16.mxu0 0
    %1209 = vmatpush1.bf16.msra.mxu0 0
    %1210 = vmatprep.subr.bf16.mxu0 0
    %1211 = vmatpush1.bf16.msra.mxu0 %v1194
    %1212 = vmatprep.subr.bf16.mxu0 0
    %1213 = vmatpush2.bf16.msra.mxu0 0
    %1214 = vmatprep.subr.bf16.mxu0 0
    %1215 = vmatpush2.bf16.msra.mxu0 0
    %1216 = vmatprep.subr.bf16.mxu0 0
    %1217 = vmatpush2.bf16.msra.mxu0 0
    %1218 = vmatprep.subr.bf16.mxu0 0
    %1219 = vmatpush2.bf16.msra.mxu0 0
    %1220 = vmatprep.subr.bf16.mxu0 0
    %1221 = vmatpush2.bf16.msra.mxu0 0
    %1222 = vmatprep.subr.bf16.mxu0 0
    %1223 = vmatpush2.bf16.msra.mxu0 0
    %1224 = vmatprep.subr.bf16.mxu0 0
    %1225 = vmatpush2.bf16.msra.mxu0 0
    %1226 = vmatprep.subr.bf16.mxu0 0
    %1227 = vmatpush2.bf16.msra.mxu0 0
    %1228 = vmatprep.mubr.bf16.mxu0 0
    %1229 = vmatmul.mubr.bf16.gmra.mxu0 %v1191
    %v1230 = vpop.f32.mrf.mxu0
    %v1231 = vadd.f32 0.0, %v1230
    %v1232 = vpop.f32.mrf.mxu0
    %v1233 = vpop.f32.mrf.mxu0
    %v1234 = vpop.f32.mrf.mxu0
    %1235 = vdwg.mxu0
    %v1237 = vsel %vm433, %v1076, 0
    %v1240 = vsel %vm1100, %v1092, 0
    %1242 = vmatprep.subr.bf16.mxu0 0
    %1243 = vmatpush1.bf16.msra.mxu0 0
    %1244 = vmatprep.subr.bf16.mxu0 0
    %1245 = vmatpush1.bf16.msra.mxu0 0
    %1246 = vmatprep.subr.bf16.mxu0 0
    %1247 = vmatpush1.bf16.msra.mxu0 0
    %1248 = vmatprep.subr.bf16.mxu0 0
    %1249 = vmatpush1.bf16.msra.mxu0 0
    %1250 = vmatprep.subr.bf16.mxu0 0
    %1251 = vmatpush1.bf16.msra.mxu0 0
    %1252 = vmatprep.subr.bf16.mxu0 0
    %1253 = vmatpush1.bf16.msra.mxu0 0
    %1254 = vmatprep.subr.bf16.mxu0 0
    %1255 = vmatpush1.bf16.msra.mxu0 0
    %1256 = vmatprep.subr.bf16.mxu0 0
    %1257 = vmatpush1.bf16.msra.mxu0 %v1240
    %1258 = vmatprep.subr.bf16.mxu0 0
    %1259 = vmatpush2.bf16.msra.mxu0 0
    %1260 = vmatprep.subr.bf16.mxu0 0
    %1261 = vmatpush2.bf16.msra.mxu0 0
    %1262 = vmatprep.subr.bf16.mxu0 0
    %1263 = vmatpush2.bf16.msra.mxu0 0
    %1264 = vmatprep.subr.bf16.mxu0 0
    %1265 = vmatpush2.bf16.msra.mxu0 0
    %1266 = vmatprep.subr.bf16.mxu0 0
    %1267 = vmatpush2.bf16.msra.mxu0 0
    %1268 = vmatprep.subr.bf16.mxu0 0
    %1269 = vmatpush2.bf16.msra.mxu0 0
    %1270 = vmatprep.subr.bf16.mxu0 0
    %1271 = vmatpush2.bf16.msra.mxu0 0
    %1272 = vmatprep.subr.bf16.mxu0 0
    %1273 = vmatpush2.bf16.msra.mxu0 0
    %1274 = vmatprep.mubr.bf16.mxu0 0
    %1275 = vmatmul.mubr.bf16.gmra.mxu0 %v1237
    %v1276 = vpop.f32.mrf.mxu0
    %v1277 = vadd.f32 0.0, %v1276
    %v1278 = vpop.f32.mrf.mxu0
    %v1279 = vpop.f32.mrf.mxu0
    %v1280 = vpop.f32.mrf.mxu0
    %1281 = vdwg.mxu0
    %v1283 = vsel %vm433, %v1077, 0
    %v1286 = vsel %vm1100, %v1093, 0
    %1288 = vmatprep.subr.bf16.mxu0 0
    %1289 = vmatpush1.bf16.msra.mxu0 0
    %1290 = vmatprep.subr.bf16.mxu0 0
    %1291 = vmatpush1.bf16.msra.mxu0 0
    %1292 = vmatprep.subr.bf16.mxu0 0
    %1293 = vmatpush1.bf16.msra.mxu0 0
    %1294 = vmatprep.subr.bf16.mxu0 0
    %1295 = vmatpush1.bf16.msra.mxu0 0
    %1296 = vmatprep.subr.bf16.mxu0 0
    %1297 = vmatpush1.bf16.msra.mxu0 0
    %1298 = vmatprep.subr.bf16.mxu0 0
    %1299 = vmatpush1.bf16.msra.mxu0 0
    %1300 = vmatprep.subr.bf16.mxu0 0
    %1301 = vmatpush1.bf16.msra.mxu0 0
    %1302 = vmatprep.subr.bf16.mxu0 0
    %1303 = vmatpush1.bf16.msra.mxu0 %v1286
    %1304 = vmatprep.subr.bf16.mxu0 0
    %1305 = vmatpush2.bf16.msra.mxu0 0
    %1306 = vmatprep.subr.bf16.mxu0 0
    %1307 = vmatpush2.bf16.msra.mxu0 0
    %1308 = vmatprep.subr.bf16.mxu0 0
    %1309 = vmatpush2.bf16.msra.mxu0 0
    %1310 = vmatprep.subr.bf16.mxu0 0
    %1311 = vmatpush2.bf16.msra.mxu0 0
    %1312 = vmatprep.subr.bf16.mxu0 0
    %1313 = vmatpush2.bf16.msra.mxu0 0
    %1314 = vmatprep.subr.bf16.mxu0 0
    %1315 = vmatpush2.bf16.msra.mxu0 0
    %1316 = vmatprep.subr.bf16.mxu0 0
    %1317 = vmatpush2.bf16.msra.mxu0 0
    %1318 = vmatprep.subr.bf16.mxu0 0
    %1319 = vmatpush2.bf16.msra.mxu0 0
    %1320 = vmatprep.mubr.bf16.mxu0 0
    %1321 = vmatmul.mubr.bf16.gmra.mxu0 %v1283
    %v1322 = vpop.f32.mrf.mxu0
    %v1323 = vadd.f32 0.0, %v1322
    %v1324 = vpop.f32.mrf.mxu0
    %v1325 = vpop.f32.mrf.mxu0
    %v1326 = vpop.f32.mrf.mxu0
    %1327 = vdwg.mxu0
    %v1329 = vsel %vm433, %v1078, 0
    %v1332 = vsel %vm1100, %v1094, 0
    %1334 = vmatprep.subr.bf16.mxu0 0
    %1335 = vmatpush1.bf16.msra.mxu0 0
    %1336 = vmatprep.subr.bf16.mxu0 0
    %1337 = vmatpush1.bf16.msra.mxu0 0
    %1338 = vmatprep.subr.bf16.mxu0 0
    %1339 = vmatpush1.bf16.msra.mxu0 0
    %1340 = vmatprep.subr.bf16.mxu0 0
    %1341 = vmatpush1.bf16.msra.mxu0 0
    %1342 = vmatprep.subr.bf16.mxu0 0
    %1343 = vmatpush1.bf16.msra.mxu0 0
    %1344 = vmatprep.subr.bf16.mxu0 0
    %1345 = vmatpush1.bf16.msra.mxu0 0
    %1346 = vmatprep.subr.bf16.mxu0 0
    %1347 = vmatpush1.bf16.msra.mxu0 0
    %1348 = vmatprep.subr.bf16.mxu0 0
    %1349 = vmatpush1.bf16.msra.mxu0 %v1332
    %1350 = vmatprep.subr.bf16.mxu0 0
    %1351 = vmatpush2.bf16.msra.mxu0 0
    %1352 = vmatprep.subr.bf16.mxu0 0
    %1353 = vmatpush2.bf16.msra.mxu0 0
    %1354 = vmatprep.subr.bf16.mxu0 0
    %1355 = vmatpush2.bf16.msra.mxu0 0
    %1356 = vmatprep.subr.bf16.mxu0 0
    %1357 = vmatpush2.bf16.msra.mxu0 0
    %1358 = vmatprep.subr.bf16.mxu0 0
    %1359 = vmatpush2.bf16.msra.mxu0 0
    %1360 = vmatprep.subr.bf16.mxu0 0
    %1361 = vmatpush2.bf16.msra.mxu0 0
    %1362 = vmatprep.subr.bf16.mxu0 0
    %1363 = vmatpush2.bf16.msra.mxu0 0
    %1364 = vmatprep.subr.bf16.mxu0 0
    %1365 = vmatpush2.bf16.msra.mxu0 0
    %1366 = vmatprep.mubr.bf16.mxu0 0
    %1367 = vmatmul.mubr.bf16.gmra.mxu0 %v1329
    %v1368 = vpop.f32.mrf.mxu0
    %v1369 = vadd.f32 0.0, %v1368
    %v1370 = vpop.f32.mrf.mxu0
    %v1371 = vpop.f32.mrf.mxu0
    %v1372 = vpop.f32.mrf.mxu0
    %1373 = vdwg.mxu0
    %v1375 = vsel %vm433, %v1079, 0
    %v1378 = vsel %vm1100, %v1095, 0
    %1380 = vmatprep.subr.bf16.mxu0 0
    %1381 = vmatpush1.bf16.msra.mxu0 0
    %1382 = vmatprep.subr.bf16.mxu0 0
    %1383 = vmatpush1.bf16.msra.mxu0 0
    %1384 = vmatprep.subr.bf16.mxu0 0
    %1385 = vmatpush1.bf16.msra.mxu0 0
    %1386 = vmatprep.subr.bf16.mxu0 0
    %1387 = vmatpush1.bf16.msra.mxu0 0
    %1388 = vmatprep.subr.bf16.mxu0 0
    %1389 = vmatpush1.bf16.msra.mxu0 0
    %1390 = vmatprep.subr.bf16.mxu0 0
    %1391 = vmatpush1.bf16.msra.mxu0 0
    %1392 = vmatprep.subr.bf16.mxu0 0
    %1393 = vmatpush1.bf16.msra.mxu0 0
    %1394 = vmatprep.subr.bf16.mxu0 0
    %1395 = vmatpush1.bf16.msra.mxu0 %v1378
    %1396 = vmatprep.subr.bf16.mxu0 0
    %1397 = vmatpush2.bf16.msra.mxu0 0
    %1398 = vmatprep.subr.bf16.mxu0 0
    %1399 = vmatpush2.bf16.msra.mxu0 0
    %1400 = vmatprep.subr.bf16.mxu0 0
    %1401 = vmatpush2.bf16.msra.mxu0 0
    %1402 = vmatprep.subr.bf16.mxu0 0
    %1403 = vmatpush2.bf16.msra.mxu0 0
    %1404 = vmatprep.subr.bf16.mxu0 0
    %1405 = vmatpush2.bf16.msra.mxu0 0
    %1406 = vmatprep.subr.bf16.mxu0 0
    %1407 = vmatpush2.bf16.msra.mxu0 0
    %1408 = vmatprep.subr.bf16.mxu0 0
    %1409 = vmatpush2.bf16.msra.mxu0 0
    %1410 = vmatprep.subr.bf16.mxu0 0
    %1411 = vmatpush2.bf16.msra.mxu0 0
    %1412 = vmatprep.mubr.bf16.mxu0 0
    %1413 = vmatmul.mubr.bf16.gmra.mxu0 %v1375
    %v1414 = vpop.f32.mrf.mxu0
    %v1415 = vadd.f32 0.0, %v1414
    %v1416 = vpop.f32.mrf.mxu0
    %v1417 = vpop.f32.mrf.mxu0
    %v1418 = vpop.f32.mrf.mxu0
    %1419 = vdwg.mxu0
    %v1421 = vsel %vm433, %v1080, 0
    %v1424 = vsel %vm1100, %v1096, 0
    %1426 = vmatprep.subr.bf16.mxu0 0
    %1427 = vmatpush1.bf16.msra.mxu0 0
    %1428 = vmatprep.subr.bf16.mxu0 0
    %1429 = vmatpush1.bf16.msra.mxu0 0
    %1430 = vmatprep.subr.bf16.mxu0 0
    %1431 = vmatpush1.bf16.msra.mxu0 0
    %1432 = vmatprep.subr.bf16.mxu0 0
    %1433 = vmatpush1.bf16.msra.mxu0 0
    %1434 = vmatprep.subr.bf16.mxu0 0
    %1435 = vmatpush1.bf16.msra.mxu0 0
    %1436 = vmatprep.subr.bf16.mxu0 0
    %1437 = vmatpush1.bf16.msra.mxu0 0
    %1438 = vmatprep.subr.bf16.mxu0 0
    %1439 = vmatpush1.bf16.msra.mxu0 0
    %1440 = vmatprep.subr.bf16.mxu0 0
    %1441 = vmatpush1.bf16.msra.mxu0 %v1424
    %1442 = vmatprep.subr.bf16.mxu0 0
    %1443 = vmatpush2.bf16.msra.mxu0 0
    %1444 = vmatprep.subr.bf16.mxu0 0
    %1445 = vmatpush2.bf16.msra.mxu0 0
    %1446 = vmatprep.subr.bf16.mxu0 0
    %1447 = vmatpush2.bf16.msra.mxu0 0
    %1448 = vmatprep.subr.bf16.mxu0 0
    %1449 = vmatpush2.bf16.msra.mxu0 0
    %1450 = vmatprep.subr.bf16.mxu0 0
    %1451 = vmatpush2.bf16.msra.mxu0 0
    %1452 = vmatprep.subr.bf16.mxu0 0
    %1453 = vmatpush2.bf16.msra.mxu0 0
    %1454 = vmatprep.subr.bf16.mxu0 0
    %1455 = vmatpush2.bf16.msra.mxu0 0
    %1456 = vmatprep.subr.bf16.mxu0 0
    %1457 = vmatpush2.bf16.msra.mxu0 0
    %1458 = vmatprep.mubr.bf16.mxu0 0
    %1459 = vmatmul.mubr.bf16.gmra.mxu0 %v1421
    %v1460 = vpop.f32.mrf.mxu0
    %v1461 = vadd.f32 0.0, %v1460
    %v1462 = vpop.f32.mrf.mxu0
    %v1463 = vpop.f32.mrf.mxu0
    %v1464 = vpop.f32.mrf.mxu0
    %1465 = vdwg.mxu0
    %v1466 = vadd.f32 %v1065, %v1139
    %v1467 = vadd.f32 %v1066, %v1185
    %v1468 = vadd.f32 %v1067, %v1231
    %v1469 = vadd.f32 %v1068, %v1277
    %v1470 = vadd.f32 %v1069, %v1323
    %v1471 = vadd.f32 %v1070, %v1369
    %v1472 = vadd.f32 %v1071, %v1415
    %v1473 = vadd.f32 %v1072, %v1461
    %1474 = vst.msk [vmem:[#allocation4] sm:$0xff] %vm433, %v1466
    %1475 = vst.msk [vmem:[#allocation4 + $0x8] sm:$0xff] %vm433, %v1467
    %1476 = vst.msk [vmem:[#allocation4 + $0x10] sm:$0xff] %vm433, %v1468
    %1477 = vst.msk [vmem:[#allocation4 + $0x18] sm:$0xff] %vm433, %v1469
    %1478 = vst.msk [vmem:[#allocation4 + $0x20] sm:$0xff] %vm433, %v1470
    %1479 = vst.msk [vmem:[#allocation4 + $0x28] sm:$0xff] %vm433, %v1471
    %1480 = vst.msk [vmem:[#allocation4 + $0x30] sm:$0xff] %vm433, %v1472
    %1481 = vst.msk [vmem:[#allocation4 + $0x38] sm:$0xff] %vm433, %v1473
    %1482 = vst.msk [vmem:[#allocation2] sm:$0xff] %vm1008, %v856
    %1483 = vst.msk [vmem:[#allocation2 + $0x8] sm:$0xff] %vm1008, %v857
    %1484 = vst.msk [vmem:[#allocation2 + $0x10] sm:$0xff] %vm1008, %v858
    %1485 = vst.msk [vmem:[#allocation2 + $0x18] sm:$0xff] %vm1008, %v859
    %1486 = vst.msk [vmem:[#allocation2 + $0x20] sm:$0xff] %vm1008, %v860
    %1487 = vst.msk [vmem:[#allocation2 + $0x28] sm:$0xff] %vm1008, %v861
    %1488 = vst.msk [vmem:[#allocation2 + $0x30] sm:$0xff] %vm1008, %v862
    %1489 = vst.msk [vmem:[#allocation2 + $0x38] sm:$0xff] %vm1008, %v863
  $region37: #{_lambda_.12} parent=0 // pred_fallthru
    _
  // Predicated region
  $region38: #{_lambda_.12} parent=0 // pred_check
    %p1490 = pneg %p27
  $region39: #{_lambda_.12} parent=0 // pred_check_branch
    %1492 = sbr.rel (%p1490) target = $region41
  $region40: #{_lambda_.12} parent=0 // pred_region
    %v1493 = vld [vmem:[#allocation4] sm:$0xff]
    %v1494 = vld [vmem:[#allocation4 + $0x8] sm:$0xff]
    %v1495 = vld [vmem:[#allocation4 + $0x10] sm:$0xff]
    %v1496 = vld [vmem:[#allocation4 + $0x18] sm:$0xff]
    %v1497 = vld [vmem:[#allocation4 + $0x20] sm:$0xff]
    %v1498 = vld [vmem:[#allocation4 + $0x28] sm:$0xff]
    %v1499 = vld [vmem:[#allocation4 + $0x30] sm:$0xff]
    %v1500 = vld [vmem:[#allocation4 + $0x38] sm:$0xff]
    %v1501 = vld [vmem:[#allocation3] sm:$0xff]
    %v1502 = vld [vmem:[#allocation3 + $0x8] sm:$0xff]
    %v1503 = vld [vmem:[#allocation3 + $0x10] sm:$0xff]
    %v1504 = vld [vmem:[#allocation3 + $0x18] sm:$0xff]
    %v1505 = vld [vmem:[#allocation3 + $0x20] sm:$0xff]
    %v1506 = vld [vmem:[#allocation3 + $0x28] sm:$0xff]
    %v1507 = vld [vmem:[#allocation3 + $0x30] sm:$0xff]
    %v1508 = vld [vmem:[#allocation3 + $0x38] sm:$0xff]
    %v1509 = vrcp.pop %v1501
    %v1510 = vrcp.pop %v1502
    %v1511 = vrcp.pop %v1503
    %v1512 = vrcp.pop %v1504
    %v1513 = vrcp.pop %v1505
    %v1514 = vrcp.pop %v1506
    %v1515 = vrcp.pop %v1507
    %v1516 = vrcp.pop %v1508
    %1518 = vset.pattern.permute.xlu0 0
    %1519 = vperm.xlu0 %1518, %v1509
    %v1520 = vpop.permute.xlu0 %1519
    %1523 = vset.pattern.permute.xlu0 0
    %1524 = vperm.xlu0 %1523, %v1510
    %v1525 = vpop.permute.xlu0 %1524
    %1528 = vset.pattern.permute.xlu0 0
    %1529 = vperm.xlu0 %1528, %v1511
    %v1530 = vpop.permute.xlu0 %1529
    %1533 = vset.pattern.permute.xlu0 0
    %1534 = vperm.xlu0 %1533, %v1512
    %v1535 = vpop.permute.xlu0 %1534
    %1538 = vset.pattern.permute.xlu0 0
    %1539 = vperm.xlu0 %1538, %v1513
    %v1540 = vpop.permute.xlu0 %1539
    %1543 = vset.pattern.permute.xlu0 0
    %1544 = vperm.xlu0 %1543, %v1514
    %v1545 = vpop.permute.xlu0 %1544
    %1548 = vset.pattern.permute.xlu0 0
    %1549 = vperm.xlu0 %1548, %v1515
    %v1550 = vpop.permute.xlu0 %1549
    %1553 = vset.pattern.permute.xlu0 0
    %1554 = vperm.xlu0 %1553, %v1516
    %v1555 = vpop.permute.xlu0 %1554
    %v1557 = vmul.f32 %v1493, %v1520
    %v1558 = vmul.f32 %v1494, %v1525
    %v1559 = vmul.f32 %v1495, %v1530
    %v1560 = vmul.f32 %v1496, %v1535
    %v1561 = vmul.f32 %v1497, %v1540
    %v1562 = vmul.f32 %v1498, %v1545
    %v1563 = vmul.f32 %v1499, %v1550
    %v1564 = vmul.f32 %v1500, %v1555
    %vm1565 = vcmask 64512
    %1566 = vst.msk [vmem:[%s7] sm:$0xff] %vm1565, %v1557
    %1567 = vst.msk [vmem:[%s7 + $0x8] sm:$0xff] %vm1565, %v1558
    %1568 = vst.msk [vmem:[%s7 + $0x10] sm:$0xff] %vm1565, %v1559
    %1569 = vst.msk [vmem:[%s7 + $0x18] sm:$0xff] %vm1565, %v1560
    %1570 = vst.msk [vmem:[%s7 + $0x20] sm:$0xff] %vm1565, %v1561
    %1571 = vst.msk [vmem:[%s7 + $0x28] sm:$0xff] %vm1565, %v1562
    %1572 = vst.msk [vmem:[%s7 + $0x30] sm:$0xff] %vm1565, %v1563
    %1573 = vst.msk [vmem:[%s7 + $0x38] sm:$0xff] %vm1565, %v1564
  $region41: #{_lambda_.12} parent=0 // pred_fallthru
    _
  // Predicated region
  $region42: #{_lambda_.12} parent=0 // pred_check
    _
  $region43: #{_lambda_.12} parent=0 // pred_check_branch
    %1575 = sbr.rel (0) target = $region45
  $region44: #{_lambda_.12} parent=0 // pred_region
    _
  $region45: #{_lambda_.12} parent=0 // pred_fallthru
    _
  // Predicated region
  $region46: #{_lambda_.12} parent=0 // pred_check
    _
  $region47: #{_lambda_.12} parent=0 // pred_check_branch
    %1577 = sbr.rel (0) target = $region49
  $region48: #{_lambda_.12} parent=0 // pred_region
    _
  $region49: #{_lambda_.12} parent=0 // pred_fallthru
    _

// kernel: _lambda_.21
$region0: #{_lambda_.21}
  #allocation0 [shape = 'u32[]', space=smem, size = 0x4, offset = 0x4, fixed_abs, tag = 'smem constant byte address 0x4 - core index']
  #allocation1 [shape = 'u32[144,128]{1,0:T(1,128)}', space=vmem, size = 0x12000, scoped, tag = 'internal scratch']
  %s0 = inlined_call_operand.vmem [shape: f32[16,32], index: 0, kind: input, shape index: {}]
  %s1 = inlined_call_operand.vmem [shape: f32[1,32], index: 1, kind: input, shape index: {}]
  %s2 = inlined_call_operand.vmem [shape: f32[1,32], index: 2, kind: input, shape index: {}]
  %s3 = inlined_call_operand.vmem [shape: bf16[32,64], index: 3, kind: input, shape index: {}]
  %s4 = inlined_call_operand.vmem [shape: f32[1,64], index: 4, kind: input, shape index: {}]
  %s5 = inlined_call_operand.hbm [shape: f32[16,64], index: 5, kind: output, shape index: {}]
  %s6 = sld [smem:[#allocation0]]
  $region30: #{_lambda_.21} parent=0
    _
  %s8 = ssub.s32 1, %s6
  %s9 = scalar_select 0, %s8, %s6
  $region1: #{_lambda_.21} parent=0
    #allocation2 [shape = 'u8[8192]{0}', space=vmem, size = 0x2000, scoped, tag = 'output window, operand 0, single buffered']
    #allocation3 [shape = 's32[1]{0}', space=sflag, size = 0x4, scoped, tag = 'scoped memory for _lambda_.21']
    %10 = vsyncpa [#allocation3], 0
    // Predicated region
    $region2: #{_lambda_.21} parent=1 // pred_check
      _
    $region3: #{_lambda_.21} parent=1 // pred_check_branch
      %12 = sbr.rel (0) target = $region5
    $region4: #{_lambda_.21} parent=1 // pred_region
      _
    $region5: #{_lambda_.21} parent=1 // pred_fallthru
      _
    // Predicated region
    $region6: #{_lambda_.21} parent=1 // pred_check
      _
    $region7: #{_lambda_.21} parent=1 // pred_check_branch
      %14 = sbr.rel (0) target = $region9
    $region8: #{_lambda_.21} parent=1 // pred_region
      _
    $region9: #{_lambda_.21} parent=1 // pred_fallthru
      _
    // Predicated region
    $region10: #{_lambda_.21} parent=1 // pred_check
      _
    $region11: #{_lambda_.21} parent=1 // pred_check_branch
      %16 = sbr.rel (0) target = $region13
    $region12: #{_lambda_.21} parent=1 // pred_region
      _
    $region13: #{_lambda_.21} parent=1 // pred_fallthru
      _
    // Predicated region
    $region14: #{_lambda_.21} parent=1 // pred_check
      _
    $region15: #{_lambda_.21} parent=1 // pred_check_branch
      %18 = sbr.rel (0) target = $region17
    $region16: #{_lambda_.21} parent=1 // pred_region
      _
    $region17: #{_lambda_.21} parent=1 // pred_fallthru
      _
    // Predicated region
    $region18: #{_lambda_.21} parent=1 // pred_check
      _
    $region19: #{_lambda_.21} parent=1 // pred_check_branch
      %20 = sbr.rel (0) target = $region21
    $region20: #{_lambda_.21} parent=1 // pred_region
      _
    $region21: #{_lambda_.21} parent=1 // pred_fallthru
      _
    %v22 = vld [vmem:[%s0] sm:$0xff]
    %v23 = vld [vmem:[%s0 + $0x8] sm:$0xff]
    %vm24 = vcmask 261120
    %v25 = vsel %vm24, %v22, 0.0
    %26 = vadd.xlane.f32.xlu0 %v25
    %v27 = vpop.xlane.xlu0 %26
    %v28 = vsel %vm24, %v23, 0.0
    %29 = vadd.xlane.f32.xlu0 %v28
    %v30 = vpop.xlane.xlu0 %29
    %v31 = vrcp.pop 32.0
    %v32 = vmul.f32 %v27, %v31
    %v33 = vmul.f32 %v30, %v31
    %v34 = vsub.f32 %v22, %v32
    %v35 = vsub.f32 %v23, %v33
    %v36 = vmul.f32 %v34, %v34
    %v37 = vmul.f32 %v35, %v35
    %v38 = vsel %vm24, %v36, 0.0
    %39 = vadd.xlane.f32.xlu0 %v38
    %v40 = vpop.xlane.xlu0 %39
    %v41 = vsel %vm24, %v37, 0.0
    %42 = vadd.xlane.f32.xlu0 %v41
    %v43 = vpop.xlane.xlu0 %42
    %v44 = vmul.f32 %v40, %v31
    %v45 = vmul.f32 %v43, %v31
    %v46 = vadd.f32 %v44, 1e-05
    %v47 = vadd.f32 %v45, 1e-05
    %v48 = vrsqrt.pop %v46
    %v49 = vrsqrt.pop %v47
    %v50 = vmul.f32 %v34, %v48
    %v51 = vmul.f32 %v35, %v49
    %v52 = vld [vmem:[%s1] sm:$0x1]
    %v54 = vlaneseq
    %v55 = vshrl.u32 %v54, 7
    %v56 = vsub.s32 0, %v55
    %v57 = vrot.slane %v52, %v56
    %v59 = vmul.f32 %v50, %v57
    %v60 = vmul.f32 %v51, %v57
    %v61 = vld [vmem:[%s2] sm:$0x1]
    %v63 = vlaneseq
    %v64 = vshrl.u32 %v63, 7
    %v65 = vsub.s32 0, %v64
    %v66 = vrot.slane %v61, %v65
    %v68 = vadd.f32 %v59, %v66
    %v69 = vadd.f32 %v60, %v66
    %v70 = vpack.c.bf16 %v69, %v68
    %v71 = vld [vmem:[%s3] sm:$0xf]
    %v72 = vld [vmem:[%s3 + $0x4] sm:$0xf]
    %v73 = vld [vmem:[%s3 + $0x8] sm:$0xf]
    %v74 = vld [vmem:[%s3 + $0xc] sm:$0xf]
    %v75 = vld [vmem:[%s4] sm:$0x1]
    %v77 = vlaneseq
    %v78 = vshrl.u32 %v77, 7
    %v79 = vsub.s32 0, %v78
    %v80 = vrot.slane %v75, %v79
    %v86 = vunpack.c.l.b16 %v71
    %v87 = vunpack.c.l.b16 %v72
    %v88 = vunpack.c.l.b16 %v73
    %v89 = vunpack.c.l.b16 %v74
    %v90 = vpack.c.b16 %v87, %v86
    %v91 = vpack.c.b16 %v89, %v88
    %v95 = vsel %vm24, %v70, 0
    %97 = vmatprep.subr.bf16.mxu0 0
    %98 = vmatpush1.bf16.msra.mxu0 0
    %99 = vmatprep.subr.bf16.mxu0 0
    %100 = vmatpush1.bf16.msra.mxu0 0
    %101 = vmatprep.subr.bf16.mxu0 0
    %102 = vmatpush1.bf16.msra.mxu0 0
    %103 = vmatprep.subr.bf16.mxu0 0
    %104 = vmatpush1.bf16.msra.mxu0 0
    %105 = vmatprep.subr.bf16.mxu0 0
    %106 = vmatpush1.bf16.msra.mxu0 0
    %107 = vmatprep.subr.bf16.mxu0 0
    %108 = vmatpush1.bf16.msra.mxu0 0
    %109 = vmatprep.subr.bf16.mxu0 0
    %110 = vmatpush1.bf16.msra.mxu0 %v91
    %111 = vmatprep.subr.bf16.mxu0 0
    %112 = vmatpush1.bf16.msra.mxu0 %v90
    %113 = vmatprep.subr.bf16.mxu0 0
    %114 = vmatpush2.bf16.msra.mxu0 0
    %115 = vmatprep.subr.bf16.mxu0 0
    %116 = vmatpush2.bf16.msra.mxu0 0
    %117 = vmatprep.subr.bf16.mxu0 0
    %118 = vmatpush2.bf16.msra.mxu0 0
    %119 = vmatprep.subr.bf16.mxu0 0
    %120 = vmatpush2.bf16.msra.mxu0 0
    %121 = vmatprep.subr.bf16.mxu0 0
    %122 = vmatpush2.bf16.msra.mxu0 0
    %123 = vmatprep.subr.bf16.mxu0 0
    %124 = vmatpush2.bf16.msra.mxu0 0
    %125 = vmatprep.subr.bf16.mxu0 0
    %126 = vmatpush2.bf16.msra.mxu0 0
    %127 = vmatprep.subr.bf16.mxu0 0
    %128 = vmatpush2.bf16.msra.mxu0 0
    %129 = vmatprep.mubr.bf16.mxu0 0
    %130 = vmatmul.mubr.bf16.gmra.mxu0 %v95
    %v131 = vpop.f32.mrf.mxu0
    %v132 = vadd.f32 %v80, %v131
    %v133 = vpop.f32.mrf.mxu0
    %v134 = vpop.f32.mrf.mxu0
    %v135 = vadd.f32 %v80, %v134
    %v136 = vpop.f32.mrf.mxu0
    %137 = vdwg.mxu0
    %vm138 = vcmask 523264
    %139 = vst.msk [vmem:[#allocation2] sm:$0xff] %vm138, %v132
    %140 = vst.msk [vmem:[#allocation2 + $0x8] sm:$0xff] %vm138, %v135
    // Predicated region
    $region22: #{_lambda_.21} parent=1 // pred_check
      _
    $region23: #{_lambda_.21} parent=1 // pred_check_branch
      %142 = sbr.rel (0) target = $region25
    $region24: #{_lambda_.21} parent=1 // pred_region
      %s144 = ssub.s32 256, 256
      %145 = vsyncadd [#allocation3], %s144
      %s146 = sshll.u32 [#allocation2], 4
      %s147 = int_to_ptr.vmem [resolvable:$true] %s146
      %152 = dma.vmem_to_hbm [thread:$0]  %s147, 256, %s5, [#allocation3], 128, 128, 8
    $region25: #{_lambda_.21} parent=1 // pred_fallthru
      _
    // Predicated region
    $region26: #{_lambda_.21} parent=1 // pred_check
      _
    $region27: #{_lambda_.21} parent=1 // pred_check_branch
      %154 = sbr.rel (0) target = $region29
    $region28: #{_lambda_.21} parent=1 // pred_region
      %155 = dma.done [#allocation3], 256
    $region29: #{_lambda_.21} parent=1 // pred_fallthru
      _
    %156 = vsyncpa [#allocation3], 1

</llo_original>
